<compile_context>
chip_gen: v6e
topology: v6e:2x2x1
jax: 0.10.0
libtpu: 0.0.40
codegen_flags: <defaults>
</compile_context>

<pallas_src>
import math

import jax
import jax.numpy as jnp
from jax.experimental import pallas as pl
from jax.experimental.pallas import tpu as pltpu

K = 64                 # max_num_neighbors from the module
TM_PREFERRED = 128     # center rows per grid step (sweep 128-512 with vmem limit)
NEG = -1e30            # only used by the pure-JAX reference


def _round_up(v, m):
    return ((v + m - 1) // m) * m


def _choose_tm(m, preferred=TM_PREFERRED):
    # Keep the grid length >= 2 whenever possible (megacore sharding on v7x)
    # and round the tile to the 8-sublane granule.
    return max(8, min(preferred, _round_up(max(1, (m + 1) // 2), 8)))


# ----------------------------- Pallas kernel -------------------------------
def _sa_conv_kernel(feat_ref, mask_ref, w1_ref, b1_ref, w2_ref, b2_ref, out_ref):
    # feat_ref: (TM*K, D_pad) bf16   mask_ref: (TM, K) f32
    # w1: (D_pad, H) bf16  b1: (1, H) f32  w2: (H, C_pad) bf16  b2: (1, C_pad) f32
    f = feat_ref[...]
    # layer 1: MXU matmul (bf16 in, f32 accumulate) + bias + ReLU in f32
    h = jnp.dot(f, w1_ref[...], preferred_element_type=jnp.float32) + b1_ref[...]
    h = jnp.maximum(h, 0.0).astype(jnp.bfloat16)
    # layer 2: MXU matmul; C_pad is lane-dense (multiple of 128) -> dense store
    y = jnp.dot(h, w2_ref[...], preferred_element_type=jnp.float32) + b2_ref[...]
    y = jnp.maximum(y, 0.0)                                # (TM*K, C_pad), >= 0
    tm, k = mask_ref.shape
    y = y.reshape(tm, k, y.shape[-1])                      # major-dim split: free view
    # Multiplicative masking: y >= 0 and every center row has >= 1 valid
    # neighbor (the center itself is always in-radius), so
    # max(y * m) == max(where(m, y, -inf)).
    y = y * mask_ref[...][:, :, None]
    out_ref[...] = jnp.max(y, axis=1).astype(out_ref.dtype)


def pointnet_conv_pallas(edge_feat, edge_mask, w1, b1, w2, b2):
    """edge_feat: (M, K, D) f32, edge_mask: (M, K) f32 -> (M, C_out) f32."""
    M, Kn, D = edge_feat.shape
    H = w1.shape[1]
    C_out = w2.shape[1]

    D_pad = _round_up(D, 8)        # sublane-granule contraction dim (7 -> 8)
    C_pad = _round_up(C_out, 128)  # lane-dense output store
    tm = _choose_tm(M)
    M_pad = _round_up(M, tm)

    # Pad + flatten + cast in the wrapper (fuses into the XLA producers); the
    # kernel then streams a dense bf16 (M_pad*K, D_pad) slab with no in-kernel
    # relayout.
    feat = jnp.pad(edge_feat, ((0, M_pad - M), (0, 0), (0, D_pad - D)))
    feat = feat.reshape(M_pad * Kn, D_pad).astype(jnp.bfloat16)
    mask = jnp.pad(edge_mask, ((0, M_pad - M), (0, 0))).astype(jnp.float32)

    w1p = jnp.pad(w1, ((0, D_pad - D), (0, 0))).astype(jnp.bfloat16)
    b1p = b1.reshape(1, H).astype(jnp.float32)
    w2p = jnp.pad(w2, ((0, 0), (0, C_pad - C_out))).astype(jnp.bfloat16)
    b2p = jnp.pad(b2.reshape(1, C_out), ((0, 0), (0, C_pad - C_out))).astype(jnp.float32)

    grid = (M_pad // tm,)
    flops = 2 * M_pad * Kn * (D_pad * H + H * C_pad)
    bytes_accessed = (M_pad * Kn * D_pad * 2            # bf16 edge features
                      + M_pad * Kn * 4                  # f32 mask
                      + M_pad * C_pad * 4               # f32 output
                      + (D_pad * H + H * C_pad) * 2     # bf16 weights
                      + (H + C_pad) * 4)                # f32 biases

    out = pl.pallas_call(
        _sa_conv_kernel,
        out_shape=jax.ShapeDtypeStruct((M_pad, C_pad), jnp.float32),
        grid_spec=pltpu.PrefetchScalarGridSpec(
            num_scalar_prefetch=0,
            grid=grid,
            in_specs=[
                pl.BlockSpec((tm * Kn, D_pad), lambda i: (i, 0)),
                pl.BlockSpec((tm, Kn), lambda i: (i, 0)),
                pl.BlockSpec((D_pad, H), lambda i: (0, 0)),
                pl.BlockSpec((1, H), lambda i: (0, 0)),
                pl.BlockSpec((H, C_pad), lambda i: (0, 0)),
                pl.BlockSpec((1, C_pad), lambda i: (0, 0)),
            ],
            out_specs=pl.BlockSpec((tm, C_pad), lambda i: (i, 0)),
        ),
        compiler_params=pltpu.CompilerParams(
            dimension_semantics=("parallel",),
            vmem_limit_bytes=48 * 1024 * 1024,
        ),
        cost_estimate=pl.CostEstimate(
            flops=int(flops), transcendentals=0, bytes_accessed=int(bytes_accessed)),
    )(feat, mask, w1p, b1p, w2p, b2p)
    return out[:M, :C_out]


# ------------------------------- JAX glue -----------------------------------
def _fps_one_batch(pos_b, m):
    """Deterministic farthest-point sampling within one batch (start at idx 0)."""
    # TODO(synk): PyG's fps uses a random start point by default; this starts at 0.
    n = pos_b.shape[0]

    def body(i, state):
        sel, dmin = state
        last_pt = pos_b[sel[i - 1]]
        d = jnp.sum((pos_b - last_pt) ** 2, axis=-1)
        dmin = jnp.minimum(dmin, d)
        sel = sel.at[i].set(jnp.argmax(dmin).astype(jnp.int32))
        return sel, dmin

    sel0 = jnp.zeros((m,), jnp.int32)
    dmin0 = jnp.full((n,), jnp.inf, jnp.float32)
    sel, _ = jax.lax.fori_loop(1, m, body, (sel0, dmin0))
    return sel


def _build_edges(x, pos, batch, *, ratio, r, points_per_batch):
    """FPS + radius neighbor search + edge-feature gather (plain JAX glue)."""
    n = pos.shape[0]
    b = n // points_per_batch
    m_per = math.ceil(points_per_batch * ratio)

    # idx = fps(pos, batch, ratio)
    pos_g = pos.reshape(b, points_per_batch, 3)
    local = jax.vmap(lambda p: _fps_one_batch(p, m_per))(pos_g)        # (B, m_per)
    idx = (local + jnp.arange(b, dtype=jnp.int32)[:, None] * points_per_batch).reshape(-1)

    # row, col = radius(pos, pos[idx], r, batch, batch[idx], max_num_neighbors=64)
    cp = pos[idx]                                                      # (M, 3)
    cb = batch[idx]                                                    # (M,)
    d2 = jnp.sum((cp[:, None, :] - pos[None, :, :]) ** 2, axis=-1)     # (M, N)
    within = (d2 <= r * r) & (cb[:, None] == batch[None, :])
    ar = jnp.arange(n)[None, :]
    key = jnp.where(within, ar, ar + n)
    order = jnp.argsort(key, axis=1)[:, :K].astype(jnp.int32)          # (M, K)
    nbr_mask = jnp.take_along_axis(within, order, axis=1).astype(jnp.float32)
    # TODO(synk): torch_cluster.radius keeps the *first* <=64 neighbors found;
    # this keeps the 64 lowest-index in-radius points (identical when <=64 exist).

    # PointNetConv message input: concat([x_j, pos_j - pos_i])
    x_j = x[order]                                                     # (M, K, C_in)
    rel = pos[order] - cp[:, None, :]                                  # (M, K, 3)
    edge_feat = jnp.concatenate([x_j, rel], axis=-1).astype(jnp.float32)
    # TODO(synk): for large point clouds, fuse this gather into the kernel
    # (scalar-prefetch `order`, keep x/pos resident in VMEM) to avoid writing
    # and re-reading the (M, K, D) edge tensor through HBM.
    return edge_feat, nbr_mask, cp, cb


def sa_module_forward(x, pos, batch, *, ratio, r, params, points_per_batch):
    """Equivalent of SAModule.forward(x, pos, batch) -> (x_out, pos_out, batch_out)."""
    edge_feat, nbr_mask, cp, cb = _build_edges(
        x, pos, batch, ratio=ratio, r=r, points_per_batch=points_per_batch)
    w1, b1, w2, b2 = params
    x_out = pointnet_conv_pallas(edge_feat, nbr_mask, w1, b1, w2, b2)
    return x_out, cp, cb


def _conv_reference(edge_feat, edge_mask, params):
    """Pure-JAX f32 reference of the PointNetConv message/aggregation."""
    w1, b1, w2, b2 = params
    h = jnp.maximum(edge_feat @ w1 + b1, 0.0)
    y = jnp.maximum(h @ w2 + b2, 0.0)
    y = jnp.where(edge_mask[:, :, None] > 0.5, y, NEG)
    return jnp.max(y, axis=1)


# --------------------------------- main --------------------------------------
if __name__ == "__main__":
    key = jax.random.PRNGKey(0)
    k_x, k_pos, k_w1, k_b1, k_w2, k_b2 = jax.random.split(key, 6)

    B = 2                       # batches
    NPB = 64                    # points per batch
    C_IN = 4                    # input feature channels
    HID = 32                    # hidden width of the MLP (the `nn` arg)
    C_OUT = 32                  # output channels
    RATIO = 0.5
    R = 0.4

    N = B * NPB
    x = jax.random.normal(k_x, (N, C_IN), jnp.float32)
    pos = jax.random.uniform(k_pos, (N, 3), jnp.float32)
    batch = jnp.repeat(jnp.arange(B, dtype=jnp.int32), NPB)

    D_IN = C_IN + 3
    # deterministic synthetic params for nn = MLP([C_IN+3, HID, C_OUT]) (Linear+ReLU x2)
    w1 = 0.1 * jax.random.normal(k_w1, (D_IN, HID), jnp.float32)
    b1 = 0.1 * jax.random.normal(k_b1, (1, HID), jnp.float32)
    w2 = 0.1 * jax.random.normal(k_w2, (HID, C_OUT), jnp.float32)
    b2 = 0.1 * jax.random.normal(k_b2, (1, C_OUT), jnp.float32)
    params = (w1, b1, w2, b2)

    x_out, pos_out, batch_out = sa_module_forward(
        x, pos, batch, ratio=RATIO, r=R, params=params, points_per_batch=NPB)
    jax.block_until_ready((x_out, pos_out, batch_out))

    M = B * math.ceil(NPB * RATIO)
    assert x_out.shape == (M, C_OUT)
    assert pos_out.shape == (M, 3)
    assert batch_out.shape == (M,)

    # f32 reference for the kernel math (bf16 MXU inputs -> loose tolerance)
    edge_feat, nbr_mask, _, _ = _build_edges(
        x, pos, batch, ratio=RATIO, r=R, points_per_batch=NPB)
    ref = _conv_reference(edge_feat, nbr_mask, params)
    err = float(jnp.max(jnp.abs(x_out - ref)))
    assert err < 5e-2, f"kernel/reference mismatch: max abs err {err}"

    print("KERNEL_OK")
</pallas_src>

<mosaic_0001>
module attributes {stable_mosaic.version = 11 : i64} {
  func.func @_sa_conv_kernel(%arg0: i32, %arg1: memref<2048x8xbf16, #tpu.memory_space<vmem>>, %arg2: memref<32x64xf32, #tpu.memory_space<vmem>>, %arg3: memref<8x32xbf16, #tpu.memory_space<vmem>>, %arg4: memref<1x32xf32, #tpu.memory_space<vmem>>, %arg5: memref<32x128xbf16, #tpu.memory_space<vmem>>, %arg6: memref<1x128xf32, #tpu.memory_space<vmem>>, %arg7: memref<32x128xf32, #tpu.memory_space<vmem>>) attributes {dimension_semantics = [#tpu.dimension_semantics<parallel>], iteration_bounds = array<i64: 2>, scalar_prefetch = 0 : i64, scratch_operands = 0 : i64, tpu.core_type = #tpu.core_type<tc>, window_params = [{transform_indices = @transform_0, window_bounds = array<i64: 2048, 8>}, {transform_indices = @transform_1, window_bounds = array<i64: 32, 64>}, {pipeline_mode = #tpu.pipeline_mode<synchronous>, transform_indices = @transform_2, window_bounds = array<i64: 8, 32>}, {pipeline_mode = #tpu.pipeline_mode<synchronous>, transform_indices = @transform_3, window_bounds = array<i64: 1, 32>}, {pipeline_mode = #tpu.pipeline_mode<synchronous>, transform_indices = @transform_4, window_bounds = array<i64: 32, 128>}, {pipeline_mode = #tpu.pipeline_mode<synchronous>, transform_indices = @transform_5, window_bounds = array<i64: 1, 128>}, {transform_indices = @transform_6, window_bounds = array<i64: 32, 128>}]} {
    %c0 = arith.constant 0 : index
    %c0_0 = arith.constant 0 : index
    %0 = vector.load %arg1[%c0, %c0_0] : memref<2048x8xbf16, #tpu.memory_space<vmem>>, vector<2048x8xbf16>
    %c0_1 = arith.constant 0 : index
    %c0_2 = arith.constant 0 : index
    %1 = vector.load %arg3[%c0_1, %c0_2] : memref<8x32xbf16, #tpu.memory_space<vmem>>, vector<8x32xbf16>
    %cst = arith.constant dense<0.000000e+00> : vector<2048x32xf32>
    %2 = tpu.matmul %0, %1, %cst {dimension_numbers = #tpu.dot_dimension_numbers<[1], [0], [0], [1], [0, 0, 1, 1], [], []>} : vector<2048x8xbf16>, vector<8x32xbf16>, vector<2048x32xf32> -> vector<2048x32xf32>
    %c0_3 = arith.constant 0 : index
    %c0_4 = arith.constant 0 : index
    %3 = vector.load %arg4[%c0_3, %c0_4] : memref<1x32xf32, #tpu.memory_space<vmem>>, vector<1x32xf32>
    %4 = vector.broadcast %3 : vector<1x32xf32> to vector<2048x32xf32>
    %5 = arith.addf %2, %4 : vector<2048x32xf32>
    %cst_5 = arith.constant 0.000000e+00 : f32
    %6 = vector.broadcast %cst_5 : f32 to vector<2048x32xf32>
    %7 = arith.maximumf %5, %6 : vector<2048x32xf32>
    %8 = arith.truncf %7 : vector<2048x32xf32> to vector<2048x32xbf16>
    %c0_6 = arith.constant 0 : index
    %c0_7 = arith.constant 0 : index
    %9 = vector.load %arg5[%c0_6, %c0_7] : memref<32x128xbf16, #tpu.memory_space<vmem>>, vector<32x128xbf16>
    %cst_8 = arith.constant dense<0.000000e+00> : vector<2048x128xf32>
    %10 = tpu.matmul %8, %9, %cst_8 {dimension_numbers = #tpu.dot_dimension_numbers<[1], [0], [0], [1], [0, 0, 1, 1], [], []>} : vector<2048x32xbf16>, vector<32x128xbf16>, vector<2048x128xf32> -> vector<2048x128xf32>
    %c0_9 = arith.constant 0 : index
    %c0_10 = arith.constant 0 : index
    %11 = vector.load %arg6[%c0_9, %c0_10] : memref<1x128xf32, #tpu.memory_space<vmem>>, vector<1x128xf32>
    %12 = vector.broadcast %11 : vector<1x128xf32> to vector<2048x128xf32>
    %13 = arith.addf %10, %12 : vector<2048x128xf32>
    %cst_11 = arith.constant 0.000000e+00 : f32
    %14 = vector.broadcast %cst_11 : f32 to vector<2048x128xf32>
    %15 = arith.maximumf %13, %14 : vector<2048x128xf32>
    %16 = vector.shape_cast %15 : vector<2048x128xf32> to vector<32x64x128xf32>
    %c0_12 = arith.constant 0 : index
    %c0_13 = arith.constant 0 : index
    %17 = vector.load %arg2[%c0_12, %c0_13] : memref<32x64xf32, #tpu.memory_space<vmem>>, vector<32x64xf32>
    %18 = vector.shape_cast %17 : vector<32x64xf32> to vector<32x64x1xf32>
    %19 = vector.broadcast %18 : vector<32x64x1xf32> to vector<32x64x128xf32>
    %20 = arith.mulf %16, %19 : vector<32x64x128xf32>
    %cst_14 = arith.constant dense<0xFF800000> : vector<32x128xf32>
    %21 = vector.multi_reduction <maximumf>, %20, %cst_14 [1] : vector<32x64x128xf32> to vector<32x128xf32>
    %c0_15 = arith.constant 0 : index
    %c0_16 = arith.constant 0 : index
    %22 = vector.load %arg7[%c0_15, %c0_16] : memref<32x128xf32, #tpu.memory_space<vmem>>, vector<32x128xf32>
    tpu.vector_store %arg7[%c0_15, %c0_16], %21 {strides = array<i32>} : memref<32x128xf32, #tpu.memory_space<vmem>>, vector<32x128xf32>,
    return
  }
  func.func @transform_0(%arg0: i32) -> (i32, i32) {
    %c0_i32 = arith.constant 0 : i32
    %c0_i32_0 = arith.constant 0 : i32
    return %arg0, %c0_i32 : i32, i32
  }
  func.func @transform_1(%arg0: i32) -> (i32, i32) {
    %c0_i32 = arith.constant 0 : i32
    %c0_i32_0 = arith.constant 0 : i32
    return %arg0, %c0_i32 : i32, i32
  }
  func.func @transform_2(%arg0: i32) -> (i32, i32) {
    %c0_i32 = arith.constant 0 : i32
    %c0_i32_0 = arith.constant 0 : i32
    %c0_i32_1 = arith.constant 0 : i32
    return %c0_i32, %c0_i32_0 : i32, i32
  }
  func.func @transform_3(%arg0: i32) -> (i32, i32) {
    %c0_i32 = arith.constant 0 : i32
    %c0_i32_0 = arith.constant 0 : i32
    %c0_i32_1 = arith.constant 0 : i32
    return %c0_i32, %c0_i32_0 : i32, i32
  }
  func.func @transform_4(%arg0: i32) -> (i32, i32) {
    %c0_i32 = arith.constant 0 : i32
    %c0_i32_0 = arith.constant 0 : i32
    %c0_i32_1 = arith.constant 0 : i32
    return %c0_i32, %c0_i32_0 : i32, i32
  }
  func.func @transform_5(%arg0: i32) -> (i32, i32) {
    %c0_i32 = arith.constant 0 : i32
    %c0_i32_0 = arith.constant 0 : i32
    %c0_i32_1 = arith.constant 0 : i32
    return %c0_i32, %c0_i32_0 : i32, i32
  }
  func.func @transform_6(%arg0: i32) -> (i32, i32) {
    %c0_i32 = arith.constant 0 : i32
    %c0_i32_0 = arith.constant 0 : i32
    return %arg0, %c0_i32 : i32, i32
  }
}

</mosaic_0001>

<llo_original>
// kernel: tpu_custom_call.1
$region0: #{tpu_custom_call.1}
  #allocation0 [shape = 'u32[]', space=smem, size = 0x4, offset = 0x4, fixed_abs, tag = 'smem constant byte address 0x4 - core index']
  #allocation1 [shape = 'u32[144,128]{1,0:T(1,128)}', space=vmem, size = 0x12000, scoped, tag = 'internal scratch']
  %s0 = inlined_call_operand.vmem [shape: bf16[4096,8], index: 0, kind: input, shape index: {}]
  %s1 = inlined_call_operand.vmem [shape: f32[64,64], index: 1, kind: input, shape index: {}]
  %s2 = inlined_call_operand.vmem [shape: bf16[8,32], index: 2, kind: input, shape index: {}]
  %s3 = inlined_call_operand.vmem [shape: f32[1,32], index: 3, kind: input, shape index: {}]
  %s4 = inlined_call_operand.vmem [shape: bf16[32,128], index: 4, kind: input, shape index: {}]
  %s5 = inlined_call_operand.vmem [shape: f32[1,128], index: 5, kind: input, shape index: {}]
  %s6 = inlined_call_operand.hbm [shape: f32[64,128], index: 6, kind: output, shape index: {}]
  %s7 = sld [smem:[#allocation0]]
  $region57: #{tpu_custom_call.1} parent=0
    _
  %s9 = ssub.s32 1, %s7
  %s10 = scalar_select 0, %s9, %s7
  $region1: #{tpu_custom_call.1} parent=0
    #allocation2 [shape = 'u8[32768]{0}', space=vmem, size = 0x8000, scoped, tag = 'output window, operand 0']
    #allocation3 [shape = 's32[2]{0}', space=sflag, size = 0x8, scoped, tag = 'scoped memory for tpu_custom_call.1']
    %11 = vsyncpa [#allocation3], 0
    %s12 = scalar_lea.sflag [#allocation3], 1
    %13 = vsyncpa %s12, 0
    loop: start=0, step=1, limit=4
    $region2: #{tpu_custom_call.1} parent=1 // loop_pre_header
      _
    $region3: #{tpu_custom_call.1} parent=1 // loop_header
      %s15 = sphi 0, %s19
      %p16 = scmp.ge.s32.totalorder %s15, 4
      %s25 = sphi 0, %s27
      %s28 = sphi 0, %s25
      %s29 = sphi 0, %s28
      %s45 = sphi 0, %s29
      %s51 = sphi 0, %s53
      %s54 = sphi 0, %s51
      %s55 = sphi 0, %s54
      %s71 = sphi 0, %s55
      %s75 = sphi 0, %s75
      %s77 = sphi 0, %s75
      %s78 = sphi 0, %s77
      %s92 = sphi 0, %s78
      %s96 = sphi 0, %s96
      %s98 = sphi 0, %s96
      %s99 = sphi 0, %s98
      %s113 = sphi 0, %s99
      %s117 = sphi 0, %s117
      %s119 = sphi 0, %s117
      %s120 = sphi 0, %s119
      %s134 = sphi 0, %s120
      %s138 = sphi 0, %s138
      %s140 = sphi 0, %s138
      %s141 = sphi 0, %s140
      %s155 = sphi 0, %s141
      %s161 = sphi 0, %s163
      %s164 = sphi 0, %s161
      %s165 = sphi 0, %s164
      %s181 = sphi 0, %s165
    $region4: #{tpu_custom_call.1} parent=1 // loop_header_branch
      %18 = sbr.rel (%p16) target = $region8
    $region5: #{tpu_custom_call.1} parent=1 // loop_body
      %s20 = ssub.s32 %s15, 1
      %s21 = ssub.s32 %s15, 2
      %s22 = sadd.s32 %s15, 1
      %s23 = ssub.s32 %s15, %s22
      %p24 = scmp.eq.s32.totalorder %s23, 0
      %s26 = sadd.s32 %s25, 1
      %s27 = scalar_select %p24, %s25, %s26
      %p30 = pneg %p24
      %p31 = scmp.eq.s32.totalorder %s15, 1
      %p32 = por %p30, %p31
      %p33 = scmp.ne.s32.totalorder %s25, %s28
      %p34 = scmp.eq.s32.totalorder %s15, 0
      %p35 = por %p33, %p34
      %p36 = scmp.ne.s32.totalorder %s25, %s28
      %p37 = scmp.eq.s32.totalorder %s20, 1
      %p38 = por %p36, %p37
      %p39 = scmp.ne.s32.totalorder %s28, %s29
      %p40 = scmp.eq.s32.totalorder %s20, 0
      %p41 = por %p39, %p40
      %p42 = scmp.ne.s32.totalorder %s28, %s29
      %p43 = scmp.eq.s32.totalorder %s21, 1
      %p44 = por %p42, %p43
      %p46 = scmp.ne.s32.totalorder %s29, %s45
      %p47 = scmp.eq.s32.totalorder %s21, 0
      %p48 = por %p46, %p47
      %s49 = ssub.s32 %s15, %s22
      %p50 = scmp.eq.s32.totalorder %s49, 0
      %s52 = sadd.s32 %s51, 1
      %s53 = scalar_select %p50, %s51, %s52
      %p56 = pneg %p50
      %p57 = scmp.eq.s32.totalorder %s15, 1
      %p58 = por %p56, %p57
      %p59 = scmp.ne.s32.totalorder %s51, %s54
      %p60 = scmp.eq.s32.totalorder %s15, 0
      %p61 = por %p59, %p60
      %p62 = scmp.ne.s32.totalorder %s51, %s54
      %p63 = scmp.eq.s32.totalorder %s20, 1
      %p64 = por %p62, %p63
      %p65 = scmp.ne.s32.totalorder %s54, %s55
      %p66 = scmp.eq.s32.totalorder %s20, 0
      %p67 = por %p65, %p66
      %p68 = scmp.ne.s32.totalorder %s54, %s55
      %p69 = scmp.eq.s32.totalorder %s21, 1
      %p70 = por %p68, %p69
      %p72 = scmp.ne.s32.totalorder %s55, %s71
      %p73 = scmp.eq.s32.totalorder %s21, 0
      %p74 = por %p72, %p73
      %s76 = sadd.s32 %s75, 1
      %p79 = scmp.eq.s32.totalorder %s15, 1
      %p80 = scmp.ne.s32.totalorder %s75, %s77
      %p81 = scmp.eq.s32.totalorder %s15, 0
      %p82 = por %p80, %p81
      %p83 = scmp.ne.s32.totalorder %s75, %s77
      %p84 = scmp.eq.s32.totalorder %s20, 1
      %p85 = por %p83, %p84
      %p86 = scmp.ne.s32.totalorder %s77, %s78
      %p87 = scmp.eq.s32.totalorder %s20, 0
      %p88 = por %p86, %p87
      %p89 = scmp.ne.s32.totalorder %s77, %s78
      %p90 = scmp.eq.s32.totalorder %s21, 1
      %p91 = por %p89, %p90
      %p93 = scmp.ne.s32.totalorder %s78, %s92
      %p94 = scmp.eq.s32.totalorder %s21, 0
      %p95 = por %p93, %p94
      %s97 = sadd.s32 %s96, 1
      %p100 = scmp.eq.s32.totalorder %s15, 1
      %p101 = scmp.ne.s32.totalorder %s96, %s98
      %p102 = scmp.eq.s32.totalorder %s15, 0
      %p103 = por %p101, %p102
      %p104 = scmp.ne.s32.totalorder %s96, %s98
      %p105 = scmp.eq.s32.totalorder %s20, 1
      %p106 = por %p104, %p105
      %p107 = scmp.ne.s32.totalorder %s98, %s99
      %p108 = scmp.eq.s32.totalorder %s20, 0
      %p109 = por %p107, %p108
      %p110 = scmp.ne.s32.totalorder %s98, %s99
      %p111 = scmp.eq.s32.totalorder %s21, 1
      %p112 = por %p110, %p111
      %p114 = scmp.ne.s32.totalorder %s99, %s113
      %p115 = scmp.eq.s32.totalorder %s21, 0
      %p116 = por %p114, %p115
      %s118 = sadd.s32 %s117, 1
      %p121 = scmp.eq.s32.totalorder %s15, 1
      %p122 = scmp.ne.s32.totalorder %s117, %s119
      %p123 = scmp.eq.s32.totalorder %s15, 0
      %p124 = por %p122, %p123
      %p125 = scmp.ne.s32.totalorder %s117, %s119
      %p126 = scmp.eq.s32.totalorder %s20, 1
      %p127 = por %p125, %p126
      %p128 = scmp.ne.s32.totalorder %s119, %s120
      %p129 = scmp.eq.s32.totalorder %s20, 0
      %p130 = por %p128, %p129
      %p131 = scmp.ne.s32.totalorder %s119, %s120
      %p132 = scmp.eq.s32.totalorder %s21, 1
      %p133 = por %p131, %p132
      %p135 = scmp.ne.s32.totalorder %s120, %s134
      %p136 = scmp.eq.s32.totalorder %s21, 0
      %p137 = por %p135, %p136
      %s139 = sadd.s32 %s138, 1
      %p142 = scmp.eq.s32.totalorder %s15, 1
      %p143 = scmp.ne.s32.totalorder %s138, %s140
      %p144 = scmp.eq.s32.totalorder %s15, 0
      %p145 = por %p143, %p144
      %p146 = scmp.ne.s32.totalorder %s138, %s140
      %p147 = scmp.eq.s32.totalorder %s20, 1
      %p148 = por %p146, %p147
      %p149 = scmp.ne.s32.totalorder %s140, %s141
      %p150 = scmp.eq.s32.totalorder %s20, 0
      %p151 = por %p149, %p150
      %p152 = scmp.ne.s32.totalorder %s140, %s141
      %p153 = scmp.eq.s32.totalorder %s21, 1
      %p154 = por %p152, %p153
      %p156 = scmp.ne.s32.totalorder %s141, %s155
      %p157 = scmp.eq.s32.totalorder %s21, 0
      %p158 = por %p156, %p157
      %s159 = ssub.s32 %s15, %s22
      %p160 = scmp.eq.s32.totalorder %s159, 0
      %s162 = sadd.s32 %s161, 1
      %s163 = scalar_select %p160, %s161, %s162
      %p166 = pneg %p160
      %p167 = scmp.eq.s32.totalorder %s15, 1
      %p168 = por %p166, %p167
      %p169 = scmp.ne.s32.totalorder %s161, %s164
      %p170 = scmp.eq.s32.totalorder %s15, 0
      %p171 = por %p169, %p170
      %p172 = scmp.ne.s32.totalorder %s161, %s164
      %p173 = scmp.eq.s32.totalorder %s20, 1
      %p174 = por %p172, %p173
      %p175 = scmp.ne.s32.totalorder %s164, %s165
      %p176 = scmp.eq.s32.totalorder %s20, 0
      %p177 = por %p175, %p176
      %p178 = scmp.ne.s32.totalorder %s164, %s165
      %p179 = scmp.eq.s32.totalorder %s21, 1
      %p180 = por %p178, %p179
      %p182 = scmp.ne.s32.totalorder %s165, %s181
      %p183 = scmp.eq.s32.totalorder %s21, 0
      %p184 = por %p182, %p183
      %p185 = scmp.le.s32.totalorder 1, %s15
      %p186 = scmp.lt.s32.totalorder %s15, 3
      %p187 = pnand %p185, %p186
      %p188 = pneg %p187
      // Predicated region
      $region9: #{tpu_custom_call.1} parent=5 // pred_check
        _
      $region10: #{tpu_custom_call.1} parent=5 // pred_check_branch
        %190 = sbr.rel (%p187) target = $region12
      $region11: #{tpu_custom_call.1} parent=5 // pred_region
        %s191 = ssub.s32 %s15, 1
        // Predicated region
        $region13: #{tpu_custom_call.1} parent=11 // pred_check
          %p192 = pneg %p88
        $region14: #{tpu_custom_call.1} parent=11 // pred_check_branch
          %194 = sbr.rel (%p192) target = $region16
        $region15: #{tpu_custom_call.1} parent=11 // pred_region
          _
        $region16: #{tpu_custom_call.1} parent=11 // pred_fallthru
          _
        // Predicated region
        $region17: #{tpu_custom_call.1} parent=11 // pred_check
          %p195 = pneg %p109
        $region18: #{tpu_custom_call.1} parent=11 // pred_check_branch
          %197 = sbr.rel (%p195) target = $region20
        $region19: #{tpu_custom_call.1} parent=11 // pred_region
          _
        $region20: #{tpu_custom_call.1} parent=11 // pred_fallthru
          _
        // Predicated region
        $region21: #{tpu_custom_call.1} parent=11 // pred_check
          %p198 = pneg %p130
        $region22: #{tpu_custom_call.1} parent=11 // pred_check_branch
          %200 = sbr.rel (%p198) target = $region24
        $region23: #{tpu_custom_call.1} parent=11 // pred_region
          _
        $region24: #{tpu_custom_call.1} parent=11 // pred_fallthru
          _
        // Predicated region
        $region25: #{tpu_custom_call.1} parent=11 // pred_check
          %p201 = pneg %p151
        $region26: #{tpu_custom_call.1} parent=11 // pred_check_branch
          %203 = sbr.rel (%p201) target = $region28
        $region27: #{tpu_custom_call.1} parent=11 // pred_region
          _
        $region28: #{tpu_custom_call.1} parent=11 // pred_fallthru
          _
      $region12: #{tpu_custom_call.1} parent=5 // pred_fallthru
        _
      %p204 = scmp.lt.s32.totalorder %s15, 2
      // Predicated region
      $region29: #{tpu_custom_call.1} parent=5 // pred_check
        %p205 = pneg %p204
      $region30: #{tpu_custom_call.1} parent=5 // pred_check_branch
        %207 = sbr.rel (%p205) target = $region32
      $region31: #{tpu_custom_call.1} parent=5 // pred_region
        // Predicated region
        $region33: #{tpu_custom_call.1} parent=31 // pred_check
          %p208 = pneg %p35
        $region34: #{tpu_custom_call.1} parent=31 // pred_check_branch
          %210 = sbr.rel (%p208) target = $region36
        $region35: #{tpu_custom_call.1} parent=31 // pred_region
          %s211 = smul.u32 256, %s15
          %p212 = scmp.lt.s32.totalorder %s211, 511
          %s213 = scalar_select %p212, %s211, 511
          %s214 = smul.addr %s213, 4
          %s215 = scalar_lea.vmem %s0, %s214
          %s216 = smul.u32 256, %s15
        $region36: #{tpu_custom_call.1} parent=31 // pred_fallthru
          _
        // Predicated region
        $region37: #{tpu_custom_call.1} parent=31 // pred_check
          %p217 = pneg %p61
        $region38: #{tpu_custom_call.1} parent=31 // pred_check_branch
          %219 = sbr.rel (%p217) target = $region40
        $region39: #{tpu_custom_call.1} parent=31 // pred_region
          %s220 = smul.u32 4, %s15
          %p221 = scmp.lt.s32.totalorder %s220, 7
          %s222 = scalar_select %p221, %s220, 7
          %s223 = smul.addr %s222, 8
          %s224 = scalar_lea.vmem %s1, %s223
          %s225 = smul.u32 4, %s15
        $region40: #{tpu_custom_call.1} parent=31 // pred_fallthru
          _
      $region32: #{tpu_custom_call.1} parent=5 // pred_fallthru
        _
      %p226 = scmp.le.s32.totalorder 1, %s15
      %p227 = scmp.lt.s32.totalorder %s15, 3
      %p228 = pnand %p226, %p227
      %p229 = pneg %p228
      // Predicated region
      $region41: #{tpu_custom_call.1} parent=5 // pred_check
        _
      $region42: #{tpu_custom_call.1} parent=5 // pred_check_branch
        %231 = sbr.rel (%p228) target = $region44
      $region43: #{tpu_custom_call.1} parent=5 // pred_region
        %s232 = ssub.s32 %s15, 1
        %s233 = smul.u32 256, %s20
        %p234 = scmp.lt.s32.totalorder %s233, 511
        %s235 = scalar_select %p234, %s233, 511
        %s236 = smul.addr %s235, 4
        %s237 = scalar_lea.vmem %s0, %s236
        %p238 = pneg %p41
        %p239 = pneg %p38
        %s240 = smul.u32 4, %s20
        %p241 = scmp.lt.s32.totalorder %s240, 7
        %s242 = scalar_select %p241, %s240, 7
        %s243 = smul.addr %s242, 8
        %s244 = scalar_lea.vmem %s1, %s243
        %p245 = pneg %p67
        %p246 = pneg %p64
        %p247 = pneg %p88
        %p248 = pneg %p85
        %p249 = pneg %p109
        %p250 = pneg %p106
        %p251 = pneg %p130
        %p252 = pneg %p127
        %p253 = pneg %p151
        %p254 = pneg %p148
        %p255 = pneg %p177
        %p256 = pneg %p174
        %s257 = sand.u32 %s164, 1
        %s258 = scalar_lea.sflag [#allocation3], %s257
        %s259 = sand.u32 %s164, 1
        %s260 = smul.addr %s259, 32
        %s261 = scalar_lea.vmem [#allocation2], %s260
        %s262 = smul.u32 256, %s20
        %p263 = scmp.lt.s32.totalorder %s262, 511
        %s264 = scalar_select %p263, %s262, 511
        %s265 = smul.addr %s264, 4
        %s266 = scalar_lea.vmem %s0, %s265
        %s267 = smul.u32 256, %s20
        %s268 = smul.u32 4, %s20
        %p269 = scmp.lt.s32.totalorder %s268, 7
        %s270 = scalar_select %p269, %s268, 7
        %s271 = smul.addr %s270, 8
        %s272 = scalar_lea.vmem %s1, %s271
        %s273 = smul.u32 4, %s20
        %s274 = smul.u32 4, %s20
        %v276 = vld [vmem:[%s266] sm:$0xf]
        %v277 = vld [vmem:[%s266 + $0x4] sm:$0xf]
        %v278 = vld [vmem:[%s266 + $0x8] sm:$0xf]
        %v279 = vld [vmem:[%s266 + $0xc] sm:$0xf]
        %v280 = vld [vmem:[%s266 + $0x10] sm:$0xf]
        %v281 = vld [vmem:[%s266 + $0x14] sm:$0xf]
        %v282 = vld [vmem:[%s266 + $0x18] sm:$0xf]
        %v283 = vld [vmem:[%s266 + $0x1c] sm:$0xf]
        %v284 = vld [vmem:[%s266 + $0x20] sm:$0xf]
        %v285 = vld [vmem:[%s266 + $0x24] sm:$0xf]
        %v286 = vld [vmem:[%s266 + $0x28] sm:$0xf]
        %v287 = vld [vmem:[%s266 + $0x2c] sm:$0xf]
        %v288 = vld [vmem:[%s266 + $0x30] sm:$0xf]
        %v289 = vld [vmem:[%s266 + $0x34] sm:$0xf]
        %v290 = vld [vmem:[%s266 + $0x38] sm:$0xf]
        %v291 = vld [vmem:[%s266 + $0x3c] sm:$0xf]
        %v292 = vld [vmem:[%s266 + $0x40] sm:$0xf]
        %v293 = vld [vmem:[%s266 + $0x44] sm:$0xf]
        %v294 = vld [vmem:[%s266 + $0x48] sm:$0xf]
        %v295 = vld [vmem:[%s266 + $0x4c] sm:$0xf]
        %v296 = vld [vmem:[%s266 + $0x50] sm:$0xf]
        %v297 = vld [vmem:[%s266 + $0x54] sm:$0xf]
        %v298 = vld [vmem:[%s266 + $0x58] sm:$0xf]
        %v299 = vld [vmem:[%s266 + $0x5c] sm:$0xf]
        %v300 = vld [vmem:[%s266 + $0x60] sm:$0xf]
        %v301 = vld [vmem:[%s266 + $0x64] sm:$0xf]
        %v302 = vld [vmem:[%s266 + $0x68] sm:$0xf]
        %v303 = vld [vmem:[%s266 + $0x6c] sm:$0xf]
        %v304 = vld [vmem:[%s266 + $0x70] sm:$0xf]
        %v305 = vld [vmem:[%s266 + $0x74] sm:$0xf]
        %v306 = vld [vmem:[%s266 + $0x78] sm:$0xf]
        %v307 = vld [vmem:[%s266 + $0x7c] sm:$0xf]
        %v308 = vld [vmem:[%s266 + $0x80] sm:$0xf]
        %v309 = vld [vmem:[%s266 + $0x84] sm:$0xf]
        %v310 = vld [vmem:[%s266 + $0x88] sm:$0xf]
        %v311 = vld [vmem:[%s266 + $0x8c] sm:$0xf]
        %v312 = vld [vmem:[%s266 + $0x90] sm:$0xf]
        %v313 = vld [vmem:[%s266 + $0x94] sm:$0xf]
        %v314 = vld [vmem:[%s266 + $0x98] sm:$0xf]
        %v315 = vld [vmem:[%s266 + $0x9c] sm:$0xf]
        %v316 = vld [vmem:[%s266 + $0xa0] sm:$0xf]
        %v317 = vld [vmem:[%s266 + $0xa4] sm:$0xf]
        %v318 = vld [vmem:[%s266 + $0xa8] sm:$0xf]
        %v319 = vld [vmem:[%s266 + $0xac] sm:$0xf]
        %v320 = vld [vmem:[%s266 + $0xb0] sm:$0xf]
        %v321 = vld [vmem:[%s266 + $0xb4] sm:$0xf]
        %v322 = vld [vmem:[%s266 + $0xb8] sm:$0xf]
        %v323 = vld [vmem:[%s266 + $0xbc] sm:$0xf]
        %v324 = vld [vmem:[%s266 + $0xc0] sm:$0xf]
        %v325 = vld [vmem:[%s266 + $0xc4] sm:$0xf]
        %v326 = vld [vmem:[%s266 + $0xc8] sm:$0xf]
        %v327 = vld [vmem:[%s266 + $0xcc] sm:$0xf]
        %v328 = vld [vmem:[%s266 + $0xd0] sm:$0xf]
        %v329 = vld [vmem:[%s266 + $0xd4] sm:$0xf]
        %v330 = vld [vmem:[%s266 + $0xd8] sm:$0xf]
        %v331 = vld [vmem:[%s266 + $0xdc] sm:$0xf]
        %v332 = vld [vmem:[%s266 + $0xe0] sm:$0xf]
        %v333 = vld [vmem:[%s266 + $0xe4] sm:$0xf]
        %v334 = vld [vmem:[%s266 + $0xe8] sm:$0xf]
        %v335 = vld [vmem:[%s266 + $0xec] sm:$0xf]
        %v336 = vld [vmem:[%s266 + $0xf0] sm:$0xf]
        %v337 = vld [vmem:[%s266 + $0xf4] sm:$0xf]
        %v338 = vld [vmem:[%s266 + $0xf8] sm:$0xf]
        %v339 = vld [vmem:[%s266 + $0xfc] sm:$0xf]
        %v340 = vld [vmem:[%s266 + $0x100] sm:$0xf]
        %v341 = vld [vmem:[%s266 + $0x104] sm:$0xf]
        %v342 = vld [vmem:[%s266 + $0x108] sm:$0xf]
        %v343 = vld [vmem:[%s266 + $0x10c] sm:$0xf]
        %v344 = vld [vmem:[%s266 + $0x110] sm:$0xf]
        %v345 = vld [vmem:[%s266 + $0x114] sm:$0xf]
        %v346 = vld [vmem:[%s266 + $0x118] sm:$0xf]
        %v347 = vld [vmem:[%s266 + $0x11c] sm:$0xf]
        %v348 = vld [vmem:[%s266 + $0x120] sm:$0xf]
        %v349 = vld [vmem:[%s266 + $0x124] sm:$0xf]
        %v350 = vld [vmem:[%s266 + $0x128] sm:$0xf]
        %v351 = vld [vmem:[%s266 + $0x12c] sm:$0xf]
        %v352 = vld [vmem:[%s266 + $0x130] sm:$0xf]
        %v353 = vld [vmem:[%s266 + $0x134] sm:$0xf]
        %v354 = vld [vmem:[%s266 + $0x138] sm:$0xf]
        %v355 = vld [vmem:[%s266 + $0x13c] sm:$0xf]
        %v356 = vld [vmem:[%s266 + $0x140] sm:$0xf]
        %v357 = vld [vmem:[%s266 + $0x144] sm:$0xf]
        %v358 = vld [vmem:[%s266 + $0x148] sm:$0xf]
        %v359 = vld [vmem:[%s266 + $0x14c] sm:$0xf]
        %v360 = vld [vmem:[%s266 + $0x150] sm:$0xf]
        %v361 = vld [vmem:[%s266 + $0x154] sm:$0xf]
        %v362 = vld [vmem:[%s266 + $0x158] sm:$0xf]
        %v363 = vld [vmem:[%s266 + $0x15c] sm:$0xf]
        %v364 = vld [vmem:[%s266 + $0x160] sm:$0xf]
        %v365 = vld [vmem:[%s266 + $0x164] sm:$0xf]
        %v366 = vld [vmem:[%s266 + $0x168] sm:$0xf]
        %v367 = vld [vmem:[%s266 + $0x16c] sm:$0xf]
        %v368 = vld [vmem:[%s266 + $0x170] sm:$0xf]
        %v369 = vld [vmem:[%s266 + $0x174] sm:$0xf]
        %v370 = vld [vmem:[%s266 + $0x178] sm:$0xf]
        %v371 = vld [vmem:[%s266 + $0x17c] sm:$0xf]
        %v372 = vld [vmem:[%s266 + $0x180] sm:$0xf]
        %v373 = vld [vmem:[%s266 + $0x184] sm:$0xf]
        %v374 = vld [vmem:[%s266 + $0x188] sm:$0xf]
        %v375 = vld [vmem:[%s266 + $0x18c] sm:$0xf]
        %v376 = vld [vmem:[%s266 + $0x190] sm:$0xf]
        %v377 = vld [vmem:[%s266 + $0x194] sm:$0xf]
        %v378 = vld [vmem:[%s266 + $0x198] sm:$0xf]
        %v379 = vld [vmem:[%s266 + $0x19c] sm:$0xf]
        %v380 = vld [vmem:[%s266 + $0x1a0] sm:$0xf]
        %v381 = vld [vmem:[%s266 + $0x1a4] sm:$0xf]
        %v382 = vld [vmem:[%s266 + $0x1a8] sm:$0xf]
        %v383 = vld [vmem:[%s266 + $0x1ac] sm:$0xf]
        %v384 = vld [vmem:[%s266 + $0x1b0] sm:$0xf]
        %v385 = vld [vmem:[%s266 + $0x1b4] sm:$0xf]
        %v386 = vld [vmem:[%s266 + $0x1b8] sm:$0xf]
        %v387 = vld [vmem:[%s266 + $0x1bc] sm:$0xf]
        %v388 = vld [vmem:[%s266 + $0x1c0] sm:$0xf]
        %v389 = vld [vmem:[%s266 + $0x1c4] sm:$0xf]
        %v390 = vld [vmem:[%s266 + $0x1c8] sm:$0xf]
        %v391 = vld [vmem:[%s266 + $0x1cc] sm:$0xf]
        %v392 = vld [vmem:[%s266 + $0x1d0] sm:$0xf]
        %v393 = vld [vmem:[%s266 + $0x1d4] sm:$0xf]
        %v394 = vld [vmem:[%s266 + $0x1d8] sm:$0xf]
        %v395 = vld [vmem:[%s266 + $0x1dc] sm:$0xf]
        %v396 = vld [vmem:[%s266 + $0x1e0] sm:$0xf]
        %v397 = vld [vmem:[%s266 + $0x1e4] sm:$0xf]
        %v398 = vld [vmem:[%s266 + $0x1e8] sm:$0xf]
        %v399 = vld [vmem:[%s266 + $0x1ec] sm:$0xf]
        %v400 = vld [vmem:[%s266 + $0x1f0] sm:$0xf]
        %v401 = vld [vmem:[%s266 + $0x1f4] sm:$0xf]
        %v402 = vld [vmem:[%s266 + $0x1f8] sm:$0xf]
        %v403 = vld [vmem:[%s266 + $0x1fc] sm:$0xf]
        %v404 = vld [vmem:[%s266 + $0x200] sm:$0xf]
        %v405 = vld [vmem:[%s266 + $0x204] sm:$0xf]
        %v406 = vld [vmem:[%s266 + $0x208] sm:$0xf]
        %v407 = vld [vmem:[%s266 + $0x20c] sm:$0xf]
        %v408 = vld [vmem:[%s266 + $0x210] sm:$0xf]
        %v409 = vld [vmem:[%s266 + $0x214] sm:$0xf]
        %v410 = vld [vmem:[%s266 + $0x218] sm:$0xf]
        %v411 = vld [vmem:[%s266 + $0x21c] sm:$0xf]
        %v412 = vld [vmem:[%s266 + $0x220] sm:$0xf]
        %v413 = vld [vmem:[%s266 + $0x224] sm:$0xf]
        %v414 = vld [vmem:[%s266 + $0x228] sm:$0xf]
        %v415 = vld [vmem:[%s266 + $0x22c] sm:$0xf]
        %v416 = vld [vmem:[%s266 + $0x230] sm:$0xf]
        %v417 = vld [vmem:[%s266 + $0x234] sm:$0xf]
        %v418 = vld [vmem:[%s266 + $0x238] sm:$0xf]
        %v419 = vld [vmem:[%s266 + $0x23c] sm:$0xf]
        %v420 = vld [vmem:[%s266 + $0x240] sm:$0xf]
        %v421 = vld [vmem:[%s266 + $0x244] sm:$0xf]
        %v422 = vld [vmem:[%s266 + $0x248] sm:$0xf]
        %v423 = vld [vmem:[%s266 + $0x24c] sm:$0xf]
        %v424 = vld [vmem:[%s266 + $0x250] sm:$0xf]
        %v425 = vld [vmem:[%s266 + $0x254] sm:$0xf]
        %v426 = vld [vmem:[%s266 + $0x258] sm:$0xf]
        %v427 = vld [vmem:[%s266 + $0x25c] sm:$0xf]
        %v428 = vld [vmem:[%s266 + $0x260] sm:$0xf]
        %v429 = vld [vmem:[%s266 + $0x264] sm:$0xf]
        %v430 = vld [vmem:[%s266 + $0x268] sm:$0xf]
        %v431 = vld [vmem:[%s266 + $0x26c] sm:$0xf]
        %v432 = vld [vmem:[%s266 + $0x270] sm:$0xf]
        %v433 = vld [vmem:[%s266 + $0x274] sm:$0xf]
        %v434 = vld [vmem:[%s266 + $0x278] sm:$0xf]
        %v435 = vld [vmem:[%s266 + $0x27c] sm:$0xf]
        %v436 = vld [vmem:[%s266 + $0x280] sm:$0xf]
        %v437 = vld [vmem:[%s266 + $0x284] sm:$0xf]
        %v438 = vld [vmem:[%s266 + $0x288] sm:$0xf]
        %v439 = vld [vmem:[%s266 + $0x28c] sm:$0xf]
        %v440 = vld [vmem:[%s266 + $0x290] sm:$0xf]
        %v441 = vld [vmem:[%s266 + $0x294] sm:$0xf]
        %v442 = vld [vmem:[%s266 + $0x298] sm:$0xf]
        %v443 = vld [vmem:[%s266 + $0x29c] sm:$0xf]
        %v444 = vld [vmem:[%s266 + $0x2a0] sm:$0xf]
        %v445 = vld [vmem:[%s266 + $0x2a4] sm:$0xf]
        %v446 = vld [vmem:[%s266 + $0x2a8] sm:$0xf]
        %v447 = vld [vmem:[%s266 + $0x2ac] sm:$0xf]
        %v448 = vld [vmem:[%s266 + $0x2b0] sm:$0xf]
        %v449 = vld [vmem:[%s266 + $0x2b4] sm:$0xf]
        %v450 = vld [vmem:[%s266 + $0x2b8] sm:$0xf]
        %v451 = vld [vmem:[%s266 + $0x2bc] sm:$0xf]
        %v452 = vld [vmem:[%s266 + $0x2c0] sm:$0xf]
        %v453 = vld [vmem:[%s266 + $0x2c4] sm:$0xf]
        %v454 = vld [vmem:[%s266 + $0x2c8] sm:$0xf]
        %v455 = vld [vmem:[%s266 + $0x2cc] sm:$0xf]
        %v456 = vld [vmem:[%s266 + $0x2d0] sm:$0xf]
        %v457 = vld [vmem:[%s266 + $0x2d4] sm:$0xf]
        %v458 = vld [vmem:[%s266 + $0x2d8] sm:$0xf]
        %v459 = vld [vmem:[%s266 + $0x2dc] sm:$0xf]
        %v460 = vld [vmem:[%s266 + $0x2e0] sm:$0xf]
        %v461 = vld [vmem:[%s266 + $0x2e4] sm:$0xf]
        %v462 = vld [vmem:[%s266 + $0x2e8] sm:$0xf]
        %v463 = vld [vmem:[%s266 + $0x2ec] sm:$0xf]
        %v464 = vld [vmem:[%s266 + $0x2f0] sm:$0xf]
        %v465 = vld [vmem:[%s266 + $0x2f4] sm:$0xf]
        %v466 = vld [vmem:[%s266 + $0x2f8] sm:$0xf]
        %v467 = vld [vmem:[%s266 + $0x2fc] sm:$0xf]
        %v468 = vld [vmem:[%s266 + $0x300] sm:$0xf]
        %v469 = vld [vmem:[%s266 + $0x304] sm:$0xf]
        %v470 = vld [vmem:[%s266 + $0x308] sm:$0xf]
        %v471 = vld [vmem:[%s266 + $0x30c] sm:$0xf]
        %v472 = vld [vmem:[%s266 + $0x310] sm:$0xf]
        %v473 = vld [vmem:[%s266 + $0x314] sm:$0xf]
        %v474 = vld [vmem:[%s266 + $0x318] sm:$0xf]
        %v475 = vld [vmem:[%s266 + $0x31c] sm:$0xf]
        %v476 = vld [vmem:[%s266 + $0x320] sm:$0xf]
        %v477 = vld [vmem:[%s266 + $0x324] sm:$0xf]
        %v478 = vld [vmem:[%s266 + $0x328] sm:$0xf]
        %v479 = vld [vmem:[%s266 + $0x32c] sm:$0xf]
        %v480 = vld [vmem:[%s266 + $0x330] sm:$0xf]
        %v481 = vld [vmem:[%s266 + $0x334] sm:$0xf]
        %v482 = vld [vmem:[%s266 + $0x338] sm:$0xf]
        %v483 = vld [vmem:[%s266 + $0x33c] sm:$0xf]
        %v484 = vld [vmem:[%s266 + $0x340] sm:$0xf]
        %v485 = vld [vmem:[%s266 + $0x344] sm:$0xf]
        %v486 = vld [vmem:[%s266 + $0x348] sm:$0xf]
        %v487 = vld [vmem:[%s266 + $0x34c] sm:$0xf]
        %v488 = vld [vmem:[%s266 + $0x350] sm:$0xf]
        %v489 = vld [vmem:[%s266 + $0x354] sm:$0xf]
        %v490 = vld [vmem:[%s266 + $0x358] sm:$0xf]
        %v491 = vld [vmem:[%s266 + $0x35c] sm:$0xf]
        %v492 = vld [vmem:[%s266 + $0x360] sm:$0xf]
        %v493 = vld [vmem:[%s266 + $0x364] sm:$0xf]
        %v494 = vld [vmem:[%s266 + $0x368] sm:$0xf]
        %v495 = vld [vmem:[%s266 + $0x36c] sm:$0xf]
        %v496 = vld [vmem:[%s266 + $0x370] sm:$0xf]
        %v497 = vld [vmem:[%s266 + $0x374] sm:$0xf]
        %v498 = vld [vmem:[%s266 + $0x378] sm:$0xf]
        %v499 = vld [vmem:[%s266 + $0x37c] sm:$0xf]
        %v500 = vld [vmem:[%s266 + $0x380] sm:$0xf]
        %v501 = vld [vmem:[%s266 + $0x384] sm:$0xf]
        %v502 = vld [vmem:[%s266 + $0x388] sm:$0xf]
        %v503 = vld [vmem:[%s266 + $0x38c] sm:$0xf]
        %v504 = vld [vmem:[%s266 + $0x390] sm:$0xf]
        %v505 = vld [vmem:[%s266 + $0x394] sm:$0xf]
        %v506 = vld [vmem:[%s266 + $0x398] sm:$0xf]
        %v507 = vld [vmem:[%s266 + $0x39c] sm:$0xf]
        %v508 = vld [vmem:[%s266 + $0x3a0] sm:$0xf]
        %v509 = vld [vmem:[%s266 + $0x3a4] sm:$0xf]
        %v510 = vld [vmem:[%s266 + $0x3a8] sm:$0xf]
        %v511 = vld [vmem:[%s266 + $0x3ac] sm:$0xf]
        %v512 = vld [vmem:[%s266 + $0x3b0] sm:$0xf]
        %v513 = vld [vmem:[%s266 + $0x3b4] sm:$0xf]
        %v514 = vld [vmem:[%s266 + $0x3b8] sm:$0xf]
        %v515 = vld [vmem:[%s266 + $0x3bc] sm:$0xf]
        %v516 = vld [vmem:[%s266 + $0x3c0] sm:$0xf]
        %v517 = vld [vmem:[%s266 + $0x3c4] sm:$0xf]
        %v518 = vld [vmem:[%s266 + $0x3c8] sm:$0xf]
        %v519 = vld [vmem:[%s266 + $0x3cc] sm:$0xf]
        %v520 = vld [vmem:[%s266 + $0x3d0] sm:$0xf]
        %v521 = vld [vmem:[%s266 + $0x3d4] sm:$0xf]
        %v522 = vld [vmem:[%s266 + $0x3d8] sm:$0xf]
        %v523 = vld [vmem:[%s266 + $0x3dc] sm:$0xf]
        %v524 = vld [vmem:[%s266 + $0x3e0] sm:$0xf]
        %v525 = vld [vmem:[%s266 + $0x3e4] sm:$0xf]
        %v526 = vld [vmem:[%s266 + $0x3e8] sm:$0xf]
        %v527 = vld [vmem:[%s266 + $0x3ec] sm:$0xf]
        %v528 = vld [vmem:[%s266 + $0x3f0] sm:$0xf]
        %v529 = vld [vmem:[%s266 + $0x3f4] sm:$0xf]
        %v530 = vld [vmem:[%s266 + $0x3f8] sm:$0xf]
        %v531 = vld [vmem:[%s266 + $0x3fc] sm:$0xf]
        %v532 = vld [vmem:[%s2] sm:$0xf]
        %v533 = vld [vmem:[%s3] sm:$0x1]
        %v535 = vlaneseq
        %v536 = vshrl.u32 %v535, 7
        %v537 = vsub.s32 0, %v536
        %v538 = vrot.slane %v533, %v537
        %v796 = vunpack.c.l.b16 %v276
        %v797 = vunpack.c.l.b16 %v277
        %v798 = vunpack.c.l.b16 %v278
        %v799 = vunpack.c.l.b16 %v279
        %v800 = vunpack.c.l.b16 %v280
        %v801 = vunpack.c.l.b16 %v281
        %v802 = vunpack.c.l.b16 %v282
        %v803 = vunpack.c.l.b16 %v283
        %v804 = vunpack.c.l.b16 %v284
        %v805 = vunpack.c.l.b16 %v285
        %v806 = vunpack.c.l.b16 %v286
        %v807 = vunpack.c.l.b16 %v287
        %v808 = vunpack.c.l.b16 %v288
        %v809 = vunpack.c.l.b16 %v289
        %v810 = vunpack.c.l.b16 %v290
        %v811 = vunpack.c.l.b16 %v291
        %v812 = vunpack.c.l.b16 %v292
        %v813 = vunpack.c.l.b16 %v293
        %v814 = vunpack.c.l.b16 %v294
        %v815 = vunpack.c.l.b16 %v295
        %v816 = vunpack.c.l.b16 %v296
        %v817 = vunpack.c.l.b16 %v297
        %v818 = vunpack.c.l.b16 %v298
        %v819 = vunpack.c.l.b16 %v299
        %v820 = vunpack.c.l.b16 %v300
        %v821 = vunpack.c.l.b16 %v301
        %v822 = vunpack.c.l.b16 %v302
        %v823 = vunpack.c.l.b16 %v303
        %v824 = vunpack.c.l.b16 %v304
        %v825 = vunpack.c.l.b16 %v305
        %v826 = vunpack.c.l.b16 %v306
        %v827 = vunpack.c.l.b16 %v307
        %v828 = vunpack.c.l.b16 %v308
        %v829 = vunpack.c.l.b16 %v309
        %v830 = vunpack.c.l.b16 %v310
        %v831 = vunpack.c.l.b16 %v311
        %v832 = vunpack.c.l.b16 %v312
        %v833 = vunpack.c.l.b16 %v313
        %v834 = vunpack.c.l.b16 %v314
        %v835 = vunpack.c.l.b16 %v315
        %v836 = vunpack.c.l.b16 %v316
        %v837 = vunpack.c.l.b16 %v317
        %v838 = vunpack.c.l.b16 %v318
        %v839 = vunpack.c.l.b16 %v319
        %v840 = vunpack.c.l.b16 %v320
        %v841 = vunpack.c.l.b16 %v321
        %v842 = vunpack.c.l.b16 %v322
        %v843 = vunpack.c.l.b16 %v323
        %v844 = vunpack.c.l.b16 %v324
        %v845 = vunpack.c.l.b16 %v325
        %v846 = vunpack.c.l.b16 %v326
        %v847 = vunpack.c.l.b16 %v327
        %v848 = vunpack.c.l.b16 %v328
        %v849 = vunpack.c.l.b16 %v329
        %v850 = vunpack.c.l.b16 %v330
        %v851 = vunpack.c.l.b16 %v331
        %v852 = vunpack.c.l.b16 %v332
        %v853 = vunpack.c.l.b16 %v333
        %v854 = vunpack.c.l.b16 %v334
        %v855 = vunpack.c.l.b16 %v335
        %v856 = vunpack.c.l.b16 %v336
        %v857 = vunpack.c.l.b16 %v337
        %v858 = vunpack.c.l.b16 %v338
        %v859 = vunpack.c.l.b16 %v339
        %v860 = vunpack.c.l.b16 %v340
        %v861 = vunpack.c.l.b16 %v341
        %v862 = vunpack.c.l.b16 %v342
        %v863 = vunpack.c.l.b16 %v343
        %v864 = vunpack.c.l.b16 %v344
        %v865 = vunpack.c.l.b16 %v345
        %v866 = vunpack.c.l.b16 %v346
        %v867 = vunpack.c.l.b16 %v347
        %v868 = vunpack.c.l.b16 %v348
        %v869 = vunpack.c.l.b16 %v349
        %v870 = vunpack.c.l.b16 %v350
        %v871 = vunpack.c.l.b16 %v351
        %v872 = vunpack.c.l.b16 %v352
        %v873 = vunpack.c.l.b16 %v353
        %v874 = vunpack.c.l.b16 %v354
        %v875 = vunpack.c.l.b16 %v355
        %v876 = vunpack.c.l.b16 %v356
        %v877 = vunpack.c.l.b16 %v357
        %v878 = vunpack.c.l.b16 %v358
        %v879 = vunpack.c.l.b16 %v359
        %v880 = vunpack.c.l.b16 %v360
        %v881 = vunpack.c.l.b16 %v361
        %v882 = vunpack.c.l.b16 %v362
        %v883 = vunpack.c.l.b16 %v363
        %v884 = vunpack.c.l.b16 %v364
        %v885 = vunpack.c.l.b16 %v365
        %v886 = vunpack.c.l.b16 %v366
        %v887 = vunpack.c.l.b16 %v367
        %v888 = vunpack.c.l.b16 %v368
        %v889 = vunpack.c.l.b16 %v369
        %v890 = vunpack.c.l.b16 %v370
        %v891 = vunpack.c.l.b16 %v371
        %v892 = vunpack.c.l.b16 %v372
        %v893 = vunpack.c.l.b16 %v373
        %v894 = vunpack.c.l.b16 %v374
        %v895 = vunpack.c.l.b16 %v375
        %v896 = vunpack.c.l.b16 %v376
        %v897 = vunpack.c.l.b16 %v377
        %v898 = vunpack.c.l.b16 %v378
        %v899 = vunpack.c.l.b16 %v379
        %v900 = vunpack.c.l.b16 %v380
        %v901 = vunpack.c.l.b16 %v381
        %v902 = vunpack.c.l.b16 %v382
        %v903 = vunpack.c.l.b16 %v383
        %v904 = vunpack.c.l.b16 %v384
        %v905 = vunpack.c.l.b16 %v385
        %v906 = vunpack.c.l.b16 %v386
        %v907 = vunpack.c.l.b16 %v387
        %v908 = vunpack.c.l.b16 %v388
        %v909 = vunpack.c.l.b16 %v389
        %v910 = vunpack.c.l.b16 %v390
        %v911 = vunpack.c.l.b16 %v391
        %v912 = vunpack.c.l.b16 %v392
        %v913 = vunpack.c.l.b16 %v393
        %v914 = vunpack.c.l.b16 %v394
        %v915 = vunpack.c.l.b16 %v395
        %v916 = vunpack.c.l.b16 %v396
        %v917 = vunpack.c.l.b16 %v397
        %v918 = vunpack.c.l.b16 %v398
        %v919 = vunpack.c.l.b16 %v399
        %v920 = vunpack.c.l.b16 %v400
        %v921 = vunpack.c.l.b16 %v401
        %v922 = vunpack.c.l.b16 %v402
        %v923 = vunpack.c.l.b16 %v403
        %v924 = vunpack.c.l.b16 %v404
        %v925 = vunpack.c.l.b16 %v405
        %v926 = vunpack.c.l.b16 %v406
        %v927 = vunpack.c.l.b16 %v407
        %v928 = vunpack.c.l.b16 %v408
        %v929 = vunpack.c.l.b16 %v409
        %v930 = vunpack.c.l.b16 %v410
        %v931 = vunpack.c.l.b16 %v411
        %v932 = vunpack.c.l.b16 %v412
        %v933 = vunpack.c.l.b16 %v413
        %v934 = vunpack.c.l.b16 %v414
        %v935 = vunpack.c.l.b16 %v415
        %v936 = vunpack.c.l.b16 %v416
        %v937 = vunpack.c.l.b16 %v417
        %v938 = vunpack.c.l.b16 %v418
        %v939 = vunpack.c.l.b16 %v419
        %v940 = vunpack.c.l.b16 %v420
        %v941 = vunpack.c.l.b16 %v421
        %v942 = vunpack.c.l.b16 %v422
        %v943 = vunpack.c.l.b16 %v423
        %v944 = vunpack.c.l.b16 %v424
        %v945 = vunpack.c.l.b16 %v425
        %v946 = vunpack.c.l.b16 %v426
        %v947 = vunpack.c.l.b16 %v427
        %v948 = vunpack.c.l.b16 %v428
        %v949 = vunpack.c.l.b16 %v429
        %v950 = vunpack.c.l.b16 %v430
        %v951 = vunpack.c.l.b16 %v431
        %v952 = vunpack.c.l.b16 %v432
        %v953 = vunpack.c.l.b16 %v433
        %v954 = vunpack.c.l.b16 %v434
        %v955 = vunpack.c.l.b16 %v435
        %v956 = vunpack.c.l.b16 %v436
        %v957 = vunpack.c.l.b16 %v437
        %v958 = vunpack.c.l.b16 %v438
        %v959 = vunpack.c.l.b16 %v439
        %v960 = vunpack.c.l.b16 %v440
        %v961 = vunpack.c.l.b16 %v441
        %v962 = vunpack.c.l.b16 %v442
        %v963 = vunpack.c.l.b16 %v443
        %v964 = vunpack.c.l.b16 %v444
        %v965 = vunpack.c.l.b16 %v445
        %v966 = vunpack.c.l.b16 %v446
        %v967 = vunpack.c.l.b16 %v447
        %v968 = vunpack.c.l.b16 %v448
        %v969 = vunpack.c.l.b16 %v449
        %v970 = vunpack.c.l.b16 %v450
        %v971 = vunpack.c.l.b16 %v451
        %v972 = vunpack.c.l.b16 %v452
        %v973 = vunpack.c.l.b16 %v453
        %v974 = vunpack.c.l.b16 %v454
        %v975 = vunpack.c.l.b16 %v455
        %v976 = vunpack.c.l.b16 %v456
        %v977 = vunpack.c.l.b16 %v457
        %v978 = vunpack.c.l.b16 %v458
        %v979 = vunpack.c.l.b16 %v459
        %v980 = vunpack.c.l.b16 %v460
        %v981 = vunpack.c.l.b16 %v461
        %v982 = vunpack.c.l.b16 %v462
        %v983 = vunpack.c.l.b16 %v463
        %v984 = vunpack.c.l.b16 %v464
        %v985 = vunpack.c.l.b16 %v465
        %v986 = vunpack.c.l.b16 %v466
        %v987 = vunpack.c.l.b16 %v467
        %v988 = vunpack.c.l.b16 %v468
        %v989 = vunpack.c.l.b16 %v469
        %v990 = vunpack.c.l.b16 %v470
        %v991 = vunpack.c.l.b16 %v471
        %v992 = vunpack.c.l.b16 %v472
        %v993 = vunpack.c.l.b16 %v473
        %v994 = vunpack.c.l.b16 %v474
        %v995 = vunpack.c.l.b16 %v475
        %v996 = vunpack.c.l.b16 %v476
        %v997 = vunpack.c.l.b16 %v477
        %v998 = vunpack.c.l.b16 %v478
        %v999 = vunpack.c.l.b16 %v479
        %v1000 = vunpack.c.l.b16 %v480
        %v1001 = vunpack.c.l.b16 %v481
        %v1002 = vunpack.c.l.b16 %v482
        %v1003 = vunpack.c.l.b16 %v483
        %v1004 = vunpack.c.l.b16 %v484
        %v1005 = vunpack.c.l.b16 %v485
        %v1006 = vunpack.c.l.b16 %v486
        %v1007 = vunpack.c.l.b16 %v487
        %v1008 = vunpack.c.l.b16 %v488
        %v1009 = vunpack.c.l.b16 %v489
        %v1010 = vunpack.c.l.b16 %v490
        %v1011 = vunpack.c.l.b16 %v491
        %v1012 = vunpack.c.l.b16 %v492
        %v1013 = vunpack.c.l.b16 %v493
        %v1014 = vunpack.c.l.b16 %v494
        %v1015 = vunpack.c.l.b16 %v495
        %v1016 = vunpack.c.l.b16 %v496
        %v1017 = vunpack.c.l.b16 %v497
        %v1018 = vunpack.c.l.b16 %v498
        %v1019 = vunpack.c.l.b16 %v499
        %v1020 = vunpack.c.l.b16 %v500
        %v1021 = vunpack.c.l.b16 %v501
        %v1022 = vunpack.c.l.b16 %v502
        %v1023 = vunpack.c.l.b16 %v503
        %v1024 = vunpack.c.l.b16 %v504
        %v1025 = vunpack.c.l.b16 %v505
        %v1026 = vunpack.c.l.b16 %v506
        %v1027 = vunpack.c.l.b16 %v507
        %v1028 = vunpack.c.l.b16 %v508
        %v1029 = vunpack.c.l.b16 %v509
        %v1030 = vunpack.c.l.b16 %v510
        %v1031 = vunpack.c.l.b16 %v511
        %v1032 = vunpack.c.l.b16 %v512
        %v1033 = vunpack.c.l.b16 %v513
        %v1034 = vunpack.c.l.b16 %v514
        %v1035 = vunpack.c.l.b16 %v515
        %v1036 = vunpack.c.l.b16 %v516
        %v1037 = vunpack.c.l.b16 %v517
        %v1038 = vunpack.c.l.b16 %v518
        %v1039 = vunpack.c.l.b16 %v519
        %v1040 = vunpack.c.l.b16 %v520
        %v1041 = vunpack.c.l.b16 %v521
        %v1042 = vunpack.c.l.b16 %v522
        %v1043 = vunpack.c.l.b16 %v523
        %v1044 = vunpack.c.l.b16 %v524
        %v1045 = vunpack.c.l.b16 %v525
        %v1046 = vunpack.c.l.b16 %v526
        %v1047 = vunpack.c.l.b16 %v527
        %v1048 = vunpack.c.l.b16 %v528
        %v1049 = vunpack.c.l.b16 %v529
        %v1050 = vunpack.c.l.b16 %v530
        %v1051 = vunpack.c.l.b16 %v531
        %v1052 = vpack.c.b16 %v797, %v796
        %v1053 = vpack.c.b16 %v799, %v798
        %v1054 = vpack.c.b16 %v801, %v800
        %v1055 = vpack.c.b16 %v803, %v802
        %v1056 = vpack.c.b16 %v805, %v804
        %v1057 = vpack.c.b16 %v807, %v806
        %v1058 = vpack.c.b16 %v809, %v808
        %v1059 = vpack.c.b16 %v811, %v810
        %v1060 = vpack.c.b16 %v813, %v812
        %v1061 = vpack.c.b16 %v815, %v814
        %v1062 = vpack.c.b16 %v817, %v816
        %v1063 = vpack.c.b16 %v819, %v818
        %v1064 = vpack.c.b16 %v821, %v820
        %v1065 = vpack.c.b16 %v823, %v822
        %v1066 = vpack.c.b16 %v825, %v824
        %v1067 = vpack.c.b16 %v827, %v826
        %v1068 = vpack.c.b16 %v829, %v828
        %v1069 = vpack.c.b16 %v831, %v830
        %v1070 = vpack.c.b16 %v833, %v832
        %v1071 = vpack.c.b16 %v835, %v834
        %v1072 = vpack.c.b16 %v837, %v836
        %v1073 = vpack.c.b16 %v839, %v838
        %v1074 = vpack.c.b16 %v841, %v840
        %v1075 = vpack.c.b16 %v843, %v842
        %v1076 = vpack.c.b16 %v845, %v844
        %v1077 = vpack.c.b16 %v847, %v846
        %v1078 = vpack.c.b16 %v849, %v848
        %v1079 = vpack.c.b16 %v851, %v850
        %v1080 = vpack.c.b16 %v853, %v852
        %v1081 = vpack.c.b16 %v855, %v854
        %v1082 = vpack.c.b16 %v857, %v856
        %v1083 = vpack.c.b16 %v859, %v858
        %v1084 = vpack.c.b16 %v861, %v860
        %v1085 = vpack.c.b16 %v863, %v862
        %v1086 = vpack.c.b16 %v865, %v864
        %v1087 = vpack.c.b16 %v867, %v866
        %v1088 = vpack.c.b16 %v869, %v868
        %v1089 = vpack.c.b16 %v871, %v870
        %v1090 = vpack.c.b16 %v873, %v872
        %v1091 = vpack.c.b16 %v875, %v874
        %v1092 = vpack.c.b16 %v877, %v876
        %v1093 = vpack.c.b16 %v879, %v878
        %v1094 = vpack.c.b16 %v881, %v880
        %v1095 = vpack.c.b16 %v883, %v882
        %v1096 = vpack.c.b16 %v885, %v884
        %v1097 = vpack.c.b16 %v887, %v886
        %v1098 = vpack.c.b16 %v889, %v888
        %v1099 = vpack.c.b16 %v891, %v890
        %v1100 = vpack.c.b16 %v893, %v892
        %v1101 = vpack.c.b16 %v895, %v894
        %v1102 = vpack.c.b16 %v897, %v896
        %v1103 = vpack.c.b16 %v899, %v898
        %v1104 = vpack.c.b16 %v901, %v900
        %v1105 = vpack.c.b16 %v903, %v902
        %v1106 = vpack.c.b16 %v905, %v904
        %v1107 = vpack.c.b16 %v907, %v906
        %v1108 = vpack.c.b16 %v909, %v908
        %v1109 = vpack.c.b16 %v911, %v910
        %v1110 = vpack.c.b16 %v913, %v912
        %v1111 = vpack.c.b16 %v915, %v914
        %v1112 = vpack.c.b16 %v917, %v916
        %v1113 = vpack.c.b16 %v919, %v918
        %v1114 = vpack.c.b16 %v921, %v920
        %v1115 = vpack.c.b16 %v923, %v922
        %v1116 = vpack.c.b16 %v925, %v924
        %v1117 = vpack.c.b16 %v927, %v926
        %v1118 = vpack.c.b16 %v929, %v928
        %v1119 = vpack.c.b16 %v931, %v930
        %v1120 = vpack.c.b16 %v933, %v932
        %v1121 = vpack.c.b16 %v935, %v934
        %v1122 = vpack.c.b16 %v937, %v936
        %v1123 = vpack.c.b16 %v939, %v938
        %v1124 = vpack.c.b16 %v941, %v940
        %v1125 = vpack.c.b16 %v943, %v942
        %v1126 = vpack.c.b16 %v945, %v944
        %v1127 = vpack.c.b16 %v947, %v946
        %v1128 = vpack.c.b16 %v949, %v948
        %v1129 = vpack.c.b16 %v951, %v950
        %v1130 = vpack.c.b16 %v953, %v952
        %v1131 = vpack.c.b16 %v955, %v954
        %v1132 = vpack.c.b16 %v957, %v956
        %v1133 = vpack.c.b16 %v959, %v958
        %v1134 = vpack.c.b16 %v961, %v960
        %v1135 = vpack.c.b16 %v963, %v962
        %v1136 = vpack.c.b16 %v965, %v964
        %v1137 = vpack.c.b16 %v967, %v966
        %v1138 = vpack.c.b16 %v969, %v968
        %v1139 = vpack.c.b16 %v971, %v970
        %v1140 = vpack.c.b16 %v973, %v972
        %v1141 = vpack.c.b16 %v975, %v974
        %v1142 = vpack.c.b16 %v977, %v976
        %v1143 = vpack.c.b16 %v979, %v978
        %v1144 = vpack.c.b16 %v981, %v980
        %v1145 = vpack.c.b16 %v983, %v982
        %v1146 = vpack.c.b16 %v985, %v984
        %v1147 = vpack.c.b16 %v987, %v986
        %v1148 = vpack.c.b16 %v989, %v988
        %v1149 = vpack.c.b16 %v991, %v990
        %v1150 = vpack.c.b16 %v993, %v992
        %v1151 = vpack.c.b16 %v995, %v994
        %v1152 = vpack.c.b16 %v997, %v996
        %v1153 = vpack.c.b16 %v999, %v998
        %v1154 = vpack.c.b16 %v1001, %v1000
        %v1155 = vpack.c.b16 %v1003, %v1002
        %v1156 = vpack.c.b16 %v1005, %v1004
        %v1157 = vpack.c.b16 %v1007, %v1006
        %v1158 = vpack.c.b16 %v1009, %v1008
        %v1159 = vpack.c.b16 %v1011, %v1010
        %v1160 = vpack.c.b16 %v1013, %v1012
        %v1161 = vpack.c.b16 %v1015, %v1014
        %v1162 = vpack.c.b16 %v1017, %v1016
        %v1163 = vpack.c.b16 %v1019, %v1018
        %v1164 = vpack.c.b16 %v1021, %v1020
        %v1165 = vpack.c.b16 %v1023, %v1022
        %v1166 = vpack.c.b16 %v1025, %v1024
        %v1167 = vpack.c.b16 %v1027, %v1026
        %v1168 = vpack.c.b16 %v1029, %v1028
        %v1169 = vpack.c.b16 %v1031, %v1030
        %v1170 = vpack.c.b16 %v1033, %v1032
        %v1171 = vpack.c.b16 %v1035, %v1034
        %v1172 = vpack.c.b16 %v1037, %v1036
        %v1173 = vpack.c.b16 %v1039, %v1038
        %v1174 = vpack.c.b16 %v1041, %v1040
        %v1175 = vpack.c.b16 %v1043, %v1042
        %v1176 = vpack.c.b16 %v1045, %v1044
        %v1177 = vpack.c.b16 %v1047, %v1046
        %v1178 = vpack.c.b16 %v1049, %v1048
        %v1179 = vpack.c.b16 %v1051, %v1050
        %vm1180 = vcmask 64512
        %v1182 = vsel %vm1180, %v1052, 0
        %v1185 = vsel %vm1180, %v1053, 0
        %v1188 = vsel %vm1180, %v1054, 0
        %v1191 = vsel %vm1180, %v1055, 0
        %v1194 = vsel %vm1180, %v1056, 0
        %v1197 = vsel %vm1180, %v1057, 0
        %v1200 = vsel %vm1180, %v1058, 0
        %v1203 = vsel %vm1180, %v1059, 0
        %v1206 = vsel %vm1180, %v1060, 0
        %v1209 = vsel %vm1180, %v1061, 0
        %v1212 = vsel %vm1180, %v1062, 0
        %v1215 = vsel %vm1180, %v1063, 0
        %v1218 = vsel %vm1180, %v1064, 0
        %v1221 = vsel %vm1180, %v1065, 0
        %v1224 = vsel %vm1180, %v1066, 0
        %v1227 = vsel %vm1180, %v1067, 0
        %v1230 = vsel %vm1180, %v1068, 0
        %v1233 = vsel %vm1180, %v1069, 0
        %v1236 = vsel %vm1180, %v1070, 0
        %v1239 = vsel %vm1180, %v1071, 0
        %v1242 = vsel %vm1180, %v1072, 0
        %v1245 = vsel %vm1180, %v1073, 0
        %v1248 = vsel %vm1180, %v1074, 0
        %v1251 = vsel %vm1180, %v1075, 0
        %v1254 = vsel %vm1180, %v1076, 0
        %v1257 = vsel %vm1180, %v1077, 0
        %v1260 = vsel %vm1180, %v1078, 0
        %v1263 = vsel %vm1180, %v1079, 0
        %v1266 = vsel %vm1180, %v1080, 0
        %v1269 = vsel %vm1180, %v1081, 0
        %v1272 = vsel %vm1180, %v1082, 0
        %v1275 = vsel %vm1180, %v1083, 0
        %v1278 = vsel %vm1180, %v1084, 0
        %v1281 = vsel %vm1180, %v1085, 0
        %v1284 = vsel %vm1180, %v1086, 0
        %v1287 = vsel %vm1180, %v1087, 0
        %v1290 = vsel %vm1180, %v1088, 0
        %v1293 = vsel %vm1180, %v1089, 0
        %v1296 = vsel %vm1180, %v1090, 0
        %v1299 = vsel %vm1180, %v1091, 0
        %v1302 = vsel %vm1180, %v1092, 0
        %v1305 = vsel %vm1180, %v1093, 0
        %v1308 = vsel %vm1180, %v1094, 0
        %v1311 = vsel %vm1180, %v1095, 0
        %v1314 = vsel %vm1180, %v1096, 0
        %v1317 = vsel %vm1180, %v1097, 0
        %v1320 = vsel %vm1180, %v1098, 0
        %v1323 = vsel %vm1180, %v1099, 0
        %v1326 = vsel %vm1180, %v1100, 0
        %v1329 = vsel %vm1180, %v1101, 0
        %v1332 = vsel %vm1180, %v1102, 0
        %v1335 = vsel %vm1180, %v1103, 0
        %v1338 = vsel %vm1180, %v1104, 0
        %v1341 = vsel %vm1180, %v1105, 0
        %v1344 = vsel %vm1180, %v1106, 0
        %v1347 = vsel %vm1180, %v1107, 0
        %v1350 = vsel %vm1180, %v1108, 0
        %v1353 = vsel %vm1180, %v1109, 0
        %v1356 = vsel %vm1180, %v1110, 0
        %v1359 = vsel %vm1180, %v1111, 0
        %v1362 = vsel %vm1180, %v1112, 0
        %v1365 = vsel %vm1180, %v1113, 0
        %v1368 = vsel %vm1180, %v1114, 0
        %v1371 = vsel %vm1180, %v1115, 0
        %v1374 = vsel %vm1180, %v1116, 0
        %v1377 = vsel %vm1180, %v1117, 0
        %v1380 = vsel %vm1180, %v1118, 0
        %v1383 = vsel %vm1180, %v1119, 0
        %v1386 = vsel %vm1180, %v1120, 0
        %v1389 = vsel %vm1180, %v1121, 0
        %v1392 = vsel %vm1180, %v1122, 0
        %v1395 = vsel %vm1180, %v1123, 0
        %v1398 = vsel %vm1180, %v1124, 0
        %v1401 = vsel %vm1180, %v1125, 0
        %v1404 = vsel %vm1180, %v1126, 0
        %v1407 = vsel %vm1180, %v1127, 0
        %v1410 = vsel %vm1180, %v1128, 0
        %v1413 = vsel %vm1180, %v1129, 0
        %v1416 = vsel %vm1180, %v1130, 0
        %v1419 = vsel %vm1180, %v1131, 0
        %v1422 = vsel %vm1180, %v1132, 0
        %v1425 = vsel %vm1180, %v1133, 0
        %v1428 = vsel %vm1180, %v1134, 0
        %v1431 = vsel %vm1180, %v1135, 0
        %v1434 = vsel %vm1180, %v1136, 0
        %v1437 = vsel %vm1180, %v1137, 0
        %v1440 = vsel %vm1180, %v1138, 0
        %v1443 = vsel %vm1180, %v1139, 0
        %v1446 = vsel %vm1180, %v1140, 0
        %v1449 = vsel %vm1180, %v1141, 0
        %v1452 = vsel %vm1180, %v1142, 0
        %v1455 = vsel %vm1180, %v1143, 0
        %v1458 = vsel %vm1180, %v1144, 0
        %v1461 = vsel %vm1180, %v1145, 0
        %v1464 = vsel %vm1180, %v1146, 0
        %v1467 = vsel %vm1180, %v1147, 0
        %v1470 = vsel %vm1180, %v1148, 0
        %v1473 = vsel %vm1180, %v1149, 0
        %v1476 = vsel %vm1180, %v1150, 0
        %v1479 = vsel %vm1180, %v1151, 0
        %v1482 = vsel %vm1180, %v1152, 0
        %v1485 = vsel %vm1180, %v1153, 0
        %v1488 = vsel %vm1180, %v1154, 0
        %v1491 = vsel %vm1180, %v1155, 0
        %v1494 = vsel %vm1180, %v1156, 0
        %v1497 = vsel %vm1180, %v1157, 0
        %v1500 = vsel %vm1180, %v1158, 0
        %v1503 = vsel %vm1180, %v1159, 0
        %v1506 = vsel %vm1180, %v1160, 0
        %v1509 = vsel %vm1180, %v1161, 0
        %v1512 = vsel %vm1180, %v1162, 0
        %v1515 = vsel %vm1180, %v1163, 0
        %v1518 = vsel %vm1180, %v1164, 0
        %v1521 = vsel %vm1180, %v1165, 0
        %v1524 = vsel %vm1180, %v1166, 0
        %v1527 = vsel %vm1180, %v1167, 0
        %v1530 = vsel %vm1180, %v1168, 0
        %v1533 = vsel %vm1180, %v1169, 0
        %v1536 = vsel %vm1180, %v1170, 0
        %v1539 = vsel %vm1180, %v1171, 0
        %v1542 = vsel %vm1180, %v1172, 0
        %v1545 = vsel %vm1180, %v1173, 0
        %v1548 = vsel %vm1180, %v1174, 0
        %v1551 = vsel %vm1180, %v1175, 0
        %v1554 = vsel %vm1180, %v1176, 0
        %v1557 = vsel %vm1180, %v1177, 0
        %v1560 = vsel %vm1180, %v1178, 0
        %v1563 = vsel %vm1180, %v1179, 0
        %vm1565 = vcmask 1043456
        %v1567 = vsel %vm1565, %v532, 0
        %1569 = vmatprep.subr.bf16.mxu0 0
        %1570 = vmatpush1.bf16.msra.mxu0 0
        %1571 = vmatprep.subr.bf16.mxu0 0
        %1572 = vmatpush1.bf16.msra.mxu0 0
        %1573 = vmatprep.subr.bf16.mxu0 0
        %1574 = vmatpush1.bf16.msra.mxu0 0
        %1575 = vmatprep.subr.bf16.mxu0 0
        %1576 = vmatpush1.bf16.msra.mxu0 0
        %1577 = vmatprep.subr.bf16.mxu0 0
        %1578 = vmatpush1.bf16.msra.mxu0 0
        %1579 = vmatprep.subr.bf16.mxu0 0
        %1580 = vmatpush1.bf16.msra.mxu0 0
        %1581 = vmatprep.subr.bf16.mxu0 0
        %1582 = vmatpush1.bf16.msra.mxu0 0
        %1583 = vmatprep.subr.bf16.mxu0 0
        %1584 = vmatpush1.bf16.msra.mxu0 %v1567
        %1585 = vmatprep.subr.bf16.mxu0 0
        %1586 = vmatpush2.bf16.msra.mxu0 0
        %1587 = vmatprep.subr.bf16.mxu0 0
        %1588 = vmatpush2.bf16.msra.mxu0 0
        %1589 = vmatprep.subr.bf16.mxu0 0
        %1590 = vmatpush2.bf16.msra.mxu0 0
        %1591 = vmatprep.subr.bf16.mxu0 0
        %1592 = vmatpush2.bf16.msra.mxu0 0
        %1593 = vmatprep.subr.bf16.mxu0 0
        %1594 = vmatpush2.bf16.msra.mxu0 0
        %1595 = vmatprep.subr.bf16.mxu0 0
        %1596 = vmatpush2.bf16.msra.mxu0 0
        %1597 = vmatprep.subr.bf16.mxu0 0
        %1598 = vmatpush2.bf16.msra.mxu0 0
        %1599 = vmatprep.subr.bf16.mxu0 0
        %1600 = vmatpush2.bf16.msra.mxu0 0
        %1601 = vmatprep.mubr.bf16.mxu0 0
        %1602 = vmatmul.mubr.bf16.gmra.mxu0 %v1182
        %v1603 = vpop.f32.mrf.mxu0
        %v1604 = vadd.f32 %v538, %v1603
        %v1605 = vpop.f32.mrf.mxu0
        %v1606 = vpop.f32.mrf.mxu0
        %v1607 = vadd.f32 %v538, %v1606
        %v1608 = vpop.f32.mrf.mxu0
        %1609 = vmatprep.mubr.bf16.mxu0 0
        %1610 = vmatmul.mubr.bf16.gmra.mxu0 %v1185
        %v1611 = vpop.f32.mrf.mxu0
        %v1612 = vadd.f32 %v538, %v1611
        %v1613 = vpop.f32.mrf.mxu0
        %v1614 = vpop.f32.mrf.mxu0
        %v1615 = vadd.f32 %v538, %v1614
        %v1616 = vpop.f32.mrf.mxu0
        %1617 = vmatprep.mubr.bf16.mxu0 0
        %1618 = vmatmul.mubr.bf16.gmra.mxu0 %v1188
        %v1619 = vpop.f32.mrf.mxu0
        %v1620 = vadd.f32 %v538, %v1619
        %v1621 = vpop.f32.mrf.mxu0
        %v1622 = vpop.f32.mrf.mxu0
        %v1623 = vadd.f32 %v538, %v1622
        %v1624 = vpop.f32.mrf.mxu0
        %1625 = vmatprep.mubr.bf16.mxu0 0
        %1626 = vmatmul.mubr.bf16.gmra.mxu0 %v1191
        %v1627 = vpop.f32.mrf.mxu0
        %v1628 = vadd.f32 %v538, %v1627
        %v1629 = vpop.f32.mrf.mxu0
        %v1630 = vpop.f32.mrf.mxu0
        %v1631 = vadd.f32 %v538, %v1630
        %v1632 = vpop.f32.mrf.mxu0
        %1633 = vmatprep.mubr.bf16.mxu0 0
        %1634 = vmatmul.mubr.bf16.gmra.mxu0 %v1194
        %v1635 = vpop.f32.mrf.mxu0
        %v1636 = vadd.f32 %v538, %v1635
        %v1637 = vpop.f32.mrf.mxu0
        %v1638 = vpop.f32.mrf.mxu0
        %v1639 = vadd.f32 %v538, %v1638
        %v1640 = vpop.f32.mrf.mxu0
        %1641 = vmatprep.mubr.bf16.mxu0 0
        %1642 = vmatmul.mubr.bf16.gmra.mxu0 %v1197
        %v1643 = vpop.f32.mrf.mxu0
        %v1644 = vadd.f32 %v538, %v1643
        %v1645 = vpop.f32.mrf.mxu0
        %v1646 = vpop.f32.mrf.mxu0
        %v1647 = vadd.f32 %v538, %v1646
        %v1648 = vpop.f32.mrf.mxu0
        %1649 = vmatprep.mubr.bf16.mxu0 0
        %1650 = vmatmul.mubr.bf16.gmra.mxu0 %v1200
        %v1651 = vpop.f32.mrf.mxu0
        %v1652 = vadd.f32 %v538, %v1651
        %v1653 = vpop.f32.mrf.mxu0
        %v1654 = vpop.f32.mrf.mxu0
        %v1655 = vadd.f32 %v538, %v1654
        %v1656 = vpop.f32.mrf.mxu0
        %1657 = vmatprep.mubr.bf16.mxu0 0
        %1658 = vmatmul.mubr.bf16.gmra.mxu0 %v1203
        %v1659 = vpop.f32.mrf.mxu0
        %v1660 = vadd.f32 %v538, %v1659
        %v1661 = vpop.f32.mrf.mxu0
        %v1662 = vpop.f32.mrf.mxu0
        %v1663 = vadd.f32 %v538, %v1662
        %v1664 = vpop.f32.mrf.mxu0
        %1665 = vmatprep.mubr.bf16.mxu0 0
        %1666 = vmatmul.mubr.bf16.gmra.mxu0 %v1206
        %v1667 = vpop.f32.mrf.mxu0
        %v1668 = vadd.f32 %v538, %v1667
        %v1669 = vpop.f32.mrf.mxu0
        %v1670 = vpop.f32.mrf.mxu0
        %v1671 = vadd.f32 %v538, %v1670
        %v1672 = vpop.f32.mrf.mxu0
        %1673 = vmatprep.mubr.bf16.mxu0 0
        %1674 = vmatmul.mubr.bf16.gmra.mxu0 %v1209
        %v1675 = vpop.f32.mrf.mxu0
        %v1676 = vadd.f32 %v538, %v1675
        %v1677 = vpop.f32.mrf.mxu0
        %v1678 = vpop.f32.mrf.mxu0
        %v1679 = vadd.f32 %v538, %v1678
        %v1680 = vpop.f32.mrf.mxu0
        %1681 = vmatprep.mubr.bf16.mxu0 0
        %1682 = vmatmul.mubr.bf16.gmra.mxu0 %v1212
        %v1683 = vpop.f32.mrf.mxu0
        %v1684 = vadd.f32 %v538, %v1683
        %v1685 = vpop.f32.mrf.mxu0
        %v1686 = vpop.f32.mrf.mxu0
        %v1687 = vadd.f32 %v538, %v1686
        %v1688 = vpop.f32.mrf.mxu0
        %1689 = vmatprep.mubr.bf16.mxu0 0
        %1690 = vmatmul.mubr.bf16.gmra.mxu0 %v1215
        %v1691 = vpop.f32.mrf.mxu0
        %v1692 = vadd.f32 %v538, %v1691
        %v1693 = vpop.f32.mrf.mxu0
        %v1694 = vpop.f32.mrf.mxu0
        %v1695 = vadd.f32 %v538, %v1694
        %v1696 = vpop.f32.mrf.mxu0
        %1697 = vmatprep.mubr.bf16.mxu0 0
        %1698 = vmatmul.mubr.bf16.gmra.mxu0 %v1218
        %v1699 = vpop.f32.mrf.mxu0
        %v1700 = vadd.f32 %v538, %v1699
        %v1701 = vpop.f32.mrf.mxu0
        %v1702 = vpop.f32.mrf.mxu0
        %v1703 = vadd.f32 %v538, %v1702
        %v1704 = vpop.f32.mrf.mxu0
        %1705 = vmatprep.mubr.bf16.mxu0 0
        %1706 = vmatmul.mubr.bf16.gmra.mxu0 %v1221
        %v1707 = vpop.f32.mrf.mxu0
        %v1708 = vadd.f32 %v538, %v1707
        %v1709 = vpop.f32.mrf.mxu0
        %v1710 = vpop.f32.mrf.mxu0
        %v1711 = vadd.f32 %v538, %v1710
        %v1712 = vpop.f32.mrf.mxu0
        %1713 = vmatprep.mubr.bf16.mxu0 0
        %1714 = vmatmul.mubr.bf16.gmra.mxu0 %v1224
        %v1715 = vpop.f32.mrf.mxu0
        %v1716 = vadd.f32 %v538, %v1715
        %v1717 = vpop.f32.mrf.mxu0
        %v1718 = vpop.f32.mrf.mxu0
        %v1719 = vadd.f32 %v538, %v1718
        %v1720 = vpop.f32.mrf.mxu0
        %1721 = vmatprep.mubr.bf16.mxu0 0
        %1722 = vmatmul.mubr.bf16.gmra.mxu0 %v1227
        %v1723 = vpop.f32.mrf.mxu0
        %v1724 = vadd.f32 %v538, %v1723
        %v1725 = vpop.f32.mrf.mxu0
        %v1726 = vpop.f32.mrf.mxu0
        %v1727 = vadd.f32 %v538, %v1726
        %v1728 = vpop.f32.mrf.mxu0
        %1729 = vmatprep.mubr.bf16.mxu0 0
        %1730 = vmatmul.mubr.bf16.gmra.mxu0 %v1230
        %v1731 = vpop.f32.mrf.mxu0
        %v1732 = vadd.f32 %v538, %v1731
        %v1733 = vpop.f32.mrf.mxu0
        %v1734 = vpop.f32.mrf.mxu0
        %v1735 = vadd.f32 %v538, %v1734
        %v1736 = vpop.f32.mrf.mxu0
        %1737 = vmatprep.mubr.bf16.mxu0 0
        %1738 = vmatmul.mubr.bf16.gmra.mxu0 %v1233
        %v1739 = vpop.f32.mrf.mxu0
        %v1740 = vadd.f32 %v538, %v1739
        %v1741 = vpop.f32.mrf.mxu0
        %v1742 = vpop.f32.mrf.mxu0
        %v1743 = vadd.f32 %v538, %v1742
        %v1744 = vpop.f32.mrf.mxu0
        %1745 = vmatprep.mubr.bf16.mxu0 0
        %1746 = vmatmul.mubr.bf16.gmra.mxu0 %v1236
        %v1747 = vpop.f32.mrf.mxu0
        %v1748 = vadd.f32 %v538, %v1747
        %v1749 = vpop.f32.mrf.mxu0
        %v1750 = vpop.f32.mrf.mxu0
        %v1751 = vadd.f32 %v538, %v1750
        %v1752 = vpop.f32.mrf.mxu0
        %1753 = vmatprep.mubr.bf16.mxu0 0
        %1754 = vmatmul.mubr.bf16.gmra.mxu0 %v1239
        %v1755 = vpop.f32.mrf.mxu0
        %v1756 = vadd.f32 %v538, %v1755
        %v1757 = vpop.f32.mrf.mxu0
        %v1758 = vpop.f32.mrf.mxu0
        %v1759 = vadd.f32 %v538, %v1758
        %v1760 = vpop.f32.mrf.mxu0
        %1761 = vmatprep.mubr.bf16.mxu0 0
        %1762 = vmatmul.mubr.bf16.gmra.mxu0 %v1242
        %v1763 = vpop.f32.mrf.mxu0
        %v1764 = vadd.f32 %v538, %v1763
        %v1765 = vpop.f32.mrf.mxu0
        %v1766 = vpop.f32.mrf.mxu0
        %v1767 = vadd.f32 %v538, %v1766
        %v1768 = vpop.f32.mrf.mxu0
        %1769 = vmatprep.mubr.bf16.mxu0 0
        %1770 = vmatmul.mubr.bf16.gmra.mxu0 %v1245
        %v1771 = vpop.f32.mrf.mxu0
        %v1772 = vadd.f32 %v538, %v1771
        %v1773 = vpop.f32.mrf.mxu0
        %v1774 = vpop.f32.mrf.mxu0
        %v1775 = vadd.f32 %v538, %v1774
        %v1776 = vpop.f32.mrf.mxu0
        %1777 = vmatprep.mubr.bf16.mxu0 0
        %1778 = vmatmul.mubr.bf16.gmra.mxu0 %v1248
        %v1779 = vpop.f32.mrf.mxu0
        %v1780 = vadd.f32 %v538, %v1779
        %v1781 = vpop.f32.mrf.mxu0
        %v1782 = vpop.f32.mrf.mxu0
        %v1783 = vadd.f32 %v538, %v1782
        %v1784 = vpop.f32.mrf.mxu0
        %1785 = vmatprep.mubr.bf16.mxu0 0
        %1786 = vmatmul.mubr.bf16.gmra.mxu0 %v1251
        %v1787 = vpop.f32.mrf.mxu0
        %v1788 = vadd.f32 %v538, %v1787
        %v1789 = vpop.f32.mrf.mxu0
        %v1790 = vpop.f32.mrf.mxu0
        %v1791 = vadd.f32 %v538, %v1790
        %v1792 = vpop.f32.mrf.mxu0
        %1793 = vmatprep.mubr.bf16.mxu0 0
        %1794 = vmatmul.mubr.bf16.gmra.mxu0 %v1254
        %v1795 = vpop.f32.mrf.mxu0
        %v1796 = vadd.f32 %v538, %v1795
        %v1797 = vpop.f32.mrf.mxu0
        %v1798 = vpop.f32.mrf.mxu0
        %v1799 = vadd.f32 %v538, %v1798
        %v1800 = vpop.f32.mrf.mxu0
        %1801 = vmatprep.mubr.bf16.mxu0 0
        %1802 = vmatmul.mubr.bf16.gmra.mxu0 %v1257
        %v1803 = vpop.f32.mrf.mxu0
        %v1804 = vadd.f32 %v538, %v1803
        %v1805 = vpop.f32.mrf.mxu0
        %v1806 = vpop.f32.mrf.mxu0
        %v1807 = vadd.f32 %v538, %v1806
        %v1808 = vpop.f32.mrf.mxu0
        %1809 = vmatprep.mubr.bf16.mxu0 0
        %1810 = vmatmul.mubr.bf16.gmra.mxu0 %v1260
        %v1811 = vpop.f32.mrf.mxu0
        %v1812 = vadd.f32 %v538, %v1811
        %v1813 = vpop.f32.mrf.mxu0
        %v1814 = vpop.f32.mrf.mxu0
        %v1815 = vadd.f32 %v538, %v1814
        %v1816 = vpop.f32.mrf.mxu0
        %1817 = vmatprep.mubr.bf16.mxu0 0
        %1818 = vmatmul.mubr.bf16.gmra.mxu0 %v1263
        %v1819 = vpop.f32.mrf.mxu0
        %v1820 = vadd.f32 %v538, %v1819
        %v1821 = vpop.f32.mrf.mxu0
        %v1822 = vpop.f32.mrf.mxu0
        %v1823 = vadd.f32 %v538, %v1822
        %v1824 = vpop.f32.mrf.mxu0
        %1825 = vmatprep.mubr.bf16.mxu0 0
        %1826 = vmatmul.mubr.bf16.gmra.mxu0 %v1266
        %v1827 = vpop.f32.mrf.mxu0
        %v1828 = vadd.f32 %v538, %v1827
        %v1829 = vpop.f32.mrf.mxu0
        %v1830 = vpop.f32.mrf.mxu0
        %v1831 = vadd.f32 %v538, %v1830
        %v1832 = vpop.f32.mrf.mxu0
        %1833 = vmatprep.mubr.bf16.mxu0 0
        %1834 = vmatmul.mubr.bf16.gmra.mxu0 %v1269
        %v1835 = vpop.f32.mrf.mxu0
        %v1836 = vadd.f32 %v538, %v1835
        %v1837 = vpop.f32.mrf.mxu0
        %v1838 = vpop.f32.mrf.mxu0
        %v1839 = vadd.f32 %v538, %v1838
        %v1840 = vpop.f32.mrf.mxu0
        %1841 = vmatprep.mubr.bf16.mxu0 0
        %1842 = vmatmul.mubr.bf16.gmra.mxu0 %v1272
        %v1843 = vpop.f32.mrf.mxu0
        %v1844 = vadd.f32 %v538, %v1843
        %v1845 = vpop.f32.mrf.mxu0
        %v1846 = vpop.f32.mrf.mxu0
        %v1847 = vadd.f32 %v538, %v1846
        %v1848 = vpop.f32.mrf.mxu0
        %1849 = vmatprep.mubr.bf16.mxu0 0
        %1850 = vmatmul.mubr.bf16.gmra.mxu0 %v1275
        %v1851 = vpop.f32.mrf.mxu0
        %v1852 = vadd.f32 %v538, %v1851
        %v1853 = vpop.f32.mrf.mxu0
        %v1854 = vpop.f32.mrf.mxu0
        %v1855 = vadd.f32 %v538, %v1854
        %v1856 = vpop.f32.mrf.mxu0
        %1857 = vmatprep.mubr.bf16.mxu0 0
        %1858 = vmatmul.mubr.bf16.gmra.mxu0 %v1278
        %v1859 = vpop.f32.mrf.mxu0
        %v1860 = vadd.f32 %v538, %v1859
        %v1861 = vpop.f32.mrf.mxu0
        %v1862 = vpop.f32.mrf.mxu0
        %v1863 = vadd.f32 %v538, %v1862
        %v1864 = vpop.f32.mrf.mxu0
        %1865 = vmatprep.mubr.bf16.mxu0 0
        %1866 = vmatmul.mubr.bf16.gmra.mxu0 %v1281
        %v1867 = vpop.f32.mrf.mxu0
        %v1868 = vadd.f32 %v538, %v1867
        %v1869 = vpop.f32.mrf.mxu0
        %v1870 = vpop.f32.mrf.mxu0
        %v1871 = vadd.f32 %v538, %v1870
        %v1872 = vpop.f32.mrf.mxu0
        %1873 = vmatprep.mubr.bf16.mxu0 0
        %1874 = vmatmul.mubr.bf16.gmra.mxu0 %v1284
        %v1875 = vpop.f32.mrf.mxu0
        %v1876 = vadd.f32 %v538, %v1875
        %v1877 = vpop.f32.mrf.mxu0
        %v1878 = vpop.f32.mrf.mxu0
        %v1879 = vadd.f32 %v538, %v1878
        %v1880 = vpop.f32.mrf.mxu0
        %1881 = vmatprep.mubr.bf16.mxu0 0
        %1882 = vmatmul.mubr.bf16.gmra.mxu0 %v1287
        %v1883 = vpop.f32.mrf.mxu0
        %v1884 = vadd.f32 %v538, %v1883
        %v1885 = vpop.f32.mrf.mxu0
        %v1886 = vpop.f32.mrf.mxu0
        %v1887 = vadd.f32 %v538, %v1886
        %v1888 = vpop.f32.mrf.mxu0
        %1889 = vmatprep.mubr.bf16.mxu0 0
        %1890 = vmatmul.mubr.bf16.gmra.mxu0 %v1290
        %v1891 = vpop.f32.mrf.mxu0
        %v1892 = vadd.f32 %v538, %v1891
        %v1893 = vpop.f32.mrf.mxu0
        %v1894 = vpop.f32.mrf.mxu0
        %v1895 = vadd.f32 %v538, %v1894
        %v1896 = vpop.f32.mrf.mxu0
        %1897 = vmatprep.mubr.bf16.mxu0 0
        %1898 = vmatmul.mubr.bf16.gmra.mxu0 %v1293
        %v1899 = vpop.f32.mrf.mxu0
        %v1900 = vadd.f32 %v538, %v1899
        %v1901 = vpop.f32.mrf.mxu0
        %v1902 = vpop.f32.mrf.mxu0
        %v1903 = vadd.f32 %v538, %v1902
        %v1904 = vpop.f32.mrf.mxu0
        %1905 = vmatprep.mubr.bf16.mxu0 0
        %1906 = vmatmul.mubr.bf16.gmra.mxu0 %v1296
        %v1907 = vpop.f32.mrf.mxu0
        %v1908 = vadd.f32 %v538, %v1907
        %v1909 = vpop.f32.mrf.mxu0
        %v1910 = vpop.f32.mrf.mxu0
        %v1911 = vadd.f32 %v538, %v1910
        %v1912 = vpop.f32.mrf.mxu0
        %1913 = vmatprep.mubr.bf16.mxu0 0
        %1914 = vmatmul.mubr.bf16.gmra.mxu0 %v1299
        %v1915 = vpop.f32.mrf.mxu0
        %v1916 = vadd.f32 %v538, %v1915
        %v1917 = vpop.f32.mrf.mxu0
        %v1918 = vpop.f32.mrf.mxu0
        %v1919 = vadd.f32 %v538, %v1918
        %v1920 = vpop.f32.mrf.mxu0
        %1921 = vmatprep.mubr.bf16.mxu0 0
        %1922 = vmatmul.mubr.bf16.gmra.mxu0 %v1302
        %v1923 = vpop.f32.mrf.mxu0
        %v1924 = vadd.f32 %v538, %v1923
        %v1925 = vpop.f32.mrf.mxu0
        %v1926 = vpop.f32.mrf.mxu0
        %v1927 = vadd.f32 %v538, %v1926
        %v1928 = vpop.f32.mrf.mxu0
        %1929 = vmatprep.mubr.bf16.mxu0 0
        %1930 = vmatmul.mubr.bf16.gmra.mxu0 %v1305
        %v1931 = vpop.f32.mrf.mxu0
        %v1932 = vadd.f32 %v538, %v1931
        %v1933 = vpop.f32.mrf.mxu0
        %v1934 = vpop.f32.mrf.mxu0
        %v1935 = vadd.f32 %v538, %v1934
        %v1936 = vpop.f32.mrf.mxu0
        %1937 = vmatprep.mubr.bf16.mxu0 0
        %1938 = vmatmul.mubr.bf16.gmra.mxu0 %v1308
        %v1939 = vpop.f32.mrf.mxu0
        %v1940 = vadd.f32 %v538, %v1939
        %v1941 = vpop.f32.mrf.mxu0
        %v1942 = vpop.f32.mrf.mxu0
        %v1943 = vadd.f32 %v538, %v1942
        %v1944 = vpop.f32.mrf.mxu0
        %1945 = vmatprep.mubr.bf16.mxu0 0
        %1946 = vmatmul.mubr.bf16.gmra.mxu0 %v1311
        %v1947 = vpop.f32.mrf.mxu0
        %v1948 = vadd.f32 %v538, %v1947
        %v1949 = vpop.f32.mrf.mxu0
        %v1950 = vpop.f32.mrf.mxu0
        %v1951 = vadd.f32 %v538, %v1950
        %v1952 = vpop.f32.mrf.mxu0
        %1953 = vmatprep.mubr.bf16.mxu0 0
        %1954 = vmatmul.mubr.bf16.gmra.mxu0 %v1314
        %v1955 = vpop.f32.mrf.mxu0
        %v1956 = vadd.f32 %v538, %v1955
        %v1957 = vpop.f32.mrf.mxu0
        %v1958 = vpop.f32.mrf.mxu0
        %v1959 = vadd.f32 %v538, %v1958
        %v1960 = vpop.f32.mrf.mxu0
        %1961 = vmatprep.mubr.bf16.mxu0 0
        %1962 = vmatmul.mubr.bf16.gmra.mxu0 %v1317
        %v1963 = vpop.f32.mrf.mxu0
        %v1964 = vadd.f32 %v538, %v1963
        %v1965 = vpop.f32.mrf.mxu0
        %v1966 = vpop.f32.mrf.mxu0
        %v1967 = vadd.f32 %v538, %v1966
        %v1968 = vpop.f32.mrf.mxu0
        %1969 = vmatprep.mubr.bf16.mxu0 0
        %1970 = vmatmul.mubr.bf16.gmra.mxu0 %v1320
        %v1971 = vpop.f32.mrf.mxu0
        %v1972 = vadd.f32 %v538, %v1971
        %v1973 = vpop.f32.mrf.mxu0
        %v1974 = vpop.f32.mrf.mxu0
        %v1975 = vadd.f32 %v538, %v1974
        %v1976 = vpop.f32.mrf.mxu0
        %1977 = vmatprep.mubr.bf16.mxu0 0
        %1978 = vmatmul.mubr.bf16.gmra.mxu0 %v1323
        %v1979 = vpop.f32.mrf.mxu0
        %v1980 = vadd.f32 %v538, %v1979
        %v1981 = vpop.f32.mrf.mxu0
        %v1982 = vpop.f32.mrf.mxu0
        %v1983 = vadd.f32 %v538, %v1982
        %v1984 = vpop.f32.mrf.mxu0
        %1985 = vmatprep.mubr.bf16.mxu0 0
        %1986 = vmatmul.mubr.bf16.gmra.mxu0 %v1326
        %v1987 = vpop.f32.mrf.mxu0
        %v1988 = vadd.f32 %v538, %v1987
        %v1989 = vpop.f32.mrf.mxu0
        %v1990 = vpop.f32.mrf.mxu0
        %v1991 = vadd.f32 %v538, %v1990
        %v1992 = vpop.f32.mrf.mxu0
        %1993 = vmatprep.mubr.bf16.mxu0 0
        %1994 = vmatmul.mubr.bf16.gmra.mxu0 %v1329
        %v1995 = vpop.f32.mrf.mxu0
        %v1996 = vadd.f32 %v538, %v1995
        %v1997 = vpop.f32.mrf.mxu0
        %v1998 = vpop.f32.mrf.mxu0
        %v1999 = vadd.f32 %v538, %v1998
        %v2000 = vpop.f32.mrf.mxu0
        %2001 = vmatprep.mubr.bf16.mxu0 0
        %2002 = vmatmul.mubr.bf16.gmra.mxu0 %v1332
        %v2003 = vpop.f32.mrf.mxu0
        %v2004 = vadd.f32 %v538, %v2003
        %v2005 = vpop.f32.mrf.mxu0
        %v2006 = vpop.f32.mrf.mxu0
        %v2007 = vadd.f32 %v538, %v2006
        %v2008 = vpop.f32.mrf.mxu0
        %2009 = vmatprep.mubr.bf16.mxu0 0
        %2010 = vmatmul.mubr.bf16.gmra.mxu0 %v1335
        %v2011 = vpop.f32.mrf.mxu0
        %v2012 = vadd.f32 %v538, %v2011
        %v2013 = vpop.f32.mrf.mxu0
        %v2014 = vpop.f32.mrf.mxu0
        %v2015 = vadd.f32 %v538, %v2014
        %v2016 = vpop.f32.mrf.mxu0
        %2017 = vmatprep.mubr.bf16.mxu0 0
        %2018 = vmatmul.mubr.bf16.gmra.mxu0 %v1338
        %v2019 = vpop.f32.mrf.mxu0
        %v2020 = vadd.f32 %v538, %v2019
        %v2021 = vpop.f32.mrf.mxu0
        %v2022 = vpop.f32.mrf.mxu0
        %v2023 = vadd.f32 %v538, %v2022
        %v2024 = vpop.f32.mrf.mxu0
        %2025 = vmatprep.mubr.bf16.mxu0 0
        %2026 = vmatmul.mubr.bf16.gmra.mxu0 %v1341
        %v2027 = vpop.f32.mrf.mxu0
        %v2028 = vadd.f32 %v538, %v2027
        %v2029 = vpop.f32.mrf.mxu0
        %v2030 = vpop.f32.mrf.mxu0
        %v2031 = vadd.f32 %v538, %v2030
        %v2032 = vpop.f32.mrf.mxu0
        %2033 = vmatprep.mubr.bf16.mxu0 0
        %2034 = vmatmul.mubr.bf16.gmra.mxu0 %v1344
        %v2035 = vpop.f32.mrf.mxu0
        %v2036 = vadd.f32 %v538, %v2035
        %v2037 = vpop.f32.mrf.mxu0
        %v2038 = vpop.f32.mrf.mxu0
        %v2039 = vadd.f32 %v538, %v2038
        %v2040 = vpop.f32.mrf.mxu0
        %2041 = vmatprep.mubr.bf16.mxu0 0
        %2042 = vmatmul.mubr.bf16.gmra.mxu0 %v1347
        %v2043 = vpop.f32.mrf.mxu0
        %v2044 = vadd.f32 %v538, %v2043
        %v2045 = vpop.f32.mrf.mxu0
        %v2046 = vpop.f32.mrf.mxu0
        %v2047 = vadd.f32 %v538, %v2046
        %v2048 = vpop.f32.mrf.mxu0
        %2049 = vmatprep.mubr.bf16.mxu0 0
        %2050 = vmatmul.mubr.bf16.gmra.mxu0 %v1350
        %v2051 = vpop.f32.mrf.mxu0
        %v2052 = vadd.f32 %v538, %v2051
        %v2053 = vpop.f32.mrf.mxu0
        %v2054 = vpop.f32.mrf.mxu0
        %v2055 = vadd.f32 %v538, %v2054
        %v2056 = vpop.f32.mrf.mxu0
        %2057 = vmatprep.mubr.bf16.mxu0 0
        %2058 = vmatmul.mubr.bf16.gmra.mxu0 %v1353
        %v2059 = vpop.f32.mrf.mxu0
        %v2060 = vadd.f32 %v538, %v2059
        %v2061 = vpop.f32.mrf.mxu0
        %v2062 = vpop.f32.mrf.mxu0
        %v2063 = vadd.f32 %v538, %v2062
        %v2064 = vpop.f32.mrf.mxu0
        %2065 = vmatprep.mubr.bf16.mxu0 0
        %2066 = vmatmul.mubr.bf16.gmra.mxu0 %v1356
        %v2067 = vpop.f32.mrf.mxu0
        %v2068 = vadd.f32 %v538, %v2067
        %v2069 = vpop.f32.mrf.mxu0
        %v2070 = vpop.f32.mrf.mxu0
        %v2071 = vadd.f32 %v538, %v2070
        %v2072 = vpop.f32.mrf.mxu0
        %2073 = vmatprep.mubr.bf16.mxu0 0
        %2074 = vmatmul.mubr.bf16.gmra.mxu0 %v1359
        %v2075 = vpop.f32.mrf.mxu0
        %v2076 = vadd.f32 %v538, %v2075
        %v2077 = vpop.f32.mrf.mxu0
        %v2078 = vpop.f32.mrf.mxu0
        %v2079 = vadd.f32 %v538, %v2078
        %v2080 = vpop.f32.mrf.mxu0
        %2081 = vmatprep.mubr.bf16.mxu0 0
        %2082 = vmatmul.mubr.bf16.gmra.mxu0 %v1362
        %v2083 = vpop.f32.mrf.mxu0
        %v2084 = vadd.f32 %v538, %v2083
        %v2085 = vpop.f32.mrf.mxu0
        %v2086 = vpop.f32.mrf.mxu0
        %v2087 = vadd.f32 %v538, %v2086
        %v2088 = vpop.f32.mrf.mxu0
        %2089 = vmatprep.mubr.bf16.mxu0 0
        %2090 = vmatmul.mubr.bf16.gmra.mxu0 %v1365
        %v2091 = vpop.f32.mrf.mxu0
        %v2092 = vadd.f32 %v538, %v2091
        %v2093 = vpop.f32.mrf.mxu0
        %v2094 = vpop.f32.mrf.mxu0
        %v2095 = vadd.f32 %v538, %v2094
        %v2096 = vpop.f32.mrf.mxu0
        %2097 = vmatprep.mubr.bf16.mxu0 0
        %2098 = vmatmul.mubr.bf16.gmra.mxu0 %v1368
        %v2099 = vpop.f32.mrf.mxu0
        %v2100 = vadd.f32 %v538, %v2099
        %v2101 = vpop.f32.mrf.mxu0
        %v2102 = vpop.f32.mrf.mxu0
        %v2103 = vadd.f32 %v538, %v2102
        %v2104 = vpop.f32.mrf.mxu0
        %2105 = vmatprep.mubr.bf16.mxu0 0
        %2106 = vmatmul.mubr.bf16.gmra.mxu0 %v1371
        %v2107 = vpop.f32.mrf.mxu0
        %v2108 = vadd.f32 %v538, %v2107
        %v2109 = vpop.f32.mrf.mxu0
        %v2110 = vpop.f32.mrf.mxu0
        %v2111 = vadd.f32 %v538, %v2110
        %v2112 = vpop.f32.mrf.mxu0
        %2113 = vmatprep.mubr.bf16.mxu0 0
        %2114 = vmatmul.mubr.bf16.gmra.mxu0 %v1374
        %v2115 = vpop.f32.mrf.mxu0
        %v2116 = vadd.f32 %v538, %v2115
        %v2117 = vpop.f32.mrf.mxu0
        %v2118 = vpop.f32.mrf.mxu0
        %v2119 = vadd.f32 %v538, %v2118
        %v2120 = vpop.f32.mrf.mxu0
        %2121 = vmatprep.mubr.bf16.mxu0 0
        %2122 = vmatmul.mubr.bf16.gmra.mxu0 %v1377
        %v2123 = vpop.f32.mrf.mxu0
        %v2124 = vadd.f32 %v538, %v2123
        %v2125 = vpop.f32.mrf.mxu0
        %v2126 = vpop.f32.mrf.mxu0
        %v2127 = vadd.f32 %v538, %v2126
        %v2128 = vpop.f32.mrf.mxu0
        %2129 = vmatprep.mubr.bf16.mxu0 0
        %2130 = vmatmul.mubr.bf16.gmra.mxu0 %v1380
        %v2131 = vpop.f32.mrf.mxu0
        %v2132 = vadd.f32 %v538, %v2131
        %v2133 = vpop.f32.mrf.mxu0
        %v2134 = vpop.f32.mrf.mxu0
        %v2135 = vadd.f32 %v538, %v2134
        %v2136 = vpop.f32.mrf.mxu0
        %2137 = vmatprep.mubr.bf16.mxu0 0
        %2138 = vmatmul.mubr.bf16.gmra.mxu0 %v1383
        %v2139 = vpop.f32.mrf.mxu0
        %v2140 = vadd.f32 %v538, %v2139
        %v2141 = vpop.f32.mrf.mxu0
        %v2142 = vpop.f32.mrf.mxu0
        %v2143 = vadd.f32 %v538, %v2142
        %v2144 = vpop.f32.mrf.mxu0
        %2145 = vmatprep.mubr.bf16.mxu0 0
        %2146 = vmatmul.mubr.bf16.gmra.mxu0 %v1386
        %v2147 = vpop.f32.mrf.mxu0
        %v2148 = vadd.f32 %v538, %v2147
        %v2149 = vpop.f32.mrf.mxu0
        %v2150 = vpop.f32.mrf.mxu0
        %v2151 = vadd.f32 %v538, %v2150
        %v2152 = vpop.f32.mrf.mxu0
        %2153 = vmatprep.mubr.bf16.mxu0 0
        %2154 = vmatmul.mubr.bf16.gmra.mxu0 %v1389
        %v2155 = vpop.f32.mrf.mxu0
        %v2156 = vadd.f32 %v538, %v2155
        %v2157 = vpop.f32.mrf.mxu0
        %v2158 = vpop.f32.mrf.mxu0
        %v2159 = vadd.f32 %v538, %v2158
        %v2160 = vpop.f32.mrf.mxu0
        %2161 = vmatprep.mubr.bf16.mxu0 0
        %2162 = vmatmul.mubr.bf16.gmra.mxu0 %v1392
        %v2163 = vpop.f32.mrf.mxu0
        %v2164 = vadd.f32 %v538, %v2163
        %v2165 = vpop.f32.mrf.mxu0
        %v2166 = vpop.f32.mrf.mxu0
        %v2167 = vadd.f32 %v538, %v2166
        %v2168 = vpop.f32.mrf.mxu0
        %2169 = vmatprep.mubr.bf16.mxu0 0
        %2170 = vmatmul.mubr.bf16.gmra.mxu0 %v1395
        %v2171 = vpop.f32.mrf.mxu0
        %v2172 = vadd.f32 %v538, %v2171
        %v2173 = vpop.f32.mrf.mxu0
        %v2174 = vpop.f32.mrf.mxu0
        %v2175 = vadd.f32 %v538, %v2174
        %v2176 = vpop.f32.mrf.mxu0
        %2177 = vmatprep.mubr.bf16.mxu0 0
        %2178 = vmatmul.mubr.bf16.gmra.mxu0 %v1398
        %v2179 = vpop.f32.mrf.mxu0
        %v2180 = vadd.f32 %v538, %v2179
        %v2181 = vpop.f32.mrf.mxu0
        %v2182 = vpop.f32.mrf.mxu0
        %v2183 = vadd.f32 %v538, %v2182
        %v2184 = vpop.f32.mrf.mxu0
        %2185 = vmatprep.mubr.bf16.mxu0 0
        %2186 = vmatmul.mubr.bf16.gmra.mxu0 %v1401
        %v2187 = vpop.f32.mrf.mxu0
        %v2188 = vadd.f32 %v538, %v2187
        %v2189 = vpop.f32.mrf.mxu0
        %v2190 = vpop.f32.mrf.mxu0
        %v2191 = vadd.f32 %v538, %v2190
        %v2192 = vpop.f32.mrf.mxu0
        %2193 = vmatprep.mubr.bf16.mxu0 0
        %2194 = vmatmul.mubr.bf16.gmra.mxu0 %v1404
        %v2195 = vpop.f32.mrf.mxu0
        %v2196 = vadd.f32 %v538, %v2195
        %v2197 = vpop.f32.mrf.mxu0
        %v2198 = vpop.f32.mrf.mxu0
        %v2199 = vadd.f32 %v538, %v2198
        %v2200 = vpop.f32.mrf.mxu0
        %2201 = vmatprep.mubr.bf16.mxu0 0
        %2202 = vmatmul.mubr.bf16.gmra.mxu0 %v1407
        %v2203 = vpop.f32.mrf.mxu0
        %v2204 = vadd.f32 %v538, %v2203
        %v2205 = vpop.f32.mrf.mxu0
        %v2206 = vpop.f32.mrf.mxu0
        %v2207 = vadd.f32 %v538, %v2206
        %v2208 = vpop.f32.mrf.mxu0
        %2209 = vmatprep.mubr.bf16.mxu0 0
        %2210 = vmatmul.mubr.bf16.gmra.mxu0 %v1410
        %v2211 = vpop.f32.mrf.mxu0
        %v2212 = vadd.f32 %v538, %v2211
        %v2213 = vpop.f32.mrf.mxu0
        %v2214 = vpop.f32.mrf.mxu0
        %v2215 = vadd.f32 %v538, %v2214
        %v2216 = vpop.f32.mrf.mxu0
        %2217 = vmatprep.mubr.bf16.mxu0 0
        %2218 = vmatmul.mubr.bf16.gmra.mxu0 %v1413
        %v2219 = vpop.f32.mrf.mxu0
        %v2220 = vadd.f32 %v538, %v2219
        %v2221 = vpop.f32.mrf.mxu0
        %v2222 = vpop.f32.mrf.mxu0
        %v2223 = vadd.f32 %v538, %v2222
        %v2224 = vpop.f32.mrf.mxu0
        %2225 = vmatprep.mubr.bf16.mxu0 0
        %2226 = vmatmul.mubr.bf16.gmra.mxu0 %v1416
        %v2227 = vpop.f32.mrf.mxu0
        %v2228 = vadd.f32 %v538, %v2227
        %v2229 = vpop.f32.mrf.mxu0
        %v2230 = vpop.f32.mrf.mxu0
        %v2231 = vadd.f32 %v538, %v2230
        %v2232 = vpop.f32.mrf.mxu0
        %2233 = vmatprep.mubr.bf16.mxu0 0
        %2234 = vmatmul.mubr.bf16.gmra.mxu0 %v1419
        %v2235 = vpop.f32.mrf.mxu0
        %v2236 = vadd.f32 %v538, %v2235
        %v2237 = vpop.f32.mrf.mxu0
        %v2238 = vpop.f32.mrf.mxu0
        %v2239 = vadd.f32 %v538, %v2238
        %v2240 = vpop.f32.mrf.mxu0
        %2241 = vmatprep.mubr.bf16.mxu0 0
        %2242 = vmatmul.mubr.bf16.gmra.mxu0 %v1422
        %v2243 = vpop.f32.mrf.mxu0
        %v2244 = vadd.f32 %v538, %v2243
        %v2245 = vpop.f32.mrf.mxu0
        %v2246 = vpop.f32.mrf.mxu0
        %v2247 = vadd.f32 %v538, %v2246
        %v2248 = vpop.f32.mrf.mxu0
        %2249 = vmatprep.mubr.bf16.mxu0 0
        %2250 = vmatmul.mubr.bf16.gmra.mxu0 %v1425
        %v2251 = vpop.f32.mrf.mxu0
        %v2252 = vadd.f32 %v538, %v2251
        %v2253 = vpop.f32.mrf.mxu0
        %v2254 = vpop.f32.mrf.mxu0
        %v2255 = vadd.f32 %v538, %v2254
        %v2256 = vpop.f32.mrf.mxu0
        %2257 = vmatprep.mubr.bf16.mxu0 0
        %2258 = vmatmul.mubr.bf16.gmra.mxu0 %v1428
        %v2259 = vpop.f32.mrf.mxu0
        %v2260 = vadd.f32 %v538, %v2259
        %v2261 = vpop.f32.mrf.mxu0
        %v2262 = vpop.f32.mrf.mxu0
        %v2263 = vadd.f32 %v538, %v2262
        %v2264 = vpop.f32.mrf.mxu0
        %2265 = vmatprep.mubr.bf16.mxu0 0
        %2266 = vmatmul.mubr.bf16.gmra.mxu0 %v1431
        %v2267 = vpop.f32.mrf.mxu0
        %v2268 = vadd.f32 %v538, %v2267
        %v2269 = vpop.f32.mrf.mxu0
        %v2270 = vpop.f32.mrf.mxu0
        %v2271 = vadd.f32 %v538, %v2270
        %v2272 = vpop.f32.mrf.mxu0
        %2273 = vmatprep.mubr.bf16.mxu0 0
        %2274 = vmatmul.mubr.bf16.gmra.mxu0 %v1434
        %v2275 = vpop.f32.mrf.mxu0
        %v2276 = vadd.f32 %v538, %v2275
        %v2277 = vpop.f32.mrf.mxu0
        %v2278 = vpop.f32.mrf.mxu0
        %v2279 = vadd.f32 %v538, %v2278
        %v2280 = vpop.f32.mrf.mxu0
        %2281 = vmatprep.mubr.bf16.mxu0 0
        %2282 = vmatmul.mubr.bf16.gmra.mxu0 %v1437
        %v2283 = vpop.f32.mrf.mxu0
        %v2284 = vadd.f32 %v538, %v2283
        %v2285 = vpop.f32.mrf.mxu0
        %v2286 = vpop.f32.mrf.mxu0
        %v2287 = vadd.f32 %v538, %v2286
        %v2288 = vpop.f32.mrf.mxu0
        %2289 = vmatprep.mubr.bf16.mxu0 0
        %2290 = vmatmul.mubr.bf16.gmra.mxu0 %v1440
        %v2291 = vpop.f32.mrf.mxu0
        %v2292 = vadd.f32 %v538, %v2291
        %v2293 = vpop.f32.mrf.mxu0
        %v2294 = vpop.f32.mrf.mxu0
        %v2295 = vadd.f32 %v538, %v2294
        %v2296 = vpop.f32.mrf.mxu0
        %2297 = vmatprep.mubr.bf16.mxu0 0
        %2298 = vmatmul.mubr.bf16.gmra.mxu0 %v1443
        %v2299 = vpop.f32.mrf.mxu0
        %v2300 = vadd.f32 %v538, %v2299
        %v2301 = vpop.f32.mrf.mxu0
        %v2302 = vpop.f32.mrf.mxu0
        %v2303 = vadd.f32 %v538, %v2302
        %v2304 = vpop.f32.mrf.mxu0
        %2305 = vmatprep.mubr.bf16.mxu0 0
        %2306 = vmatmul.mubr.bf16.gmra.mxu0 %v1446
        %v2307 = vpop.f32.mrf.mxu0
        %v2308 = vadd.f32 %v538, %v2307
        %v2309 = vpop.f32.mrf.mxu0
        %v2310 = vpop.f32.mrf.mxu0
        %v2311 = vadd.f32 %v538, %v2310
        %v2312 = vpop.f32.mrf.mxu0
        %2313 = vmatprep.mubr.bf16.mxu0 0
        %2314 = vmatmul.mubr.bf16.gmra.mxu0 %v1449
        %v2315 = vpop.f32.mrf.mxu0
        %v2316 = vadd.f32 %v538, %v2315
        %v2317 = vpop.f32.mrf.mxu0
        %v2318 = vpop.f32.mrf.mxu0
        %v2319 = vadd.f32 %v538, %v2318
        %v2320 = vpop.f32.mrf.mxu0
        %2321 = vmatprep.mubr.bf16.mxu0 0
        %2322 = vmatmul.mubr.bf16.gmra.mxu0 %v1452
        %v2323 = vpop.f32.mrf.mxu0
        %v2324 = vadd.f32 %v538, %v2323
        %v2325 = vpop.f32.mrf.mxu0
        %v2326 = vpop.f32.mrf.mxu0
        %v2327 = vadd.f32 %v538, %v2326
        %v2328 = vpop.f32.mrf.mxu0
        %2329 = vmatprep.mubr.bf16.mxu0 0
        %2330 = vmatmul.mubr.bf16.gmra.mxu0 %v1455
        %v2331 = vpop.f32.mrf.mxu0
        %v2332 = vadd.f32 %v538, %v2331
        %v2333 = vpop.f32.mrf.mxu0
        %v2334 = vpop.f32.mrf.mxu0
        %v2335 = vadd.f32 %v538, %v2334
        %v2336 = vpop.f32.mrf.mxu0
        %2337 = vmatprep.mubr.bf16.mxu0 0
        %2338 = vmatmul.mubr.bf16.gmra.mxu0 %v1458
        %v2339 = vpop.f32.mrf.mxu0
        %v2340 = vadd.f32 %v538, %v2339
        %v2341 = vpop.f32.mrf.mxu0
        %v2342 = vpop.f32.mrf.mxu0
        %v2343 = vadd.f32 %v538, %v2342
        %v2344 = vpop.f32.mrf.mxu0
        %2345 = vmatprep.mubr.bf16.mxu0 0
        %2346 = vmatmul.mubr.bf16.gmra.mxu0 %v1461
        %v2347 = vpop.f32.mrf.mxu0
        %v2348 = vadd.f32 %v538, %v2347
        %v2349 = vpop.f32.mrf.mxu0
        %v2350 = vpop.f32.mrf.mxu0
        %v2351 = vadd.f32 %v538, %v2350
        %v2352 = vpop.f32.mrf.mxu0
        %2353 = vmatprep.mubr.bf16.mxu0 0
        %2354 = vmatmul.mubr.bf16.gmra.mxu0 %v1464
        %v2355 = vpop.f32.mrf.mxu0
        %v2356 = vadd.f32 %v538, %v2355
        %v2357 = vpop.f32.mrf.mxu0
        %v2358 = vpop.f32.mrf.mxu0
        %v2359 = vadd.f32 %v538, %v2358
        %v2360 = vpop.f32.mrf.mxu0
        %2361 = vmatprep.mubr.bf16.mxu0 0
        %2362 = vmatmul.mubr.bf16.gmra.mxu0 %v1467
        %v2363 = vpop.f32.mrf.mxu0
        %v2364 = vadd.f32 %v538, %v2363
        %v2365 = vpop.f32.mrf.mxu0
        %v2366 = vpop.f32.mrf.mxu0
        %v2367 = vadd.f32 %v538, %v2366
        %v2368 = vpop.f32.mrf.mxu0
        %2369 = vmatprep.mubr.bf16.mxu0 0
        %2370 = vmatmul.mubr.bf16.gmra.mxu0 %v1470
        %v2371 = vpop.f32.mrf.mxu0
        %v2372 = vadd.f32 %v538, %v2371
        %v2373 = vpop.f32.mrf.mxu0
        %v2374 = vpop.f32.mrf.mxu0
        %v2375 = vadd.f32 %v538, %v2374
        %v2376 = vpop.f32.mrf.mxu0
        %2377 = vmatprep.mubr.bf16.mxu0 0
        %2378 = vmatmul.mubr.bf16.gmra.mxu0 %v1473
        %v2379 = vpop.f32.mrf.mxu0
        %v2380 = vadd.f32 %v538, %v2379
        %v2381 = vpop.f32.mrf.mxu0
        %v2382 = vpop.f32.mrf.mxu0
        %v2383 = vadd.f32 %v538, %v2382
        %v2384 = vpop.f32.mrf.mxu0
        %2385 = vmatprep.mubr.bf16.mxu0 0
        %2386 = vmatmul.mubr.bf16.gmra.mxu0 %v1476
        %v2387 = vpop.f32.mrf.mxu0
        %v2388 = vadd.f32 %v538, %v2387
        %v2389 = vpop.f32.mrf.mxu0
        %v2390 = vpop.f32.mrf.mxu0
        %v2391 = vadd.f32 %v538, %v2390
        %v2392 = vpop.f32.mrf.mxu0
        %2393 = vmatprep.mubr.bf16.mxu0 0
        %2394 = vmatmul.mubr.bf16.gmra.mxu0 %v1479
        %v2395 = vpop.f32.mrf.mxu0
        %v2396 = vadd.f32 %v538, %v2395
        %v2397 = vpop.f32.mrf.mxu0
        %v2398 = vpop.f32.mrf.mxu0
        %v2399 = vadd.f32 %v538, %v2398
        %v2400 = vpop.f32.mrf.mxu0
        %2401 = vmatprep.mubr.bf16.mxu0 0
        %2402 = vmatmul.mubr.bf16.gmra.mxu0 %v1482
        %v2403 = vpop.f32.mrf.mxu0
        %v2404 = vadd.f32 %v538, %v2403
        %v2405 = vpop.f32.mrf.mxu0
        %v2406 = vpop.f32.mrf.mxu0
        %v2407 = vadd.f32 %v538, %v2406
        %v2408 = vpop.f32.mrf.mxu0
        %2409 = vmatprep.mubr.bf16.mxu0 0
        %2410 = vmatmul.mubr.bf16.gmra.mxu0 %v1485
        %v2411 = vpop.f32.mrf.mxu0
        %v2412 = vadd.f32 %v538, %v2411
        %v2413 = vpop.f32.mrf.mxu0
        %v2414 = vpop.f32.mrf.mxu0
        %v2415 = vadd.f32 %v538, %v2414
        %v2416 = vpop.f32.mrf.mxu0
        %2417 = vmatprep.mubr.bf16.mxu0 0
        %2418 = vmatmul.mubr.bf16.gmra.mxu0 %v1488
        %v2419 = vpop.f32.mrf.mxu0
        %v2420 = vadd.f32 %v538, %v2419
        %v2421 = vpop.f32.mrf.mxu0
        %v2422 = vpop.f32.mrf.mxu0
        %v2423 = vadd.f32 %v538, %v2422
        %v2424 = vpop.f32.mrf.mxu0
        %2425 = vmatprep.mubr.bf16.mxu0 0
        %2426 = vmatmul.mubr.bf16.gmra.mxu0 %v1491
        %v2427 = vpop.f32.mrf.mxu0
        %v2428 = vadd.f32 %v538, %v2427
        %v2429 = vpop.f32.mrf.mxu0
        %v2430 = vpop.f32.mrf.mxu0
        %v2431 = vadd.f32 %v538, %v2430
        %v2432 = vpop.f32.mrf.mxu0
        %2433 = vmatprep.mubr.bf16.mxu0 0
        %2434 = vmatmul.mubr.bf16.gmra.mxu0 %v1494
        %v2435 = vpop.f32.mrf.mxu0
        %v2436 = vadd.f32 %v538, %v2435
        %v2437 = vpop.f32.mrf.mxu0
        %v2438 = vpop.f32.mrf.mxu0
        %v2439 = vadd.f32 %v538, %v2438
        %v2440 = vpop.f32.mrf.mxu0
        %2441 = vmatprep.mubr.bf16.mxu0 0
        %2442 = vmatmul.mubr.bf16.gmra.mxu0 %v1497
        %v2443 = vpop.f32.mrf.mxu0
        %v2444 = vadd.f32 %v538, %v2443
        %v2445 = vpop.f32.mrf.mxu0
        %v2446 = vpop.f32.mrf.mxu0
        %v2447 = vadd.f32 %v538, %v2446
        %v2448 = vpop.f32.mrf.mxu0
        %2449 = vmatprep.mubr.bf16.mxu0 0
        %2450 = vmatmul.mubr.bf16.gmra.mxu0 %v1500
        %v2451 = vpop.f32.mrf.mxu0
        %v2452 = vadd.f32 %v538, %v2451
        %v2453 = vpop.f32.mrf.mxu0
        %v2454 = vpop.f32.mrf.mxu0
        %v2455 = vadd.f32 %v538, %v2454
        %v2456 = vpop.f32.mrf.mxu0
        %2457 = vmatprep.mubr.bf16.mxu0 0
        %2458 = vmatmul.mubr.bf16.gmra.mxu0 %v1503
        %v2459 = vpop.f32.mrf.mxu0
        %v2460 = vadd.f32 %v538, %v2459
        %v2461 = vpop.f32.mrf.mxu0
        %v2462 = vpop.f32.mrf.mxu0
        %v2463 = vadd.f32 %v538, %v2462
        %v2464 = vpop.f32.mrf.mxu0
        %2465 = vmatprep.mubr.bf16.mxu0 0
        %2466 = vmatmul.mubr.bf16.gmra.mxu0 %v1506
        %v2467 = vpop.f32.mrf.mxu0
        %v2468 = vadd.f32 %v538, %v2467
        %v2469 = vpop.f32.mrf.mxu0
        %v2470 = vpop.f32.mrf.mxu0
        %v2471 = vadd.f32 %v538, %v2470
        %v2472 = vpop.f32.mrf.mxu0
        %2473 = vmatprep.mubr.bf16.mxu0 0
        %2474 = vmatmul.mubr.bf16.gmra.mxu0 %v1509
        %v2475 = vpop.f32.mrf.mxu0
        %v2476 = vadd.f32 %v538, %v2475
        %v2477 = vpop.f32.mrf.mxu0
        %v2478 = vpop.f32.mrf.mxu0
        %v2479 = vadd.f32 %v538, %v2478
        %v2480 = vpop.f32.mrf.mxu0
        %2481 = vmatprep.mubr.bf16.mxu0 0
        %2482 = vmatmul.mubr.bf16.gmra.mxu0 %v1512
        %v2483 = vpop.f32.mrf.mxu0
        %v2484 = vadd.f32 %v538, %v2483
        %v2485 = vpop.f32.mrf.mxu0
        %v2486 = vpop.f32.mrf.mxu0
        %v2487 = vadd.f32 %v538, %v2486
        %v2488 = vpop.f32.mrf.mxu0
        %2489 = vmatprep.mubr.bf16.mxu0 0
        %2490 = vmatmul.mubr.bf16.gmra.mxu0 %v1515
        %v2491 = vpop.f32.mrf.mxu0
        %v2492 = vadd.f32 %v538, %v2491
        %v2493 = vpop.f32.mrf.mxu0
        %v2494 = vpop.f32.mrf.mxu0
        %v2495 = vadd.f32 %v538, %v2494
        %v2496 = vpop.f32.mrf.mxu0
        %2497 = vmatprep.mubr.bf16.mxu0 0
        %2498 = vmatmul.mubr.bf16.gmra.mxu0 %v1518
        %v2499 = vpop.f32.mrf.mxu0
        %v2500 = vadd.f32 %v538, %v2499
        %v2501 = vpop.f32.mrf.mxu0
        %v2502 = vpop.f32.mrf.mxu0
        %v2503 = vadd.f32 %v538, %v2502
        %v2504 = vpop.f32.mrf.mxu0
        %2505 = vmatprep.mubr.bf16.mxu0 0
        %2506 = vmatmul.mubr.bf16.gmra.mxu0 %v1521
        %v2507 = vpop.f32.mrf.mxu0
        %v2508 = vadd.f32 %v538, %v2507
        %v2509 = vpop.f32.mrf.mxu0
        %v2510 = vpop.f32.mrf.mxu0
        %v2511 = vadd.f32 %v538, %v2510
        %v2512 = vpop.f32.mrf.mxu0
        %2513 = vmatprep.mubr.bf16.mxu0 0
        %2514 = vmatmul.mubr.bf16.gmra.mxu0 %v1524
        %v2515 = vpop.f32.mrf.mxu0
        %v2516 = vadd.f32 %v538, %v2515
        %v2517 = vpop.f32.mrf.mxu0
        %v2518 = vpop.f32.mrf.mxu0
        %v2519 = vadd.f32 %v538, %v2518
        %v2520 = vpop.f32.mrf.mxu0
        %2521 = vmatprep.mubr.bf16.mxu0 0
        %2522 = vmatmul.mubr.bf16.gmra.mxu0 %v1527
        %v2523 = vpop.f32.mrf.mxu0
        %v2524 = vadd.f32 %v538, %v2523
        %v2525 = vpop.f32.mrf.mxu0
        %v2526 = vpop.f32.mrf.mxu0
        %v2527 = vadd.f32 %v538, %v2526
        %v2528 = vpop.f32.mrf.mxu0
        %2529 = vmatprep.mubr.bf16.mxu0 0
        %2530 = vmatmul.mubr.bf16.gmra.mxu0 %v1530
        %v2531 = vpop.f32.mrf.mxu0
        %v2532 = vadd.f32 %v538, %v2531
        %v2533 = vpop.f32.mrf.mxu0
        %v2534 = vpop.f32.mrf.mxu0
        %v2535 = vadd.f32 %v538, %v2534
        %v2536 = vpop.f32.mrf.mxu0
        %2537 = vmatprep.mubr.bf16.mxu0 0
        %2538 = vmatmul.mubr.bf16.gmra.mxu0 %v1533
        %v2539 = vpop.f32.mrf.mxu0
        %v2540 = vadd.f32 %v538, %v2539
        %v2541 = vpop.f32.mrf.mxu0
        %v2542 = vpop.f32.mrf.mxu0
        %v2543 = vadd.f32 %v538, %v2542
        %v2544 = vpop.f32.mrf.mxu0
        %2545 = vmatprep.mubr.bf16.mxu0 0
        %2546 = vmatmul.mubr.bf16.gmra.mxu0 %v1536
        %v2547 = vpop.f32.mrf.mxu0
        %v2548 = vadd.f32 %v538, %v2547
        %v2549 = vpop.f32.mrf.mxu0
        %v2550 = vpop.f32.mrf.mxu0
        %v2551 = vadd.f32 %v538, %v2550
        %v2552 = vpop.f32.mrf.mxu0
        %2553 = vmatprep.mubr.bf16.mxu0 0
        %2554 = vmatmul.mubr.bf16.gmra.mxu0 %v1539
        %v2555 = vpop.f32.mrf.mxu0
        %v2556 = vadd.f32 %v538, %v2555
        %v2557 = vpop.f32.mrf.mxu0
        %v2558 = vpop.f32.mrf.mxu0
        %v2559 = vadd.f32 %v538, %v2558
        %v2560 = vpop.f32.mrf.mxu0
        %2561 = vmatprep.mubr.bf16.mxu0 0
        %2562 = vmatmul.mubr.bf16.gmra.mxu0 %v1542
        %v2563 = vpop.f32.mrf.mxu0
        %v2564 = vadd.f32 %v538, %v2563
        %v2565 = vpop.f32.mrf.mxu0
        %v2566 = vpop.f32.mrf.mxu0
        %v2567 = vadd.f32 %v538, %v2566
        %v2568 = vpop.f32.mrf.mxu0
        %2569 = vmatprep.mubr.bf16.mxu0 0
        %2570 = vmatmul.mubr.bf16.gmra.mxu0 %v1545
        %v2571 = vpop.f32.mrf.mxu0
        %v2572 = vadd.f32 %v538, %v2571
        %v2573 = vpop.f32.mrf.mxu0
        %v2574 = vpop.f32.mrf.mxu0
        %v2575 = vadd.f32 %v538, %v2574
        %v2576 = vpop.f32.mrf.mxu0
        %2577 = vmatprep.mubr.bf16.mxu0 0
        %2578 = vmatmul.mubr.bf16.gmra.mxu0 %v1548
        %v2579 = vpop.f32.mrf.mxu0
        %v2580 = vadd.f32 %v538, %v2579
        %v2581 = vpop.f32.mrf.mxu0
        %v2582 = vpop.f32.mrf.mxu0
        %v2583 = vadd.f32 %v538, %v2582
        %v2584 = vpop.f32.mrf.mxu0
        %2585 = vmatprep.mubr.bf16.mxu0 0
        %2586 = vmatmul.mubr.bf16.gmra.mxu0 %v1551
        %v2587 = vpop.f32.mrf.mxu0
        %v2588 = vadd.f32 %v538, %v2587
        %v2589 = vpop.f32.mrf.mxu0
        %v2590 = vpop.f32.mrf.mxu0
        %v2591 = vadd.f32 %v538, %v2590
        %v2592 = vpop.f32.mrf.mxu0
        %2593 = vmatprep.mubr.bf16.mxu0 0
        %2594 = vmatmul.mubr.bf16.gmra.mxu0 %v1554
        %v2595 = vpop.f32.mrf.mxu0
        %v2596 = vadd.f32 %v538, %v2595
        %v2597 = vpop.f32.mrf.mxu0
        %v2598 = vpop.f32.mrf.mxu0
        %v2599 = vadd.f32 %v538, %v2598
        %v2600 = vpop.f32.mrf.mxu0
        %2601 = vmatprep.mubr.bf16.mxu0 0
        %2602 = vmatmul.mubr.bf16.gmra.mxu0 %v1557
        %v2603 = vpop.f32.mrf.mxu0
        %v2604 = vadd.f32 %v538, %v2603
        %v2605 = vpop.f32.mrf.mxu0
        %v2606 = vpop.f32.mrf.mxu0
        %v2607 = vadd.f32 %v538, %v2606
        %v2608 = vpop.f32.mrf.mxu0
        %2609 = vmatprep.mubr.bf16.mxu0 0
        %2610 = vmatmul.mubr.bf16.gmra.mxu0 %v1560
        %v2611 = vpop.f32.mrf.mxu0
        %v2612 = vadd.f32 %v538, %v2611
        %v2613 = vpop.f32.mrf.mxu0
        %v2614 = vpop.f32.mrf.mxu0
        %v2615 = vadd.f32 %v538, %v2614
        %v2616 = vpop.f32.mrf.mxu0
        %2617 = vmatprep.mubr.bf16.mxu0 0
        %2618 = vmatmul.mubr.bf16.gmra.mxu0 %v1563
        %v2619 = vpop.f32.mrf.mxu0
        %v2620 = vadd.f32 %v538, %v2619
        %v2621 = vpop.f32.mrf.mxu0
        %v2622 = vpop.f32.mrf.mxu0
        %v2623 = vadd.f32 %v538, %v2622
        %v2624 = vpop.f32.mrf.mxu0
        %2625 = vdwg.mxu0
        %v2626 = vmax.f32 %v1604, 0.0
        %v2627 = vmax.f32 %v1607, 0.0
        %v2628 = vmax.f32 %v1612, 0.0
        %v2629 = vmax.f32 %v1615, 0.0
        %v2630 = vmax.f32 %v1620, 0.0
        %v2631 = vmax.f32 %v1623, 0.0
        %v2632 = vmax.f32 %v1628, 0.0
        %v2633 = vmax.f32 %v1631, 0.0
        %v2634 = vmax.f32 %v1636, 0.0
        %v2635 = vmax.f32 %v1639, 0.0
        %v2636 = vmax.f32 %v1644, 0.0
        %v2637 = vmax.f32 %v1647, 0.0
        %v2638 = vmax.f32 %v1652, 0.0
        %v2639 = vmax.f32 %v1655, 0.0
        %v2640 = vmax.f32 %v1660, 0.0
        %v2641 = vmax.f32 %v1663, 0.0
        %v2642 = vmax.f32 %v1668, 0.0
        %v2643 = vmax.f32 %v1671, 0.0
        %v2644 = vmax.f32 %v1676, 0.0
        %v2645 = vmax.f32 %v1679, 0.0
        %v2646 = vmax.f32 %v1684, 0.0
        %v2647 = vmax.f32 %v1687, 0.0
        %v2648 = vmax.f32 %v1692, 0.0
        %v2649 = vmax.f32 %v1695, 0.0
        %v2650 = vmax.f32 %v1700, 0.0
        %v2651 = vmax.f32 %v1703, 0.0
        %v2652 = vmax.f32 %v1708, 0.0
        %v2653 = vmax.f32 %v1711, 0.0
        %v2654 = vmax.f32 %v1716, 0.0
        %v2655 = vmax.f32 %v1719, 0.0
        %v2656 = vmax.f32 %v1724, 0.0
        %v2657 = vmax.f32 %v1727, 0.0
        %v2658 = vmax.f32 %v1732, 0.0
        %v2659 = vmax.f32 %v1735, 0.0
        %v2660 = vmax.f32 %v1740, 0.0
        %v2661 = vmax.f32 %v1743, 0.0
        %v2662 = vmax.f32 %v1748, 0.0
        %v2663 = vmax.f32 %v1751, 0.0
        %v2664 = vmax.f32 %v1756, 0.0
        %v2665 = vmax.f32 %v1759, 0.0
        %v2666 = vmax.f32 %v1764, 0.0
        %v2667 = vmax.f32 %v1767, 0.0
        %v2668 = vmax.f32 %v1772, 0.0
        %v2669 = vmax.f32 %v1775, 0.0
        %v2670 = vmax.f32 %v1780, 0.0
        %v2671 = vmax.f32 %v1783, 0.0
        %v2672 = vmax.f32 %v1788, 0.0
        %v2673 = vmax.f32 %v1791, 0.0
        %v2674 = vmax.f32 %v1796, 0.0
        %v2675 = vmax.f32 %v1799, 0.0
        %v2676 = vmax.f32 %v1804, 0.0
        %v2677 = vmax.f32 %v1807, 0.0
        %v2678 = vmax.f32 %v1812, 0.0
        %v2679 = vmax.f32 %v1815, 0.0
        %v2680 = vmax.f32 %v1820, 0.0
        %v2681 = vmax.f32 %v1823, 0.0
        %v2682 = vmax.f32 %v1828, 0.0
        %v2683 = vmax.f32 %v1831, 0.0
        %v2684 = vmax.f32 %v1836, 0.0
        %v2685 = vmax.f32 %v1839, 0.0
        %v2686 = vmax.f32 %v1844, 0.0
        %v2687 = vmax.f32 %v1847, 0.0
        %v2688 = vmax.f32 %v1852, 0.0
        %v2689 = vmax.f32 %v1855, 0.0
        %v2690 = vmax.f32 %v1860, 0.0
        %v2691 = vmax.f32 %v1863, 0.0
        %v2692 = vmax.f32 %v1868, 0.0
        %v2693 = vmax.f32 %v1871, 0.0
        %v2694 = vmax.f32 %v1876, 0.0
        %v2695 = vmax.f32 %v1879, 0.0
        %v2696 = vmax.f32 %v1884, 0.0
        %v2697 = vmax.f32 %v1887, 0.0
        %v2698 = vmax.f32 %v1892, 0.0
        %v2699 = vmax.f32 %v1895, 0.0
        %v2700 = vmax.f32 %v1900, 0.0
        %v2701 = vmax.f32 %v1903, 0.0
        %v2702 = vmax.f32 %v1908, 0.0
        %v2703 = vmax.f32 %v1911, 0.0
        %v2704 = vmax.f32 %v1916, 0.0
        %v2705 = vmax.f32 %v1919, 0.0
        %v2706 = vmax.f32 %v1924, 0.0
        %v2707 = vmax.f32 %v1927, 0.0
        %v2708 = vmax.f32 %v1932, 0.0
        %v2709 = vmax.f32 %v1935, 0.0
        %v2710 = vmax.f32 %v1940, 0.0
        %v2711 = vmax.f32 %v1943, 0.0
        %v2712 = vmax.f32 %v1948, 0.0
        %v2713 = vmax.f32 %v1951, 0.0
        %v2714 = vmax.f32 %v1956, 0.0
        %v2715 = vmax.f32 %v1959, 0.0
        %v2716 = vmax.f32 %v1964, 0.0
        %v2717 = vmax.f32 %v1967, 0.0
        %v2718 = vmax.f32 %v1972, 0.0
        %v2719 = vmax.f32 %v1975, 0.0
        %v2720 = vmax.f32 %v1980, 0.0
        %v2721 = vmax.f32 %v1983, 0.0
        %v2722 = vmax.f32 %v1988, 0.0
        %v2723 = vmax.f32 %v1991, 0.0
        %v2724 = vmax.f32 %v1996, 0.0
        %v2725 = vmax.f32 %v1999, 0.0
        %v2726 = vmax.f32 %v2004, 0.0
        %v2727 = vmax.f32 %v2007, 0.0
        %v2728 = vmax.f32 %v2012, 0.0
        %v2729 = vmax.f32 %v2015, 0.0
        %v2730 = vmax.f32 %v2020, 0.0
        %v2731 = vmax.f32 %v2023, 0.0
        %v2732 = vmax.f32 %v2028, 0.0
        %v2733 = vmax.f32 %v2031, 0.0
        %v2734 = vmax.f32 %v2036, 0.0
        %v2735 = vmax.f32 %v2039, 0.0
        %v2736 = vmax.f32 %v2044, 0.0
        %v2737 = vmax.f32 %v2047, 0.0
        %v2738 = vmax.f32 %v2052, 0.0
        %v2739 = vmax.f32 %v2055, 0.0
        %v2740 = vmax.f32 %v2060, 0.0
        %v2741 = vmax.f32 %v2063, 0.0
        %v2742 = vmax.f32 %v2068, 0.0
        %v2743 = vmax.f32 %v2071, 0.0
        %v2744 = vmax.f32 %v2076, 0.0
        %v2745 = vmax.f32 %v2079, 0.0
        %v2746 = vmax.f32 %v2084, 0.0
        %v2747 = vmax.f32 %v2087, 0.0
        %v2748 = vmax.f32 %v2092, 0.0
        %v2749 = vmax.f32 %v2095, 0.0
        %v2750 = vmax.f32 %v2100, 0.0
        %v2751 = vmax.f32 %v2103, 0.0
        %v2752 = vmax.f32 %v2108, 0.0
        %v2753 = vmax.f32 %v2111, 0.0
        %v2754 = vmax.f32 %v2116, 0.0
        %v2755 = vmax.f32 %v2119, 0.0
        %v2756 = vmax.f32 %v2124, 0.0
        %v2757 = vmax.f32 %v2127, 0.0
        %v2758 = vmax.f32 %v2132, 0.0
        %v2759 = vmax.f32 %v2135, 0.0
        %v2760 = vmax.f32 %v2140, 0.0
        %v2761 = vmax.f32 %v2143, 0.0
        %v2762 = vmax.f32 %v2148, 0.0
        %v2763 = vmax.f32 %v2151, 0.0
        %v2764 = vmax.f32 %v2156, 0.0
        %v2765 = vmax.f32 %v2159, 0.0
        %v2766 = vmax.f32 %v2164, 0.0
        %v2767 = vmax.f32 %v2167, 0.0
        %v2768 = vmax.f32 %v2172, 0.0
        %v2769 = vmax.f32 %v2175, 0.0
        %v2770 = vmax.f32 %v2180, 0.0
        %v2771 = vmax.f32 %v2183, 0.0
        %v2772 = vmax.f32 %v2188, 0.0
        %v2773 = vmax.f32 %v2191, 0.0
        %v2774 = vmax.f32 %v2196, 0.0
        %v2775 = vmax.f32 %v2199, 0.0
        %v2776 = vmax.f32 %v2204, 0.0
        %v2777 = vmax.f32 %v2207, 0.0
        %v2778 = vmax.f32 %v2212, 0.0
        %v2779 = vmax.f32 %v2215, 0.0
        %v2780 = vmax.f32 %v2220, 0.0
        %v2781 = vmax.f32 %v2223, 0.0
        %v2782 = vmax.f32 %v2228, 0.0
        %v2783 = vmax.f32 %v2231, 0.0
        %v2784 = vmax.f32 %v2236, 0.0
        %v2785 = vmax.f32 %v2239, 0.0
        %v2786 = vmax.f32 %v2244, 0.0
        %v2787 = vmax.f32 %v2247, 0.0
        %v2788 = vmax.f32 %v2252, 0.0
        %v2789 = vmax.f32 %v2255, 0.0
        %v2790 = vmax.f32 %v2260, 0.0
        %v2791 = vmax.f32 %v2263, 0.0
        %v2792 = vmax.f32 %v2268, 0.0
        %v2793 = vmax.f32 %v2271, 0.0
        %v2794 = vmax.f32 %v2276, 0.0
        %v2795 = vmax.f32 %v2279, 0.0
        %v2796 = vmax.f32 %v2284, 0.0
        %v2797 = vmax.f32 %v2287, 0.0
        %v2798 = vmax.f32 %v2292, 0.0
        %v2799 = vmax.f32 %v2295, 0.0
        %v2800 = vmax.f32 %v2300, 0.0
        %v2801 = vmax.f32 %v2303, 0.0
        %v2802 = vmax.f32 %v2308, 0.0
        %v2803 = vmax.f32 %v2311, 0.0
        %v2804 = vmax.f32 %v2316, 0.0
        %v2805 = vmax.f32 %v2319, 0.0
        %v2806 = vmax.f32 %v2324, 0.0
        %v2807 = vmax.f32 %v2327, 0.0
        %v2808 = vmax.f32 %v2332, 0.0
        %v2809 = vmax.f32 %v2335, 0.0
        %v2810 = vmax.f32 %v2340, 0.0
        %v2811 = vmax.f32 %v2343, 0.0
        %v2812 = vmax.f32 %v2348, 0.0
        %v2813 = vmax.f32 %v2351, 0.0
        %v2814 = vmax.f32 %v2356, 0.0
        %v2815 = vmax.f32 %v2359, 0.0
        %v2816 = vmax.f32 %v2364, 0.0
        %v2817 = vmax.f32 %v2367, 0.0
        %v2818 = vmax.f32 %v2372, 0.0
        %v2819 = vmax.f32 %v2375, 0.0
        %v2820 = vmax.f32 %v2380, 0.0
        %v2821 = vmax.f32 %v2383, 0.0
        %v2822 = vmax.f32 %v2388, 0.0
        %v2823 = vmax.f32 %v2391, 0.0
        %v2824 = vmax.f32 %v2396, 0.0
        %v2825 = vmax.f32 %v2399, 0.0
        %v2826 = vmax.f32 %v2404, 0.0
        %v2827 = vmax.f32 %v2407, 0.0
        %v2828 = vmax.f32 %v2412, 0.0
        %v2829 = vmax.f32 %v2415, 0.0
        %v2830 = vmax.f32 %v2420, 0.0
        %v2831 = vmax.f32 %v2423, 0.0
        %v2832 = vmax.f32 %v2428, 0.0
        %v2833 = vmax.f32 %v2431, 0.0
        %v2834 = vmax.f32 %v2436, 0.0
        %v2835 = vmax.f32 %v2439, 0.0
        %v2836 = vmax.f32 %v2444, 0.0
        %v2837 = vmax.f32 %v2447, 0.0
        %v2838 = vmax.f32 %v2452, 0.0
        %v2839 = vmax.f32 %v2455, 0.0
        %v2840 = vmax.f32 %v2460, 0.0
        %v2841 = vmax.f32 %v2463, 0.0
        %v2842 = vmax.f32 %v2468, 0.0
        %v2843 = vmax.f32 %v2471, 0.0
        %v2844 = vmax.f32 %v2476, 0.0
        %v2845 = vmax.f32 %v2479, 0.0
        %v2846 = vmax.f32 %v2484, 0.0
        %v2847 = vmax.f32 %v2487, 0.0
        %v2848 = vmax.f32 %v2492, 0.0
        %v2849 = vmax.f32 %v2495, 0.0
        %v2850 = vmax.f32 %v2500, 0.0
        %v2851 = vmax.f32 %v2503, 0.0
        %v2852 = vmax.f32 %v2508, 0.0
        %v2853 = vmax.f32 %v2511, 0.0
        %v2854 = vmax.f32 %v2516, 0.0
        %v2855 = vmax.f32 %v2519, 0.0
        %v2856 = vmax.f32 %v2524, 0.0
        %v2857 = vmax.f32 %v2527, 0.0
        %v2858 = vmax.f32 %v2532, 0.0
        %v2859 = vmax.f32 %v2535, 0.0
        %v2860 = vmax.f32 %v2540, 0.0
        %v2861 = vmax.f32 %v2543, 0.0
        %v2862 = vmax.f32 %v2548, 0.0
        %v2863 = vmax.f32 %v2551, 0.0
        %v2864 = vmax.f32 %v2556, 0.0
        %v2865 = vmax.f32 %v2559, 0.0
        %v2866 = vmax.f32 %v2564, 0.0
        %v2867 = vmax.f32 %v2567, 0.0
        %v2868 = vmax.f32 %v2572, 0.0
        %v2869 = vmax.f32 %v2575, 0.0
        %v2870 = vmax.f32 %v2580, 0.0
        %v2871 = vmax.f32 %v2583, 0.0
        %v2872 = vmax.f32 %v2588, 0.0
        %v2873 = vmax.f32 %v2591, 0.0
        %v2874 = vmax.f32 %v2596, 0.0
        %v2875 = vmax.f32 %v2599, 0.0
        %v2876 = vmax.f32 %v2604, 0.0
        %v2877 = vmax.f32 %v2607, 0.0
        %v2878 = vmax.f32 %v2612, 0.0
        %v2879 = vmax.f32 %v2615, 0.0
        %v2880 = vmax.f32 %v2620, 0.0
        %v2881 = vmax.f32 %v2623, 0.0
        %v2882 = vpack.c.bf16 %v2627, %v2626
        %v2883 = vpack.c.bf16 %v2629, %v2628
        %v2884 = vpack.c.bf16 %v2631, %v2630
        %v2885 = vpack.c.bf16 %v2633, %v2632
        %v2886 = vpack.c.bf16 %v2635, %v2634
        %v2887 = vpack.c.bf16 %v2637, %v2636
        %v2888 = vpack.c.bf16 %v2639, %v2638
        %v2889 = vpack.c.bf16 %v2641, %v2640
        %v2890 = vpack.c.bf16 %v2643, %v2642
        %v2891 = vpack.c.bf16 %v2645, %v2644
        %v2892 = vpack.c.bf16 %v2647, %v2646
        %v2893 = vpack.c.bf16 %v2649, %v2648
        %v2894 = vpack.c.bf16 %v2651, %v2650
        %v2895 = vpack.c.bf16 %v2653, %v2652
        %v2896 = vpack.c.bf16 %v2655, %v2654
        %v2897 = vpack.c.bf16 %v2657, %v2656
        %v2898 = vpack.c.bf16 %v2659, %v2658
        %v2899 = vpack.c.bf16 %v2661, %v2660
        %v2900 = vpack.c.bf16 %v2663, %v2662
        %v2901 = vpack.c.bf16 %v2665, %v2664
        %v2902 = vpack.c.bf16 %v2667, %v2666
        %v2903 = vpack.c.bf16 %v2669, %v2668
        %v2904 = vpack.c.bf16 %v2671, %v2670
        %v2905 = vpack.c.bf16 %v2673, %v2672
        %v2906 = vpack.c.bf16 %v2675, %v2674
        %v2907 = vpack.c.bf16 %v2677, %v2676
        %v2908 = vpack.c.bf16 %v2679, %v2678
        %v2909 = vpack.c.bf16 %v2681, %v2680
        %v2910 = vpack.c.bf16 %v2683, %v2682
        %v2911 = vpack.c.bf16 %v2685, %v2684
        %v2912 = vpack.c.bf16 %v2687, %v2686
        %v2913 = vpack.c.bf16 %v2689, %v2688
        %v2914 = vpack.c.bf16 %v2691, %v2690
        %v2915 = vpack.c.bf16 %v2693, %v2692
        %v2916 = vpack.c.bf16 %v2695, %v2694
        %v2917 = vpack.c.bf16 %v2697, %v2696
        %v2918 = vpack.c.bf16 %v2699, %v2698
        %v2919 = vpack.c.bf16 %v2701, %v2700
        %v2920 = vpack.c.bf16 %v2703, %v2702
        %v2921 = vpack.c.bf16 %v2705, %v2704
        %v2922 = vpack.c.bf16 %v2707, %v2706
        %v2923 = vpack.c.bf16 %v2709, %v2708
        %v2924 = vpack.c.bf16 %v2711, %v2710
        %v2925 = vpack.c.bf16 %v2713, %v2712
        %v2926 = vpack.c.bf16 %v2715, %v2714
        %v2927 = vpack.c.bf16 %v2717, %v2716
        %v2928 = vpack.c.bf16 %v2719, %v2718
        %v2929 = vpack.c.bf16 %v2721, %v2720
        %v2930 = vpack.c.bf16 %v2723, %v2722
        %v2931 = vpack.c.bf16 %v2725, %v2724
        %v2932 = vpack.c.bf16 %v2727, %v2726
        %v2933 = vpack.c.bf16 %v2729, %v2728
        %v2934 = vpack.c.bf16 %v2731, %v2730
        %v2935 = vpack.c.bf16 %v2733, %v2732
        %v2936 = vpack.c.bf16 %v2735, %v2734
        %v2937 = vpack.c.bf16 %v2737, %v2736
        %v2938 = vpack.c.bf16 %v2739, %v2738
        %v2939 = vpack.c.bf16 %v2741, %v2740
        %v2940 = vpack.c.bf16 %v2743, %v2742
        %v2941 = vpack.c.bf16 %v2745, %v2744
        %v2942 = vpack.c.bf16 %v2747, %v2746
        %v2943 = vpack.c.bf16 %v2749, %v2748
        %v2944 = vpack.c.bf16 %v2751, %v2750
        %v2945 = vpack.c.bf16 %v2753, %v2752
        %v2946 = vpack.c.bf16 %v2755, %v2754
        %v2947 = vpack.c.bf16 %v2757, %v2756
        %v2948 = vpack.c.bf16 %v2759, %v2758
        %v2949 = vpack.c.bf16 %v2761, %v2760
        %v2950 = vpack.c.bf16 %v2763, %v2762
        %v2951 = vpack.c.bf16 %v2765, %v2764
        %v2952 = vpack.c.bf16 %v2767, %v2766
        %v2953 = vpack.c.bf16 %v2769, %v2768
        %v2954 = vpack.c.bf16 %v2771, %v2770
        %v2955 = vpack.c.bf16 %v2773, %v2772
        %v2956 = vpack.c.bf16 %v2775, %v2774
        %v2957 = vpack.c.bf16 %v2777, %v2776
        %v2958 = vpack.c.bf16 %v2779, %v2778
        %v2959 = vpack.c.bf16 %v2781, %v2780
        %v2960 = vpack.c.bf16 %v2783, %v2782
        %v2961 = vpack.c.bf16 %v2785, %v2784
        %v2962 = vpack.c.bf16 %v2787, %v2786
        %v2963 = vpack.c.bf16 %v2789, %v2788
        %v2964 = vpack.c.bf16 %v2791, %v2790
        %v2965 = vpack.c.bf16 %v2793, %v2792
        %v2966 = vpack.c.bf16 %v2795, %v2794
        %v2967 = vpack.c.bf16 %v2797, %v2796
        %v2968 = vpack.c.bf16 %v2799, %v2798
        %v2969 = vpack.c.bf16 %v2801, %v2800
        %v2970 = vpack.c.bf16 %v2803, %v2802
        %v2971 = vpack.c.bf16 %v2805, %v2804
        %v2972 = vpack.c.bf16 %v2807, %v2806
        %v2973 = vpack.c.bf16 %v2809, %v2808
        %v2974 = vpack.c.bf16 %v2811, %v2810
        %v2975 = vpack.c.bf16 %v2813, %v2812
        %v2976 = vpack.c.bf16 %v2815, %v2814
        %v2977 = vpack.c.bf16 %v2817, %v2816
        %v2978 = vpack.c.bf16 %v2819, %v2818
        %v2979 = vpack.c.bf16 %v2821, %v2820
        %v2980 = vpack.c.bf16 %v2823, %v2822
        %v2981 = vpack.c.bf16 %v2825, %v2824
        %v2982 = vpack.c.bf16 %v2827, %v2826
        %v2983 = vpack.c.bf16 %v2829, %v2828
        %v2984 = vpack.c.bf16 %v2831, %v2830
        %v2985 = vpack.c.bf16 %v2833, %v2832
        %v2986 = vpack.c.bf16 %v2835, %v2834
        %v2987 = vpack.c.bf16 %v2837, %v2836
        %v2988 = vpack.c.bf16 %v2839, %v2838
        %v2989 = vpack.c.bf16 %v2841, %v2840
        %v2990 = vpack.c.bf16 %v2843, %v2842
        %v2991 = vpack.c.bf16 %v2845, %v2844
        %v2992 = vpack.c.bf16 %v2847, %v2846
        %v2993 = vpack.c.bf16 %v2849, %v2848
        %v2994 = vpack.c.bf16 %v2851, %v2850
        %v2995 = vpack.c.bf16 %v2853, %v2852
        %v2996 = vpack.c.bf16 %v2855, %v2854
        %v2997 = vpack.c.bf16 %v2857, %v2856
        %v2998 = vpack.c.bf16 %v2859, %v2858
        %v2999 = vpack.c.bf16 %v2861, %v2860
        %v3000 = vpack.c.bf16 %v2863, %v2862
        %v3001 = vpack.c.bf16 %v2865, %v2864
        %v3002 = vpack.c.bf16 %v2867, %v2866
        %v3003 = vpack.c.bf16 %v2869, %v2868
        %v3004 = vpack.c.bf16 %v2871, %v2870
        %v3005 = vpack.c.bf16 %v2873, %v2872
        %v3006 = vpack.c.bf16 %v2875, %v2874
        %v3007 = vpack.c.bf16 %v2877, %v2876
        %v3008 = vpack.c.bf16 %v2879, %v2878
        %v3009 = vpack.c.bf16 %v2881, %v2880
        %v3010 = vld [vmem:[%s4] sm:$0xf]
        %v3011 = vld [vmem:[%s4 + $0x4] sm:$0xf]
        %v3012 = vld [vmem:[%s4 + $0x8] sm:$0xf]
        %v3013 = vld [vmem:[%s4 + $0xc] sm:$0xf]
        %v3014 = vld [vmem:[%s5] sm:$0x1]
        %v3016 = vlaneseq
        %v3017 = vshrl.u32 %v3016, 7
        %v3018 = vsub.s32 0, %v3017
        %v3019 = vrot.slane %v3014, %v3018
        %v3025 = vunpack.c.l.b16 %v3010
        %v3026 = vunpack.c.l.b16 %v3011
        %v3027 = vunpack.c.l.b16 %v3012
        %v3028 = vunpack.c.l.b16 %v3013
        %v3029 = vpack.c.b16 %v3026, %v3025
        %v3030 = vpack.c.b16 %v3028, %v3027
        %vm3033 = vcmask 261120
        %v3035 = vsel %vm3033, %v2882, 0
        %v3038 = vsel %vm3033, %v2883, 0
        %v3041 = vsel %vm3033, %v2884, 0
        %v3044 = vsel %vm3033, %v2885, 0
        %v3047 = vsel %vm3033, %v2886, 0
        %v3050 = vsel %vm3033, %v2887, 0
        %v3053 = vsel %vm3033, %v2888, 0
        %v3056 = vsel %vm3033, %v2889, 0
        %v3059 = vsel %vm3033, %v2890, 0
        %v3062 = vsel %vm3033, %v2891, 0
        %v3065 = vsel %vm3033, %v2892, 0
        %v3068 = vsel %vm3033, %v2893, 0
        %v3071 = vsel %vm3033, %v2894, 0
        %v3074 = vsel %vm3033, %v2895, 0
        %v3077 = vsel %vm3033, %v2896, 0
        %v3080 = vsel %vm3033, %v2897, 0
        %v3083 = vsel %vm3033, %v2898, 0
        %v3086 = vsel %vm3033, %v2899, 0
        %v3089 = vsel %vm3033, %v2900, 0
        %v3092 = vsel %vm3033, %v2901, 0
        %v3095 = vsel %vm3033, %v2902, 0
        %v3098 = vsel %vm3033, %v2903, 0
        %v3101 = vsel %vm3033, %v2904, 0
        %v3104 = vsel %vm3033, %v2905, 0
        %v3107 = vsel %vm3033, %v2906, 0
        %v3110 = vsel %vm3033, %v2907, 0
        %v3113 = vsel %vm3033, %v2908, 0
        %v3116 = vsel %vm3033, %v2909, 0
        %v3119 = vsel %vm3033, %v2910, 0
        %v3122 = vsel %vm3033, %v2911, 0
        %v3125 = vsel %vm3033, %v2912, 0
        %v3128 = vsel %vm3033, %v2913, 0
        %v3131 = vsel %vm3033, %v2914, 0
        %v3134 = vsel %vm3033, %v2915, 0
        %v3137 = vsel %vm3033, %v2916, 0
        %v3140 = vsel %vm3033, %v2917, 0
        %v3143 = vsel %vm3033, %v2918, 0
        %v3146 = vsel %vm3033, %v2919, 0
        %v3149 = vsel %vm3033, %v2920, 0
        %v3152 = vsel %vm3033, %v2921, 0
        %v3155 = vsel %vm3033, %v2922, 0
        %v3158 = vsel %vm3033, %v2923, 0
        %v3161 = vsel %vm3033, %v2924, 0
        %v3164 = vsel %vm3033, %v2925, 0
        %v3167 = vsel %vm3033, %v2926, 0
        %v3170 = vsel %vm3033, %v2927, 0
        %v3173 = vsel %vm3033, %v2928, 0
        %v3176 = vsel %vm3033, %v2929, 0
        %v3179 = vsel %vm3033, %v2930, 0
        %v3182 = vsel %vm3033, %v2931, 0
        %v3185 = vsel %vm3033, %v2932, 0
        %v3188 = vsel %vm3033, %v2933, 0
        %v3191 = vsel %vm3033, %v2934, 0
        %v3194 = vsel %vm3033, %v2935, 0
        %v3197 = vsel %vm3033, %v2936, 0
        %v3200 = vsel %vm3033, %v2937, 0
        %v3203 = vsel %vm3033, %v2938, 0
        %v3206 = vsel %vm3033, %v2939, 0
        %v3209 = vsel %vm3033, %v2940, 0
        %v3212 = vsel %vm3033, %v2941, 0
        %v3215 = vsel %vm3033, %v2942, 0
        %v3218 = vsel %vm3033, %v2943, 0
        %v3221 = vsel %vm3033, %v2944, 0
        %v3224 = vsel %vm3033, %v2945, 0
        %v3227 = vsel %vm3033, %v2946, 0
        %v3230 = vsel %vm3033, %v2947, 0
        %v3233 = vsel %vm3033, %v2948, 0
        %v3236 = vsel %vm3033, %v2949, 0
        %v3239 = vsel %vm3033, %v2950, 0
        %v3242 = vsel %vm3033, %v2951, 0
        %v3245 = vsel %vm3033, %v2952, 0
        %v3248 = vsel %vm3033, %v2953, 0
        %v3251 = vsel %vm3033, %v2954, 0
        %v3254 = vsel %vm3033, %v2955, 0
        %v3257 = vsel %vm3033, %v2956, 0
        %v3260 = vsel %vm3033, %v2957, 0
        %v3263 = vsel %vm3033, %v2958, 0
        %v3266 = vsel %vm3033, %v2959, 0
        %v3269 = vsel %vm3033, %v2960, 0
        %v3272 = vsel %vm3033, %v2961, 0
        %v3275 = vsel %vm3033, %v2962, 0
        %v3278 = vsel %vm3033, %v2963, 0
        %v3281 = vsel %vm3033, %v2964, 0
        %v3284 = vsel %vm3033, %v2965, 0
        %v3287 = vsel %vm3033, %v2966, 0
        %v3290 = vsel %vm3033, %v2967, 0
        %v3293 = vsel %vm3033, %v2968, 0
        %v3296 = vsel %vm3033, %v2969, 0
        %v3299 = vsel %vm3033, %v2970, 0
        %v3302 = vsel %vm3033, %v2971, 0
        %v3305 = vsel %vm3033, %v2972, 0
        %v3308 = vsel %vm3033, %v2973, 0
        %v3311 = vsel %vm3033, %v2974, 0
        %v3314 = vsel %vm3033, %v2975, 0
        %v3317 = vsel %vm3033, %v2976, 0
        %v3320 = vsel %vm3033, %v2977, 0
        %v3323 = vsel %vm3033, %v2978, 0
        %v3326 = vsel %vm3033, %v2979, 0
        %v3329 = vsel %vm3033, %v2980, 0
        %v3332 = vsel %vm3033, %v2981, 0
        %v3335 = vsel %vm3033, %v2982, 0
        %v3338 = vsel %vm3033, %v2983, 0
        %v3341 = vsel %vm3033, %v2984, 0
        %v3344 = vsel %vm3033, %v2985, 0
        %v3347 = vsel %vm3033, %v2986, 0
        %v3350 = vsel %vm3033, %v2987, 0
        %v3353 = vsel %vm3033, %v2988, 0
        %v3356 = vsel %vm3033, %v2989, 0
        %v3359 = vsel %vm3033, %v2990, 0
        %v3362 = vsel %vm3033, %v2991, 0
        %v3365 = vsel %vm3033, %v2992, 0
        %v3368 = vsel %vm3033, %v2993, 0
        %v3371 = vsel %vm3033, %v2994, 0
        %v3374 = vsel %vm3033, %v2995, 0
        %v3377 = vsel %vm3033, %v2996, 0
        %v3380 = vsel %vm3033, %v2997, 0
        %v3383 = vsel %vm3033, %v2998, 0
        %v3386 = vsel %vm3033, %v2999, 0
        %v3389 = vsel %vm3033, %v3000, 0
        %v3392 = vsel %vm3033, %v3001, 0
        %v3395 = vsel %vm3033, %v3002, 0
        %v3398 = vsel %vm3033, %v3003, 0
        %v3401 = vsel %vm3033, %v3004, 0
        %v3404 = vsel %vm3033, %v3005, 0
        %v3407 = vsel %vm3033, %v3006, 0
        %v3410 = vsel %vm3033, %v3007, 0
        %v3413 = vsel %vm3033, %v3008, 0
        %v3416 = vsel %vm3033, %v3009, 0
        %3418 = vmatprep.subr.bf16.mxu0 0
        %3419 = vmatpush1.bf16.msra.mxu0 0
        %3420 = vmatprep.subr.bf16.mxu0 0
        %3421 = vmatpush1.bf16.msra.mxu0 0
        %3422 = vmatprep.subr.bf16.mxu0 0
        %3423 = vmatpush1.bf16.msra.mxu0 0
        %3424 = vmatprep.subr.bf16.mxu0 0
        %3425 = vmatpush1.bf16.msra.mxu0 0
        %3426 = vmatprep.subr.bf16.mxu0 0
        %3427 = vmatpush1.bf16.msra.mxu0 0
        %3428 = vmatprep.subr.bf16.mxu0 0
        %3429 = vmatpush1.bf16.msra.mxu0 0
        %3430 = vmatprep.subr.bf16.mxu0 0
        %3431 = vmatpush1.bf16.msra.mxu0 %v3030
        %3432 = vmatprep.subr.bf16.mxu0 0
        %3433 = vmatpush1.bf16.msra.mxu0 %v3029
        %3434 = vmatprep.subr.bf16.mxu0 0
        %3435 = vmatpush2.bf16.msra.mxu0 0
        %3436 = vmatprep.subr.bf16.mxu0 0
        %3437 = vmatpush2.bf16.msra.mxu0 0
        %3438 = vmatprep.subr.bf16.mxu0 0
        %3439 = vmatpush2.bf16.msra.mxu0 0
        %3440 = vmatprep.subr.bf16.mxu0 0
        %3441 = vmatpush2.bf16.msra.mxu0 0
        %3442 = vmatprep.subr.bf16.mxu0 0
        %3443 = vmatpush2.bf16.msra.mxu0 0
        %3444 = vmatprep.subr.bf16.mxu0 0
        %3445 = vmatpush2.bf16.msra.mxu0 0
        %3446 = vmatprep.subr.bf16.mxu0 0
        %3447 = vmatpush2.bf16.msra.mxu0 0
        %3448 = vmatprep.subr.bf16.mxu0 0
        %3449 = vmatpush2.bf16.msra.mxu0 0
        %3450 = vmatprep.mubr.bf16.mxu0 0
        %3451 = vmatmul.mubr.bf16.gmra.mxu0 %v3035
        %v3452 = vpop.f32.mrf.mxu0
        %v3453 = vadd.f32 %v3019, %v3452
        %v3454 = vpop.f32.mrf.mxu0
        %v3455 = vpop.f32.mrf.mxu0
        %v3456 = vadd.f32 %v3019, %v3455
        %v3457 = vpop.f32.mrf.mxu0
        %3458 = vmatprep.mubr.bf16.mxu0 0
        %3459 = vmatmul.mubr.bf16.gmra.mxu0 %v3038
        %v3460 = vpop.f32.mrf.mxu0
        %v3461 = vadd.f32 %v3019, %v3460
        %v3462 = vpop.f32.mrf.mxu0
        %v3463 = vpop.f32.mrf.mxu0
        %v3464 = vadd.f32 %v3019, %v3463
        %v3465 = vpop.f32.mrf.mxu0
        %3466 = vmatprep.mubr.bf16.mxu0 0
        %3467 = vmatmul.mubr.bf16.gmra.mxu0 %v3041
        %v3468 = vpop.f32.mrf.mxu0
        %v3469 = vadd.f32 %v3019, %v3468
        %v3470 = vpop.f32.mrf.mxu0
        %v3471 = vpop.f32.mrf.mxu0
        %v3472 = vadd.f32 %v3019, %v3471
        %v3473 = vpop.f32.mrf.mxu0
        %3474 = vmatprep.mubr.bf16.mxu0 0
        %3475 = vmatmul.mubr.bf16.gmra.mxu0 %v3044
        %v3476 = vpop.f32.mrf.mxu0
        %v3477 = vadd.f32 %v3019, %v3476
        %v3478 = vpop.f32.mrf.mxu0
        %v3479 = vpop.f32.mrf.mxu0
        %v3480 = vadd.f32 %v3019, %v3479
        %v3481 = vpop.f32.mrf.mxu0
        %3482 = vmatprep.mubr.bf16.mxu0 0
        %3483 = vmatmul.mubr.bf16.gmra.mxu0 %v3047
        %v3484 = vpop.f32.mrf.mxu0
        %v3485 = vadd.f32 %v3019, %v3484
        %v3486 = vpop.f32.mrf.mxu0
        %v3487 = vpop.f32.mrf.mxu0
        %v3488 = vadd.f32 %v3019, %v3487
        %v3489 = vpop.f32.mrf.mxu0
        %3490 = vmatprep.mubr.bf16.mxu0 0
        %3491 = vmatmul.mubr.bf16.gmra.mxu0 %v3050
        %v3492 = vpop.f32.mrf.mxu0
        %v3493 = vadd.f32 %v3019, %v3492
        %v3494 = vpop.f32.mrf.mxu0
        %v3495 = vpop.f32.mrf.mxu0
        %v3496 = vadd.f32 %v3019, %v3495
        %v3497 = vpop.f32.mrf.mxu0
        %3498 = vmatprep.mubr.bf16.mxu0 0
        %3499 = vmatmul.mubr.bf16.gmra.mxu0 %v3053
        %v3500 = vpop.f32.mrf.mxu0
        %v3501 = vadd.f32 %v3019, %v3500
        %v3502 = vpop.f32.mrf.mxu0
        %v3503 = vpop.f32.mrf.mxu0
        %v3504 = vadd.f32 %v3019, %v3503
        %v3505 = vpop.f32.mrf.mxu0
        %3506 = vmatprep.mubr.bf16.mxu0 0
        %3507 = vmatmul.mubr.bf16.gmra.mxu0 %v3056
        %v3508 = vpop.f32.mrf.mxu0
        %v3509 = vadd.f32 %v3019, %v3508
        %v3510 = vpop.f32.mrf.mxu0
        %v3511 = vpop.f32.mrf.mxu0
        %v3512 = vadd.f32 %v3019, %v3511
        %v3513 = vpop.f32.mrf.mxu0
        %3514 = vmatprep.mubr.bf16.mxu0 0
        %3515 = vmatmul.mubr.bf16.gmra.mxu0 %v3059
        %v3516 = vpop.f32.mrf.mxu0
        %v3517 = vadd.f32 %v3019, %v3516
        %v3518 = vpop.f32.mrf.mxu0
        %v3519 = vpop.f32.mrf.mxu0
        %v3520 = vadd.f32 %v3019, %v3519
        %v3521 = vpop.f32.mrf.mxu0
        %3522 = vmatprep.mubr.bf16.mxu0 0
        %3523 = vmatmul.mubr.bf16.gmra.mxu0 %v3062
        %v3524 = vpop.f32.mrf.mxu0
        %v3525 = vadd.f32 %v3019, %v3524
        %v3526 = vpop.f32.mrf.mxu0
        %v3527 = vpop.f32.mrf.mxu0
        %v3528 = vadd.f32 %v3019, %v3527
        %v3529 = vpop.f32.mrf.mxu0
        %3530 = vmatprep.mubr.bf16.mxu0 0
        %3531 = vmatmul.mubr.bf16.gmra.mxu0 %v3065
        %v3532 = vpop.f32.mrf.mxu0
        %v3533 = vadd.f32 %v3019, %v3532
        %v3534 = vpop.f32.mrf.mxu0
        %v3535 = vpop.f32.mrf.mxu0
        %v3536 = vadd.f32 %v3019, %v3535
        %v3537 = vpop.f32.mrf.mxu0
        %3538 = vmatprep.mubr.bf16.mxu0 0
        %3539 = vmatmul.mubr.bf16.gmra.mxu0 %v3068
        %v3540 = vpop.f32.mrf.mxu0
        %v3541 = vadd.f32 %v3019, %v3540
        %v3542 = vpop.f32.mrf.mxu0
        %v3543 = vpop.f32.mrf.mxu0
        %v3544 = vadd.f32 %v3019, %v3543
        %v3545 = vpop.f32.mrf.mxu0
        %3546 = vmatprep.mubr.bf16.mxu0 0
        %3547 = vmatmul.mubr.bf16.gmra.mxu0 %v3071
        %v3548 = vpop.f32.mrf.mxu0
        %v3549 = vadd.f32 %v3019, %v3548
        %v3550 = vpop.f32.mrf.mxu0
        %v3551 = vpop.f32.mrf.mxu0
        %v3552 = vadd.f32 %v3019, %v3551
        %v3553 = vpop.f32.mrf.mxu0
        %3554 = vmatprep.mubr.bf16.mxu0 0
        %3555 = vmatmul.mubr.bf16.gmra.mxu0 %v3074
        %v3556 = vpop.f32.mrf.mxu0
        %v3557 = vadd.f32 %v3019, %v3556
        %v3558 = vpop.f32.mrf.mxu0
        %v3559 = vpop.f32.mrf.mxu0
        %v3560 = vadd.f32 %v3019, %v3559
        %v3561 = vpop.f32.mrf.mxu0
        %3562 = vmatprep.mubr.bf16.mxu0 0
        %3563 = vmatmul.mubr.bf16.gmra.mxu0 %v3077
        %v3564 = vpop.f32.mrf.mxu0
        %v3565 = vadd.f32 %v3019, %v3564
        %v3566 = vpop.f32.mrf.mxu0
        %v3567 = vpop.f32.mrf.mxu0
        %v3568 = vadd.f32 %v3019, %v3567
        %v3569 = vpop.f32.mrf.mxu0
        %3570 = vmatprep.mubr.bf16.mxu0 0
        %3571 = vmatmul.mubr.bf16.gmra.mxu0 %v3080
        %v3572 = vpop.f32.mrf.mxu0
        %v3573 = vadd.f32 %v3019, %v3572
        %v3574 = vpop.f32.mrf.mxu0
        %v3575 = vpop.f32.mrf.mxu0
        %v3576 = vadd.f32 %v3019, %v3575
        %v3577 = vpop.f32.mrf.mxu0
        %3578 = vmatprep.mubr.bf16.mxu0 0
        %3579 = vmatmul.mubr.bf16.gmra.mxu0 %v3083
        %v3580 = vpop.f32.mrf.mxu0
        %v3581 = vadd.f32 %v3019, %v3580
        %v3582 = vpop.f32.mrf.mxu0
        %v3583 = vpop.f32.mrf.mxu0
        %v3584 = vadd.f32 %v3019, %v3583
        %v3585 = vpop.f32.mrf.mxu0
        %3586 = vmatprep.mubr.bf16.mxu0 0
        %3587 = vmatmul.mubr.bf16.gmra.mxu0 %v3086
        %v3588 = vpop.f32.mrf.mxu0
        %v3589 = vadd.f32 %v3019, %v3588
        %v3590 = vpop.f32.mrf.mxu0
        %v3591 = vpop.f32.mrf.mxu0
        %v3592 = vadd.f32 %v3019, %v3591
        %v3593 = vpop.f32.mrf.mxu0
        %3594 = vmatprep.mubr.bf16.mxu0 0
        %3595 = vmatmul.mubr.bf16.gmra.mxu0 %v3089
        %v3596 = vpop.f32.mrf.mxu0
        %v3597 = vadd.f32 %v3019, %v3596
        %v3598 = vpop.f32.mrf.mxu0
        %v3599 = vpop.f32.mrf.mxu0
        %v3600 = vadd.f32 %v3019, %v3599
        %v3601 = vpop.f32.mrf.mxu0
        %3602 = vmatprep.mubr.bf16.mxu0 0
        %3603 = vmatmul.mubr.bf16.gmra.mxu0 %v3092
        %v3604 = vpop.f32.mrf.mxu0
        %v3605 = vadd.f32 %v3019, %v3604
        %v3606 = vpop.f32.mrf.mxu0
        %v3607 = vpop.f32.mrf.mxu0
        %v3608 = vadd.f32 %v3019, %v3607
        %v3609 = vpop.f32.mrf.mxu0
        %3610 = vmatprep.mubr.bf16.mxu0 0
        %3611 = vmatmul.mubr.bf16.gmra.mxu0 %v3095
        %v3612 = vpop.f32.mrf.mxu0
        %v3613 = vadd.f32 %v3019, %v3612
        %v3614 = vpop.f32.mrf.mxu0
        %v3615 = vpop.f32.mrf.mxu0
        %v3616 = vadd.f32 %v3019, %v3615
        %v3617 = vpop.f32.mrf.mxu0
        %3618 = vmatprep.mubr.bf16.mxu0 0
        %3619 = vmatmul.mubr.bf16.gmra.mxu0 %v3098
        %v3620 = vpop.f32.mrf.mxu0
        %v3621 = vadd.f32 %v3019, %v3620
        %v3622 = vpop.f32.mrf.mxu0
        %v3623 = vpop.f32.mrf.mxu0
        %v3624 = vadd.f32 %v3019, %v3623
        %v3625 = vpop.f32.mrf.mxu0
        %3626 = vmatprep.mubr.bf16.mxu0 0
        %3627 = vmatmul.mubr.bf16.gmra.mxu0 %v3101
        %v3628 = vpop.f32.mrf.mxu0
        %v3629 = vadd.f32 %v3019, %v3628
        %v3630 = vpop.f32.mrf.mxu0
        %v3631 = vpop.f32.mrf.mxu0
        %v3632 = vadd.f32 %v3019, %v3631
        %v3633 = vpop.f32.mrf.mxu0
        %3634 = vmatprep.mubr.bf16.mxu0 0
        %3635 = vmatmul.mubr.bf16.gmra.mxu0 %v3104
        %v3636 = vpop.f32.mrf.mxu0
        %v3637 = vadd.f32 %v3019, %v3636
        %v3638 = vpop.f32.mrf.mxu0
        %v3639 = vpop.f32.mrf.mxu0
        %v3640 = vadd.f32 %v3019, %v3639
        %v3641 = vpop.f32.mrf.mxu0
        %3642 = vmatprep.mubr.bf16.mxu0 0
        %3643 = vmatmul.mubr.bf16.gmra.mxu0 %v3107
        %v3644 = vpop.f32.mrf.mxu0
        %v3645 = vadd.f32 %v3019, %v3644
        %v3646 = vpop.f32.mrf.mxu0
        %v3647 = vpop.f32.mrf.mxu0
        %v3648 = vadd.f32 %v3019, %v3647
        %v3649 = vpop.f32.mrf.mxu0
        %3650 = vmatprep.mubr.bf16.mxu0 0
        %3651 = vmatmul.mubr.bf16.gmra.mxu0 %v3110
        %v3652 = vpop.f32.mrf.mxu0
        %v3653 = vadd.f32 %v3019, %v3652
        %v3654 = vpop.f32.mrf.mxu0
        %v3655 = vpop.f32.mrf.mxu0
        %v3656 = vadd.f32 %v3019, %v3655
        %v3657 = vpop.f32.mrf.mxu0
        %3658 = vmatprep.mubr.bf16.mxu0 0
        %3659 = vmatmul.mubr.bf16.gmra.mxu0 %v3113
        %v3660 = vpop.f32.mrf.mxu0
        %v3661 = vadd.f32 %v3019, %v3660
        %v3662 = vpop.f32.mrf.mxu0
        %v3663 = vpop.f32.mrf.mxu0
        %v3664 = vadd.f32 %v3019, %v3663
        %v3665 = vpop.f32.mrf.mxu0
        %3666 = vmatprep.mubr.bf16.mxu0 0
        %3667 = vmatmul.mubr.bf16.gmra.mxu0 %v3116
        %v3668 = vpop.f32.mrf.mxu0
        %v3669 = vadd.f32 %v3019, %v3668
        %v3670 = vpop.f32.mrf.mxu0
        %v3671 = vpop.f32.mrf.mxu0
        %v3672 = vadd.f32 %v3019, %v3671
        %v3673 = vpop.f32.mrf.mxu0
        %3674 = vmatprep.mubr.bf16.mxu0 0
        %3675 = vmatmul.mubr.bf16.gmra.mxu0 %v3119
        %v3676 = vpop.f32.mrf.mxu0
        %v3677 = vadd.f32 %v3019, %v3676
        %v3678 = vpop.f32.mrf.mxu0
        %v3679 = vpop.f32.mrf.mxu0
        %v3680 = vadd.f32 %v3019, %v3679
        %v3681 = vpop.f32.mrf.mxu0
        %3682 = vmatprep.mubr.bf16.mxu0 0
        %3683 = vmatmul.mubr.bf16.gmra.mxu0 %v3122
        %v3684 = vpop.f32.mrf.mxu0
        %v3685 = vadd.f32 %v3019, %v3684
        %v3686 = vpop.f32.mrf.mxu0
        %v3687 = vpop.f32.mrf.mxu0
        %v3688 = vadd.f32 %v3019, %v3687
        %v3689 = vpop.f32.mrf.mxu0
        %3690 = vmatprep.mubr.bf16.mxu0 0
        %3691 = vmatmul.mubr.bf16.gmra.mxu0 %v3125
        %v3692 = vpop.f32.mrf.mxu0
        %v3693 = vadd.f32 %v3019, %v3692
        %v3694 = vpop.f32.mrf.mxu0
        %v3695 = vpop.f32.mrf.mxu0
        %v3696 = vadd.f32 %v3019, %v3695
        %v3697 = vpop.f32.mrf.mxu0
        %3698 = vmatprep.mubr.bf16.mxu0 0
        %3699 = vmatmul.mubr.bf16.gmra.mxu0 %v3128
        %v3700 = vpop.f32.mrf.mxu0
        %v3701 = vadd.f32 %v3019, %v3700
        %v3702 = vpop.f32.mrf.mxu0
        %v3703 = vpop.f32.mrf.mxu0
        %v3704 = vadd.f32 %v3019, %v3703
        %v3705 = vpop.f32.mrf.mxu0
        %3706 = vmatprep.mubr.bf16.mxu0 0
        %3707 = vmatmul.mubr.bf16.gmra.mxu0 %v3131
        %v3708 = vpop.f32.mrf.mxu0
        %v3709 = vadd.f32 %v3019, %v3708
        %v3710 = vpop.f32.mrf.mxu0
        %v3711 = vpop.f32.mrf.mxu0
        %v3712 = vadd.f32 %v3019, %v3711
        %v3713 = vpop.f32.mrf.mxu0
        %3714 = vmatprep.mubr.bf16.mxu0 0
        %3715 = vmatmul.mubr.bf16.gmra.mxu0 %v3134
        %v3716 = vpop.f32.mrf.mxu0
        %v3717 = vadd.f32 %v3019, %v3716
        %v3718 = vpop.f32.mrf.mxu0
        %v3719 = vpop.f32.mrf.mxu0
        %v3720 = vadd.f32 %v3019, %v3719
        %v3721 = vpop.f32.mrf.mxu0
        %3722 = vmatprep.mubr.bf16.mxu0 0
        %3723 = vmatmul.mubr.bf16.gmra.mxu0 %v3137
        %v3724 = vpop.f32.mrf.mxu0
        %v3725 = vadd.f32 %v3019, %v3724
        %v3726 = vpop.f32.mrf.mxu0
        %v3727 = vpop.f32.mrf.mxu0
        %v3728 = vadd.f32 %v3019, %v3727
        %v3729 = vpop.f32.mrf.mxu0
        %3730 = vmatprep.mubr.bf16.mxu0 0
        %3731 = vmatmul.mubr.bf16.gmra.mxu0 %v3140
        %v3732 = vpop.f32.mrf.mxu0
        %v3733 = vadd.f32 %v3019, %v3732
        %v3734 = vpop.f32.mrf.mxu0
        %v3735 = vpop.f32.mrf.mxu0
        %v3736 = vadd.f32 %v3019, %v3735
        %v3737 = vpop.f32.mrf.mxu0
        %3738 = vmatprep.mubr.bf16.mxu0 0
        %3739 = vmatmul.mubr.bf16.gmra.mxu0 %v3143
        %v3740 = vpop.f32.mrf.mxu0
        %v3741 = vadd.f32 %v3019, %v3740
        %v3742 = vpop.f32.mrf.mxu0
        %v3743 = vpop.f32.mrf.mxu0
        %v3744 = vadd.f32 %v3019, %v3743
        %v3745 = vpop.f32.mrf.mxu0
        %3746 = vmatprep.mubr.bf16.mxu0 0
        %3747 = vmatmul.mubr.bf16.gmra.mxu0 %v3146
        %v3748 = vpop.f32.mrf.mxu0
        %v3749 = vadd.f32 %v3019, %v3748
        %v3750 = vpop.f32.mrf.mxu0
        %v3751 = vpop.f32.mrf.mxu0
        %v3752 = vadd.f32 %v3019, %v3751
        %v3753 = vpop.f32.mrf.mxu0
        %3754 = vmatprep.mubr.bf16.mxu0 0
        %3755 = vmatmul.mubr.bf16.gmra.mxu0 %v3149
        %v3756 = vpop.f32.mrf.mxu0
        %v3757 = vadd.f32 %v3019, %v3756
        %v3758 = vpop.f32.mrf.mxu0
        %v3759 = vpop.f32.mrf.mxu0
        %v3760 = vadd.f32 %v3019, %v3759
        %v3761 = vpop.f32.mrf.mxu0
        %3762 = vmatprep.mubr.bf16.mxu0 0
        %3763 = vmatmul.mubr.bf16.gmra.mxu0 %v3152
        %v3764 = vpop.f32.mrf.mxu0
        %v3765 = vadd.f32 %v3019, %v3764
        %v3766 = vpop.f32.mrf.mxu0
        %v3767 = vpop.f32.mrf.mxu0
        %v3768 = vadd.f32 %v3019, %v3767
        %v3769 = vpop.f32.mrf.mxu0
        %3770 = vmatprep.mubr.bf16.mxu0 0
        %3771 = vmatmul.mubr.bf16.gmra.mxu0 %v3155
        %v3772 = vpop.f32.mrf.mxu0
        %v3773 = vadd.f32 %v3019, %v3772
        %v3774 = vpop.f32.mrf.mxu0
        %v3775 = vpop.f32.mrf.mxu0
        %v3776 = vadd.f32 %v3019, %v3775
        %v3777 = vpop.f32.mrf.mxu0
        %3778 = vmatprep.mubr.bf16.mxu0 0
        %3779 = vmatmul.mubr.bf16.gmra.mxu0 %v3158
        %v3780 = vpop.f32.mrf.mxu0
        %v3781 = vadd.f32 %v3019, %v3780
        %v3782 = vpop.f32.mrf.mxu0
        %v3783 = vpop.f32.mrf.mxu0
        %v3784 = vadd.f32 %v3019, %v3783
        %v3785 = vpop.f32.mrf.mxu0
        %3786 = vmatprep.mubr.bf16.mxu0 0
        %3787 = vmatmul.mubr.bf16.gmra.mxu0 %v3161
        %v3788 = vpop.f32.mrf.mxu0
        %v3789 = vadd.f32 %v3019, %v3788
        %v3790 = vpop.f32.mrf.mxu0
        %v3791 = vpop.f32.mrf.mxu0
        %v3792 = vadd.f32 %v3019, %v3791
        %v3793 = vpop.f32.mrf.mxu0
        %3794 = vmatprep.mubr.bf16.mxu0 0
        %3795 = vmatmul.mubr.bf16.gmra.mxu0 %v3164
        %v3796 = vpop.f32.mrf.mxu0
        %v3797 = vadd.f32 %v3019, %v3796
        %v3798 = vpop.f32.mrf.mxu0
        %v3799 = vpop.f32.mrf.mxu0
        %v3800 = vadd.f32 %v3019, %v3799
        %v3801 = vpop.f32.mrf.mxu0
        %3802 = vmatprep.mubr.bf16.mxu0 0
        %3803 = vmatmul.mubr.bf16.gmra.mxu0 %v3167
        %v3804 = vpop.f32.mrf.mxu0
        %v3805 = vadd.f32 %v3019, %v3804
        %v3806 = vpop.f32.mrf.mxu0
        %v3807 = vpop.f32.mrf.mxu0
        %v3808 = vadd.f32 %v3019, %v3807
        %v3809 = vpop.f32.mrf.mxu0
        %3810 = vmatprep.mubr.bf16.mxu0 0
        %3811 = vmatmul.mubr.bf16.gmra.mxu0 %v3170
        %v3812 = vpop.f32.mrf.mxu0
        %v3813 = vadd.f32 %v3019, %v3812
        %v3814 = vpop.f32.mrf.mxu0
        %v3815 = vpop.f32.mrf.mxu0
        %v3816 = vadd.f32 %v3019, %v3815
        %v3817 = vpop.f32.mrf.mxu0
        %3818 = vmatprep.mubr.bf16.mxu0 0
        %3819 = vmatmul.mubr.bf16.gmra.mxu0 %v3173
        %v3820 = vpop.f32.mrf.mxu0
        %v3821 = vadd.f32 %v3019, %v3820
        %v3822 = vpop.f32.mrf.mxu0
        %v3823 = vpop.f32.mrf.mxu0
        %v3824 = vadd.f32 %v3019, %v3823
        %v3825 = vpop.f32.mrf.mxu0
        %3826 = vmatprep.mubr.bf16.mxu0 0
        %3827 = vmatmul.mubr.bf16.gmra.mxu0 %v3176
        %v3828 = vpop.f32.mrf.mxu0
        %v3829 = vadd.f32 %v3019, %v3828
        %v3830 = vpop.f32.mrf.mxu0
        %v3831 = vpop.f32.mrf.mxu0
        %v3832 = vadd.f32 %v3019, %v3831
        %v3833 = vpop.f32.mrf.mxu0
        %3834 = vmatprep.mubr.bf16.mxu0 0
        %3835 = vmatmul.mubr.bf16.gmra.mxu0 %v3179
        %v3836 = vpop.f32.mrf.mxu0
        %v3837 = vadd.f32 %v3019, %v3836
        %v3838 = vpop.f32.mrf.mxu0
        %v3839 = vpop.f32.mrf.mxu0
        %v3840 = vadd.f32 %v3019, %v3839
        %v3841 = vpop.f32.mrf.mxu0
        %3842 = vmatprep.mubr.bf16.mxu0 0
        %3843 = vmatmul.mubr.bf16.gmra.mxu0 %v3182
        %v3844 = vpop.f32.mrf.mxu0
        %v3845 = vadd.f32 %v3019, %v3844
        %v3846 = vpop.f32.mrf.mxu0
        %v3847 = vpop.f32.mrf.mxu0
        %v3848 = vadd.f32 %v3019, %v3847
        %v3849 = vpop.f32.mrf.mxu0
        %3850 = vmatprep.mubr.bf16.mxu0 0
        %3851 = vmatmul.mubr.bf16.gmra.mxu0 %v3185
        %v3852 = vpop.f32.mrf.mxu0
        %v3853 = vadd.f32 %v3019, %v3852
        %v3854 = vpop.f32.mrf.mxu0
        %v3855 = vpop.f32.mrf.mxu0
        %v3856 = vadd.f32 %v3019, %v3855
        %v3857 = vpop.f32.mrf.mxu0
        %3858 = vmatprep.mubr.bf16.mxu0 0
        %3859 = vmatmul.mubr.bf16.gmra.mxu0 %v3188
        %v3860 = vpop.f32.mrf.mxu0
        %v3861 = vadd.f32 %v3019, %v3860
        %v3862 = vpop.f32.mrf.mxu0
        %v3863 = vpop.f32.mrf.mxu0
        %v3864 = vadd.f32 %v3019, %v3863
        %v3865 = vpop.f32.mrf.mxu0
        %3866 = vmatprep.mubr.bf16.mxu0 0
        %3867 = vmatmul.mubr.bf16.gmra.mxu0 %v3191
        %v3868 = vpop.f32.mrf.mxu0
        %v3869 = vadd.f32 %v3019, %v3868
        %v3870 = vpop.f32.mrf.mxu0
        %v3871 = vpop.f32.mrf.mxu0
        %v3872 = vadd.f32 %v3019, %v3871
        %v3873 = vpop.f32.mrf.mxu0
        %3874 = vmatprep.mubr.bf16.mxu0 0
        %3875 = vmatmul.mubr.bf16.gmra.mxu0 %v3194
        %v3876 = vpop.f32.mrf.mxu0
        %v3877 = vadd.f32 %v3019, %v3876
        %v3878 = vpop.f32.mrf.mxu0
        %v3879 = vpop.f32.mrf.mxu0
        %v3880 = vadd.f32 %v3019, %v3879
        %v3881 = vpop.f32.mrf.mxu0
        %3882 = vmatprep.mubr.bf16.mxu0 0
        %3883 = vmatmul.mubr.bf16.gmra.mxu0 %v3197
        %v3884 = vpop.f32.mrf.mxu0
        %v3885 = vadd.f32 %v3019, %v3884
        %v3886 = vpop.f32.mrf.mxu0
        %v3887 = vpop.f32.mrf.mxu0
        %v3888 = vadd.f32 %v3019, %v3887
        %v3889 = vpop.f32.mrf.mxu0
        %3890 = vmatprep.mubr.bf16.mxu0 0
        %3891 = vmatmul.mubr.bf16.gmra.mxu0 %v3200
        %v3892 = vpop.f32.mrf.mxu0
        %v3893 = vadd.f32 %v3019, %v3892
        %v3894 = vpop.f32.mrf.mxu0
        %v3895 = vpop.f32.mrf.mxu0
        %v3896 = vadd.f32 %v3019, %v3895
        %v3897 = vpop.f32.mrf.mxu0
        %3898 = vmatprep.mubr.bf16.mxu0 0
        %3899 = vmatmul.mubr.bf16.gmra.mxu0 %v3203
        %v3900 = vpop.f32.mrf.mxu0
        %v3901 = vadd.f32 %v3019, %v3900
        %v3902 = vpop.f32.mrf.mxu0
        %v3903 = vpop.f32.mrf.mxu0
        %v3904 = vadd.f32 %v3019, %v3903
        %v3905 = vpop.f32.mrf.mxu0
        %3906 = vmatprep.mubr.bf16.mxu0 0
        %3907 = vmatmul.mubr.bf16.gmra.mxu0 %v3206
        %v3908 = vpop.f32.mrf.mxu0
        %v3909 = vadd.f32 %v3019, %v3908
        %v3910 = vpop.f32.mrf.mxu0
        %v3911 = vpop.f32.mrf.mxu0
        %v3912 = vadd.f32 %v3019, %v3911
        %v3913 = vpop.f32.mrf.mxu0
        %3914 = vmatprep.mubr.bf16.mxu0 0
        %3915 = vmatmul.mubr.bf16.gmra.mxu0 %v3209
        %v3916 = vpop.f32.mrf.mxu0
        %v3917 = vadd.f32 %v3019, %v3916
        %v3918 = vpop.f32.mrf.mxu0
        %v3919 = vpop.f32.mrf.mxu0
        %v3920 = vadd.f32 %v3019, %v3919
        %v3921 = vpop.f32.mrf.mxu0
        %3922 = vmatprep.mubr.bf16.mxu0 0
        %3923 = vmatmul.mubr.bf16.gmra.mxu0 %v3212
        %v3924 = vpop.f32.mrf.mxu0
        %v3925 = vadd.f32 %v3019, %v3924
        %v3926 = vpop.f32.mrf.mxu0
        %v3927 = vpop.f32.mrf.mxu0
        %v3928 = vadd.f32 %v3019, %v3927
        %v3929 = vpop.f32.mrf.mxu0
        %3930 = vmatprep.mubr.bf16.mxu0 0
        %3931 = vmatmul.mubr.bf16.gmra.mxu0 %v3215
        %v3932 = vpop.f32.mrf.mxu0
        %v3933 = vadd.f32 %v3019, %v3932
        %v3934 = vpop.f32.mrf.mxu0
        %v3935 = vpop.f32.mrf.mxu0
        %v3936 = vadd.f32 %v3019, %v3935
        %v3937 = vpop.f32.mrf.mxu0
        %3938 = vmatprep.mubr.bf16.mxu0 0
        %3939 = vmatmul.mubr.bf16.gmra.mxu0 %v3218
        %v3940 = vpop.f32.mrf.mxu0
        %v3941 = vadd.f32 %v3019, %v3940
        %v3942 = vpop.f32.mrf.mxu0
        %v3943 = vpop.f32.mrf.mxu0
        %v3944 = vadd.f32 %v3019, %v3943
        %v3945 = vpop.f32.mrf.mxu0
        %3946 = vmatprep.mubr.bf16.mxu0 0
        %3947 = vmatmul.mubr.bf16.gmra.mxu0 %v3221
        %v3948 = vpop.f32.mrf.mxu0
        %v3949 = vadd.f32 %v3019, %v3948
        %v3950 = vpop.f32.mrf.mxu0
        %v3951 = vpop.f32.mrf.mxu0
        %v3952 = vadd.f32 %v3019, %v3951
        %v3953 = vpop.f32.mrf.mxu0
        %3954 = vmatprep.mubr.bf16.mxu0 0
        %3955 = vmatmul.mubr.bf16.gmra.mxu0 %v3224
        %v3956 = vpop.f32.mrf.mxu0
        %v3957 = vadd.f32 %v3019, %v3956
        %v3958 = vpop.f32.mrf.mxu0
        %v3959 = vpop.f32.mrf.mxu0
        %v3960 = vadd.f32 %v3019, %v3959
        %v3961 = vpop.f32.mrf.mxu0
        %3962 = vmatprep.mubr.bf16.mxu0 0
        %3963 = vmatmul.mubr.bf16.gmra.mxu0 %v3227
        %v3964 = vpop.f32.mrf.mxu0
        %v3965 = vadd.f32 %v3019, %v3964
        %v3966 = vpop.f32.mrf.mxu0
        %v3967 = vpop.f32.mrf.mxu0
        %v3968 = vadd.f32 %v3019, %v3967
        %v3969 = vpop.f32.mrf.mxu0
        %3970 = vmatprep.mubr.bf16.mxu0 0
        %3971 = vmatmul.mubr.bf16.gmra.mxu0 %v3230
        %v3972 = vpop.f32.mrf.mxu0
        %v3973 = vadd.f32 %v3019, %v3972
        %v3974 = vpop.f32.mrf.mxu0
        %v3975 = vpop.f32.mrf.mxu0
        %v3976 = vadd.f32 %v3019, %v3975
        %v3977 = vpop.f32.mrf.mxu0
        %3978 = vmatprep.mubr.bf16.mxu0 0
        %3979 = vmatmul.mubr.bf16.gmra.mxu0 %v3233
        %v3980 = vpop.f32.mrf.mxu0
        %v3981 = vadd.f32 %v3019, %v3980
        %v3982 = vpop.f32.mrf.mxu0
        %v3983 = vpop.f32.mrf.mxu0
        %v3984 = vadd.f32 %v3019, %v3983
        %v3985 = vpop.f32.mrf.mxu0
        %3986 = vmatprep.mubr.bf16.mxu0 0
        %3987 = vmatmul.mubr.bf16.gmra.mxu0 %v3236
        %v3988 = vpop.f32.mrf.mxu0
        %v3989 = vadd.f32 %v3019, %v3988
        %v3990 = vpop.f32.mrf.mxu0
        %v3991 = vpop.f32.mrf.mxu0
        %v3992 = vadd.f32 %v3019, %v3991
        %v3993 = vpop.f32.mrf.mxu0
        %3994 = vmatprep.mubr.bf16.mxu0 0
        %3995 = vmatmul.mubr.bf16.gmra.mxu0 %v3239
        %v3996 = vpop.f32.mrf.mxu0
        %v3997 = vadd.f32 %v3019, %v3996
        %v3998 = vpop.f32.mrf.mxu0
        %v3999 = vpop.f32.mrf.mxu0
        %v4000 = vadd.f32 %v3019, %v3999
        %v4001 = vpop.f32.mrf.mxu0
        %4002 = vmatprep.mubr.bf16.mxu0 0
        %4003 = vmatmul.mubr.bf16.gmra.mxu0 %v3242
        %v4004 = vpop.f32.mrf.mxu0
        %v4005 = vadd.f32 %v3019, %v4004
        %v4006 = vpop.f32.mrf.mxu0
        %v4007 = vpop.f32.mrf.mxu0
        %v4008 = vadd.f32 %v3019, %v4007
        %v4009 = vpop.f32.mrf.mxu0
        %4010 = vmatprep.mubr.bf16.mxu0 0
        %4011 = vmatmul.mubr.bf16.gmra.mxu0 %v3245
        %v4012 = vpop.f32.mrf.mxu0
        %v4013 = vadd.f32 %v3019, %v4012
        %v4014 = vpop.f32.mrf.mxu0
        %v4015 = vpop.f32.mrf.mxu0
        %v4016 = vadd.f32 %v3019, %v4015
        %v4017 = vpop.f32.mrf.mxu0
        %4018 = vmatprep.mubr.bf16.mxu0 0
        %4019 = vmatmul.mubr.bf16.gmra.mxu0 %v3248
        %v4020 = vpop.f32.mrf.mxu0
        %v4021 = vadd.f32 %v3019, %v4020
        %v4022 = vpop.f32.mrf.mxu0
        %v4023 = vpop.f32.mrf.mxu0
        %v4024 = vadd.f32 %v3019, %v4023
        %v4025 = vpop.f32.mrf.mxu0
        %4026 = vmatprep.mubr.bf16.mxu0 0
        %4027 = vmatmul.mubr.bf16.gmra.mxu0 %v3251
        %v4028 = vpop.f32.mrf.mxu0
        %v4029 = vadd.f32 %v3019, %v4028
        %v4030 = vpop.f32.mrf.mxu0
        %v4031 = vpop.f32.mrf.mxu0
        %v4032 = vadd.f32 %v3019, %v4031
        %v4033 = vpop.f32.mrf.mxu0
        %4034 = vmatprep.mubr.bf16.mxu0 0
        %4035 = vmatmul.mubr.bf16.gmra.mxu0 %v3254
        %v4036 = vpop.f32.mrf.mxu0
        %v4037 = vadd.f32 %v3019, %v4036
        %v4038 = vpop.f32.mrf.mxu0
        %v4039 = vpop.f32.mrf.mxu0
        %v4040 = vadd.f32 %v3019, %v4039
        %v4041 = vpop.f32.mrf.mxu0
        %4042 = vmatprep.mubr.bf16.mxu0 0
        %4043 = vmatmul.mubr.bf16.gmra.mxu0 %v3257
        %v4044 = vpop.f32.mrf.mxu0
        %v4045 = vadd.f32 %v3019, %v4044
        %v4046 = vpop.f32.mrf.mxu0
        %v4047 = vpop.f32.mrf.mxu0
        %v4048 = vadd.f32 %v3019, %v4047
        %v4049 = vpop.f32.mrf.mxu0
        %4050 = vmatprep.mubr.bf16.mxu0 0
        %4051 = vmatmul.mubr.bf16.gmra.mxu0 %v3260
        %v4052 = vpop.f32.mrf.mxu0
        %v4053 = vadd.f32 %v3019, %v4052
        %v4054 = vpop.f32.mrf.mxu0
        %v4055 = vpop.f32.mrf.mxu0
        %v4056 = vadd.f32 %v3019, %v4055
        %v4057 = vpop.f32.mrf.mxu0
        %4058 = vmatprep.mubr.bf16.mxu0 0
        %4059 = vmatmul.mubr.bf16.gmra.mxu0 %v3263
        %v4060 = vpop.f32.mrf.mxu0
        %v4061 = vadd.f32 %v3019, %v4060
        %v4062 = vpop.f32.mrf.mxu0
        %v4063 = vpop.f32.mrf.mxu0
        %v4064 = vadd.f32 %v3019, %v4063
        %v4065 = vpop.f32.mrf.mxu0
        %4066 = vmatprep.mubr.bf16.mxu0 0
        %4067 = vmatmul.mubr.bf16.gmra.mxu0 %v3266
        %v4068 = vpop.f32.mrf.mxu0
        %v4069 = vadd.f32 %v3019, %v4068
        %v4070 = vpop.f32.mrf.mxu0
        %v4071 = vpop.f32.mrf.mxu0
        %v4072 = vadd.f32 %v3019, %v4071
        %v4073 = vpop.f32.mrf.mxu0
        %4074 = vmatprep.mubr.bf16.mxu0 0
        %4075 = vmatmul.mubr.bf16.gmra.mxu0 %v3269
        %v4076 = vpop.f32.mrf.mxu0
        %v4077 = vadd.f32 %v3019, %v4076
        %v4078 = vpop.f32.mrf.mxu0
        %v4079 = vpop.f32.mrf.mxu0
        %v4080 = vadd.f32 %v3019, %v4079
        %v4081 = vpop.f32.mrf.mxu0
        %4082 = vmatprep.mubr.bf16.mxu0 0
        %4083 = vmatmul.mubr.bf16.gmra.mxu0 %v3272
        %v4084 = vpop.f32.mrf.mxu0
        %v4085 = vadd.f32 %v3019, %v4084
        %v4086 = vpop.f32.mrf.mxu0
        %v4087 = vpop.f32.mrf.mxu0
        %v4088 = vadd.f32 %v3019, %v4087
        %v4089 = vpop.f32.mrf.mxu0
        %4090 = vmatprep.mubr.bf16.mxu0 0
        %4091 = vmatmul.mubr.bf16.gmra.mxu0 %v3275
        %v4092 = vpop.f32.mrf.mxu0
        %v4093 = vadd.f32 %v3019, %v4092
        %v4094 = vpop.f32.mrf.mxu0
        %v4095 = vpop.f32.mrf.mxu0
        %v4096 = vadd.f32 %v3019, %v4095
        %v4097 = vpop.f32.mrf.mxu0
        %4098 = vmatprep.mubr.bf16.mxu0 0
        %4099 = vmatmul.mubr.bf16.gmra.mxu0 %v3278
        %v4100 = vpop.f32.mrf.mxu0
        %v4101 = vadd.f32 %v3019, %v4100
        %v4102 = vpop.f32.mrf.mxu0
        %v4103 = vpop.f32.mrf.mxu0
        %v4104 = vadd.f32 %v3019, %v4103
        %v4105 = vpop.f32.mrf.mxu0
        %4106 = vmatprep.mubr.bf16.mxu0 0
        %4107 = vmatmul.mubr.bf16.gmra.mxu0 %v3281
        %v4108 = vpop.f32.mrf.mxu0
        %v4109 = vadd.f32 %v3019, %v4108
        %v4110 = vpop.f32.mrf.mxu0
        %v4111 = vpop.f32.mrf.mxu0
        %v4112 = vadd.f32 %v3019, %v4111
        %v4113 = vpop.f32.mrf.mxu0
        %4114 = vmatprep.mubr.bf16.mxu0 0
        %4115 = vmatmul.mubr.bf16.gmra.mxu0 %v3284
        %v4116 = vpop.f32.mrf.mxu0
        %v4117 = vadd.f32 %v3019, %v4116
        %v4118 = vpop.f32.mrf.mxu0
        %v4119 = vpop.f32.mrf.mxu0
        %v4120 = vadd.f32 %v3019, %v4119
        %v4121 = vpop.f32.mrf.mxu0
        %4122 = vmatprep.mubr.bf16.mxu0 0
        %4123 = vmatmul.mubr.bf16.gmra.mxu0 %v3287
        %v4124 = vpop.f32.mrf.mxu0
        %v4125 = vadd.f32 %v3019, %v4124
        %v4126 = vpop.f32.mrf.mxu0
        %v4127 = vpop.f32.mrf.mxu0
        %v4128 = vadd.f32 %v3019, %v4127
        %v4129 = vpop.f32.mrf.mxu0
        %4130 = vmatprep.mubr.bf16.mxu0 0
        %4131 = vmatmul.mubr.bf16.gmra.mxu0 %v3290
        %v4132 = vpop.f32.mrf.mxu0
        %v4133 = vadd.f32 %v3019, %v4132
        %v4134 = vpop.f32.mrf.mxu0
        %v4135 = vpop.f32.mrf.mxu0
        %v4136 = vadd.f32 %v3019, %v4135
        %v4137 = vpop.f32.mrf.mxu0
        %4138 = vmatprep.mubr.bf16.mxu0 0
        %4139 = vmatmul.mubr.bf16.gmra.mxu0 %v3293
        %v4140 = vpop.f32.mrf.mxu0
        %v4141 = vadd.f32 %v3019, %v4140
        %v4142 = vpop.f32.mrf.mxu0
        %v4143 = vpop.f32.mrf.mxu0
        %v4144 = vadd.f32 %v3019, %v4143
        %v4145 = vpop.f32.mrf.mxu0
        %4146 = vmatprep.mubr.bf16.mxu0 0
        %4147 = vmatmul.mubr.bf16.gmra.mxu0 %v3296
        %v4148 = vpop.f32.mrf.mxu0
        %v4149 = vadd.f32 %v3019, %v4148
        %v4150 = vpop.f32.mrf.mxu0
        %v4151 = vpop.f32.mrf.mxu0
        %v4152 = vadd.f32 %v3019, %v4151
        %v4153 = vpop.f32.mrf.mxu0
        %4154 = vmatprep.mubr.bf16.mxu0 0
        %4155 = vmatmul.mubr.bf16.gmra.mxu0 %v3299
        %v4156 = vpop.f32.mrf.mxu0
        %v4157 = vadd.f32 %v3019, %v4156
        %v4158 = vpop.f32.mrf.mxu0
        %v4159 = vpop.f32.mrf.mxu0
        %v4160 = vadd.f32 %v3019, %v4159
        %v4161 = vpop.f32.mrf.mxu0
        %4162 = vmatprep.mubr.bf16.mxu0 0
        %4163 = vmatmul.mubr.bf16.gmra.mxu0 %v3302
        %v4164 = vpop.f32.mrf.mxu0
        %v4165 = vadd.f32 %v3019, %v4164
        %v4166 = vpop.f32.mrf.mxu0
        %v4167 = vpop.f32.mrf.mxu0
        %v4168 = vadd.f32 %v3019, %v4167
        %v4169 = vpop.f32.mrf.mxu0
        %4170 = vmatprep.mubr.bf16.mxu0 0
        %4171 = vmatmul.mubr.bf16.gmra.mxu0 %v3305
        %v4172 = vpop.f32.mrf.mxu0
        %v4173 = vadd.f32 %v3019, %v4172
        %v4174 = vpop.f32.mrf.mxu0
        %v4175 = vpop.f32.mrf.mxu0
        %v4176 = vadd.f32 %v3019, %v4175
        %v4177 = vpop.f32.mrf.mxu0
        %4178 = vmatprep.mubr.bf16.mxu0 0
        %4179 = vmatmul.mubr.bf16.gmra.mxu0 %v3308
        %v4180 = vpop.f32.mrf.mxu0
        %v4181 = vadd.f32 %v3019, %v4180
        %v4182 = vpop.f32.mrf.mxu0
        %v4183 = vpop.f32.mrf.mxu0
        %v4184 = vadd.f32 %v3019, %v4183
        %v4185 = vpop.f32.mrf.mxu0
        %4186 = vmatprep.mubr.bf16.mxu0 0
        %4187 = vmatmul.mubr.bf16.gmra.mxu0 %v3311
        %v4188 = vpop.f32.mrf.mxu0
        %v4189 = vadd.f32 %v3019, %v4188
        %v4190 = vpop.f32.mrf.mxu0
        %v4191 = vpop.f32.mrf.mxu0
        %v4192 = vadd.f32 %v3019, %v4191
        %v4193 = vpop.f32.mrf.mxu0
        %4194 = vmatprep.mubr.bf16.mxu0 0
        %4195 = vmatmul.mubr.bf16.gmra.mxu0 %v3314
        %v4196 = vpop.f32.mrf.mxu0
        %v4197 = vadd.f32 %v3019, %v4196
        %v4198 = vpop.f32.mrf.mxu0
        %v4199 = vpop.f32.mrf.mxu0
        %v4200 = vadd.f32 %v3019, %v4199
        %v4201 = vpop.f32.mrf.mxu0
        %4202 = vmatprep.mubr.bf16.mxu0 0
        %4203 = vmatmul.mubr.bf16.gmra.mxu0 %v3317
        %v4204 = vpop.f32.mrf.mxu0
        %v4205 = vadd.f32 %v3019, %v4204
        %v4206 = vpop.f32.mrf.mxu0
        %v4207 = vpop.f32.mrf.mxu0
        %v4208 = vadd.f32 %v3019, %v4207
        %v4209 = vpop.f32.mrf.mxu0
        %4210 = vmatprep.mubr.bf16.mxu0 0
        %4211 = vmatmul.mubr.bf16.gmra.mxu0 %v3320
        %v4212 = vpop.f32.mrf.mxu0
        %v4213 = vadd.f32 %v3019, %v4212
        %v4214 = vpop.f32.mrf.mxu0
        %v4215 = vpop.f32.mrf.mxu0
        %v4216 = vadd.f32 %v3019, %v4215
        %v4217 = vpop.f32.mrf.mxu0
        %4218 = vmatprep.mubr.bf16.mxu0 0
        %4219 = vmatmul.mubr.bf16.gmra.mxu0 %v3323
        %v4220 = vpop.f32.mrf.mxu0
        %v4221 = vadd.f32 %v3019, %v4220
        %v4222 = vpop.f32.mrf.mxu0
        %v4223 = vpop.f32.mrf.mxu0
        %v4224 = vadd.f32 %v3019, %v4223
        %v4225 = vpop.f32.mrf.mxu0
        %4226 = vmatprep.mubr.bf16.mxu0 0
        %4227 = vmatmul.mubr.bf16.gmra.mxu0 %v3326
        %v4228 = vpop.f32.mrf.mxu0
        %v4229 = vadd.f32 %v3019, %v4228
        %v4230 = vpop.f32.mrf.mxu0
        %v4231 = vpop.f32.mrf.mxu0
        %v4232 = vadd.f32 %v3019, %v4231
        %v4233 = vpop.f32.mrf.mxu0
        %4234 = vmatprep.mubr.bf16.mxu0 0
        %4235 = vmatmul.mubr.bf16.gmra.mxu0 %v3329
        %v4236 = vpop.f32.mrf.mxu0
        %v4237 = vadd.f32 %v3019, %v4236
        %v4238 = vpop.f32.mrf.mxu0
        %v4239 = vpop.f32.mrf.mxu0
        %v4240 = vadd.f32 %v3019, %v4239
        %v4241 = vpop.f32.mrf.mxu0
        %4242 = vmatprep.mubr.bf16.mxu0 0
        %4243 = vmatmul.mubr.bf16.gmra.mxu0 %v3332
        %v4244 = vpop.f32.mrf.mxu0
        %v4245 = vadd.f32 %v3019, %v4244
        %v4246 = vpop.f32.mrf.mxu0
        %v4247 = vpop.f32.mrf.mxu0
        %v4248 = vadd.f32 %v3019, %v4247
        %v4249 = vpop.f32.mrf.mxu0
        %4250 = vmatprep.mubr.bf16.mxu0 0
        %4251 = vmatmul.mubr.bf16.gmra.mxu0 %v3335
        %v4252 = vpop.f32.mrf.mxu0
        %v4253 = vadd.f32 %v3019, %v4252
        %v4254 = vpop.f32.mrf.mxu0
        %v4255 = vpop.f32.mrf.mxu0
        %v4256 = vadd.f32 %v3019, %v4255
        %v4257 = vpop.f32.mrf.mxu0
        %4258 = vmatprep.mubr.bf16.mxu0 0
        %4259 = vmatmul.mubr.bf16.gmra.mxu0 %v3338
        %v4260 = vpop.f32.mrf.mxu0
        %v4261 = vadd.f32 %v3019, %v4260
        %v4262 = vpop.f32.mrf.mxu0
        %v4263 = vpop.f32.mrf.mxu0
        %v4264 = vadd.f32 %v3019, %v4263
        %v4265 = vpop.f32.mrf.mxu0
        %4266 = vmatprep.mubr.bf16.mxu0 0
        %4267 = vmatmul.mubr.bf16.gmra.mxu0 %v3341
        %v4268 = vpop.f32.mrf.mxu0
        %v4269 = vadd.f32 %v3019, %v4268
        %v4270 = vpop.f32.mrf.mxu0
        %v4271 = vpop.f32.mrf.mxu0
        %v4272 = vadd.f32 %v3019, %v4271
        %v4273 = vpop.f32.mrf.mxu0
        %4274 = vmatprep.mubr.bf16.mxu0 0
        %4275 = vmatmul.mubr.bf16.gmra.mxu0 %v3344
        %v4276 = vpop.f32.mrf.mxu0
        %v4277 = vadd.f32 %v3019, %v4276
        %v4278 = vpop.f32.mrf.mxu0
        %v4279 = vpop.f32.mrf.mxu0
        %v4280 = vadd.f32 %v3019, %v4279
        %v4281 = vpop.f32.mrf.mxu0
        %4282 = vmatprep.mubr.bf16.mxu0 0
        %4283 = vmatmul.mubr.bf16.gmra.mxu0 %v3347
        %v4284 = vpop.f32.mrf.mxu0
        %v4285 = vadd.f32 %v3019, %v4284
        %v4286 = vpop.f32.mrf.mxu0
        %v4287 = vpop.f32.mrf.mxu0
        %v4288 = vadd.f32 %v3019, %v4287
        %v4289 = vpop.f32.mrf.mxu0
        %4290 = vmatprep.mubr.bf16.mxu0 0
        %4291 = vmatmul.mubr.bf16.gmra.mxu0 %v3350
        %v4292 = vpop.f32.mrf.mxu0
        %v4293 = vadd.f32 %v3019, %v4292
        %v4294 = vpop.f32.mrf.mxu0
        %v4295 = vpop.f32.mrf.mxu0
        %v4296 = vadd.f32 %v3019, %v4295
        %v4297 = vpop.f32.mrf.mxu0
        %4298 = vmatprep.mubr.bf16.mxu0 0
        %4299 = vmatmul.mubr.bf16.gmra.mxu0 %v3353
        %v4300 = vpop.f32.mrf.mxu0
        %v4301 = vadd.f32 %v3019, %v4300
        %v4302 = vpop.f32.mrf.mxu0
        %v4303 = vpop.f32.mrf.mxu0
        %v4304 = vadd.f32 %v3019, %v4303
        %v4305 = vpop.f32.mrf.mxu0
        %4306 = vmatprep.mubr.bf16.mxu0 0
        %4307 = vmatmul.mubr.bf16.gmra.mxu0 %v3356
        %v4308 = vpop.f32.mrf.mxu0
        %v4309 = vadd.f32 %v3019, %v4308
        %v4310 = vpop.f32.mrf.mxu0
        %v4311 = vpop.f32.mrf.mxu0
        %v4312 = vadd.f32 %v3019, %v4311
        %v4313 = vpop.f32.mrf.mxu0
        %4314 = vmatprep.mubr.bf16.mxu0 0
        %4315 = vmatmul.mubr.bf16.gmra.mxu0 %v3359
        %v4316 = vpop.f32.mrf.mxu0
        %v4317 = vadd.f32 %v3019, %v4316
        %v4318 = vpop.f32.mrf.mxu0
        %v4319 = vpop.f32.mrf.mxu0
        %v4320 = vadd.f32 %v3019, %v4319
        %v4321 = vpop.f32.mrf.mxu0
        %4322 = vmatprep.mubr.bf16.mxu0 0
        %4323 = vmatmul.mubr.bf16.gmra.mxu0 %v3362
        %v4324 = vpop.f32.mrf.mxu0
        %v4325 = vadd.f32 %v3019, %v4324
        %v4326 = vpop.f32.mrf.mxu0
        %v4327 = vpop.f32.mrf.mxu0
        %v4328 = vadd.f32 %v3019, %v4327
        %v4329 = vpop.f32.mrf.mxu0
        %4330 = vmatprep.mubr.bf16.mxu0 0
        %4331 = vmatmul.mubr.bf16.gmra.mxu0 %v3365
        %v4332 = vpop.f32.mrf.mxu0
        %v4333 = vadd.f32 %v3019, %v4332
        %v4334 = vpop.f32.mrf.mxu0
        %v4335 = vpop.f32.mrf.mxu0
        %v4336 = vadd.f32 %v3019, %v4335
        %v4337 = vpop.f32.mrf.mxu0
        %4338 = vmatprep.mubr.bf16.mxu0 0
        %4339 = vmatmul.mubr.bf16.gmra.mxu0 %v3368
        %v4340 = vpop.f32.mrf.mxu0
        %v4341 = vadd.f32 %v3019, %v4340
        %v4342 = vpop.f32.mrf.mxu0
        %v4343 = vpop.f32.mrf.mxu0
        %v4344 = vadd.f32 %v3019, %v4343
        %v4345 = vpop.f32.mrf.mxu0
        %4346 = vmatprep.mubr.bf16.mxu0 0
        %4347 = vmatmul.mubr.bf16.gmra.mxu0 %v3371
        %v4348 = vpop.f32.mrf.mxu0
        %v4349 = vadd.f32 %v3019, %v4348
        %v4350 = vpop.f32.mrf.mxu0
        %v4351 = vpop.f32.mrf.mxu0
        %v4352 = vadd.f32 %v3019, %v4351
        %v4353 = vpop.f32.mrf.mxu0
        %4354 = vmatprep.mubr.bf16.mxu0 0
        %4355 = vmatmul.mubr.bf16.gmra.mxu0 %v3374
        %v4356 = vpop.f32.mrf.mxu0
        %v4357 = vadd.f32 %v3019, %v4356
        %v4358 = vpop.f32.mrf.mxu0
        %v4359 = vpop.f32.mrf.mxu0
        %v4360 = vadd.f32 %v3019, %v4359
        %v4361 = vpop.f32.mrf.mxu0
        %4362 = vmatprep.mubr.bf16.mxu0 0
        %4363 = vmatmul.mubr.bf16.gmra.mxu0 %v3377
        %v4364 = vpop.f32.mrf.mxu0
        %v4365 = vadd.f32 %v3019, %v4364
        %v4366 = vpop.f32.mrf.mxu0
        %v4367 = vpop.f32.mrf.mxu0
        %v4368 = vadd.f32 %v3019, %v4367
        %v4369 = vpop.f32.mrf.mxu0
        %4370 = vmatprep.mubr.bf16.mxu0 0
        %4371 = vmatmul.mubr.bf16.gmra.mxu0 %v3380
        %v4372 = vpop.f32.mrf.mxu0
        %v4373 = vadd.f32 %v3019, %v4372
        %v4374 = vpop.f32.mrf.mxu0
        %v4375 = vpop.f32.mrf.mxu0
        %v4376 = vadd.f32 %v3019, %v4375
        %v4377 = vpop.f32.mrf.mxu0
        %4378 = vmatprep.mubr.bf16.mxu0 0
        %4379 = vmatmul.mubr.bf16.gmra.mxu0 %v3383
        %v4380 = vpop.f32.mrf.mxu0
        %v4381 = vadd.f32 %v3019, %v4380
        %v4382 = vpop.f32.mrf.mxu0
        %v4383 = vpop.f32.mrf.mxu0
        %v4384 = vadd.f32 %v3019, %v4383
        %v4385 = vpop.f32.mrf.mxu0
        %4386 = vmatprep.mubr.bf16.mxu0 0
        %4387 = vmatmul.mubr.bf16.gmra.mxu0 %v3386
        %v4388 = vpop.f32.mrf.mxu0
        %v4389 = vadd.f32 %v3019, %v4388
        %v4390 = vpop.f32.mrf.mxu0
        %v4391 = vpop.f32.mrf.mxu0
        %v4392 = vadd.f32 %v3019, %v4391
        %v4393 = vpop.f32.mrf.mxu0
        %4394 = vmatprep.mubr.bf16.mxu0 0
        %4395 = vmatmul.mubr.bf16.gmra.mxu0 %v3389
        %v4396 = vpop.f32.mrf.mxu0
        %v4397 = vadd.f32 %v3019, %v4396
        %v4398 = vpop.f32.mrf.mxu0
        %v4399 = vpop.f32.mrf.mxu0
        %v4400 = vadd.f32 %v3019, %v4399
        %v4401 = vpop.f32.mrf.mxu0
        %4402 = vmatprep.mubr.bf16.mxu0 0
        %4403 = vmatmul.mubr.bf16.gmra.mxu0 %v3392
        %v4404 = vpop.f32.mrf.mxu0
        %v4405 = vadd.f32 %v3019, %v4404
        %v4406 = vpop.f32.mrf.mxu0
        %v4407 = vpop.f32.mrf.mxu0
        %v4408 = vadd.f32 %v3019, %v4407
        %v4409 = vpop.f32.mrf.mxu0
        %4410 = vmatprep.mubr.bf16.mxu0 0
        %4411 = vmatmul.mubr.bf16.gmra.mxu0 %v3395
        %v4412 = vpop.f32.mrf.mxu0
        %v4413 = vadd.f32 %v3019, %v4412
        %v4414 = vpop.f32.mrf.mxu0
        %v4415 = vpop.f32.mrf.mxu0
        %v4416 = vadd.f32 %v3019, %v4415
        %v4417 = vpop.f32.mrf.mxu0
        %4418 = vmatprep.mubr.bf16.mxu0 0
        %4419 = vmatmul.mubr.bf16.gmra.mxu0 %v3398
        %v4420 = vpop.f32.mrf.mxu0
        %v4421 = vadd.f32 %v3019, %v4420
        %v4422 = vpop.f32.mrf.mxu0
        %v4423 = vpop.f32.mrf.mxu0
        %v4424 = vadd.f32 %v3019, %v4423
        %v4425 = vpop.f32.mrf.mxu0
        %4426 = vmatprep.mubr.bf16.mxu0 0
        %4427 = vmatmul.mubr.bf16.gmra.mxu0 %v3401
        %v4428 = vpop.f32.mrf.mxu0
        %v4429 = vadd.f32 %v3019, %v4428
        %v4430 = vpop.f32.mrf.mxu0
        %v4431 = vpop.f32.mrf.mxu0
        %v4432 = vadd.f32 %v3019, %v4431
        %v4433 = vpop.f32.mrf.mxu0
        %4434 = vmatprep.mubr.bf16.mxu0 0
        %4435 = vmatmul.mubr.bf16.gmra.mxu0 %v3404
        %v4436 = vpop.f32.mrf.mxu0
        %v4437 = vadd.f32 %v3019, %v4436
        %v4438 = vpop.f32.mrf.mxu0
        %v4439 = vpop.f32.mrf.mxu0
        %v4440 = vadd.f32 %v3019, %v4439
        %v4441 = vpop.f32.mrf.mxu0
        %4442 = vmatprep.mubr.bf16.mxu0 0
        %4443 = vmatmul.mubr.bf16.gmra.mxu0 %v3407
        %v4444 = vpop.f32.mrf.mxu0
        %v4445 = vadd.f32 %v3019, %v4444
        %v4446 = vpop.f32.mrf.mxu0
        %v4447 = vpop.f32.mrf.mxu0
        %v4448 = vadd.f32 %v3019, %v4447
        %v4449 = vpop.f32.mrf.mxu0
        %4450 = vmatprep.mubr.bf16.mxu0 0
        %4451 = vmatmul.mubr.bf16.gmra.mxu0 %v3410
        %v4452 = vpop.f32.mrf.mxu0
        %v4453 = vadd.f32 %v3019, %v4452
        %v4454 = vpop.f32.mrf.mxu0
        %v4455 = vpop.f32.mrf.mxu0
        %v4456 = vadd.f32 %v3019, %v4455
        %v4457 = vpop.f32.mrf.mxu0
        %4458 = vmatprep.mubr.bf16.mxu0 0
        %4459 = vmatmul.mubr.bf16.gmra.mxu0 %v3413
        %v4460 = vpop.f32.mrf.mxu0
        %v4461 = vadd.f32 %v3019, %v4460
        %v4462 = vpop.f32.mrf.mxu0
        %v4463 = vpop.f32.mrf.mxu0
        %v4464 = vadd.f32 %v3019, %v4463
        %v4465 = vpop.f32.mrf.mxu0
        %4466 = vmatprep.mubr.bf16.mxu0 0
        %4467 = vmatmul.mubr.bf16.gmra.mxu0 %v3416
        %v4468 = vpop.f32.mrf.mxu0
        %v4469 = vadd.f32 %v3019, %v4468
        %v4470 = vpop.f32.mrf.mxu0
        %v4471 = vpop.f32.mrf.mxu0
        %v4472 = vadd.f32 %v3019, %v4471
        %v4473 = vpop.f32.mrf.mxu0
        %4474 = vdwg.mxu0
        %v4475 = vmax.f32 %v3453, 0.0
        %v4476 = vmax.f32 %v3456, 0.0
        %v4477 = vmax.f32 %v3461, 0.0
        %v4478 = vmax.f32 %v3464, 0.0
        %v4479 = vmax.f32 %v3469, 0.0
        %v4480 = vmax.f32 %v3472, 0.0
        %v4481 = vmax.f32 %v3477, 0.0
        %v4482 = vmax.f32 %v3480, 0.0
        %v4483 = vmax.f32 %v3485, 0.0
        %v4484 = vmax.f32 %v3488, 0.0
        %v4485 = vmax.f32 %v3493, 0.0
        %v4486 = vmax.f32 %v3496, 0.0
        %v4487 = vmax.f32 %v3501, 0.0
        %v4488 = vmax.f32 %v3504, 0.0
        %v4489 = vmax.f32 %v3509, 0.0
        %v4490 = vmax.f32 %v3512, 0.0
        %v4491 = vmax.f32 %v3517, 0.0
        %v4492 = vmax.f32 %v3520, 0.0
        %v4493 = vmax.f32 %v3525, 0.0
        %v4494 = vmax.f32 %v3528, 0.0
        %v4495 = vmax.f32 %v3533, 0.0
        %v4496 = vmax.f32 %v3536, 0.0
        %v4497 = vmax.f32 %v3541, 0.0
        %v4498 = vmax.f32 %v3544, 0.0
        %v4499 = vmax.f32 %v3549, 0.0
        %v4500 = vmax.f32 %v3552, 0.0
        %v4501 = vmax.f32 %v3557, 0.0
        %v4502 = vmax.f32 %v3560, 0.0
        %v4503 = vmax.f32 %v3565, 0.0
        %v4504 = vmax.f32 %v3568, 0.0
        %v4505 = vmax.f32 %v3573, 0.0
        %v4506 = vmax.f32 %v3576, 0.0
        %v4507 = vmax.f32 %v3581, 0.0
        %v4508 = vmax.f32 %v3584, 0.0
        %v4509 = vmax.f32 %v3589, 0.0
        %v4510 = vmax.f32 %v3592, 0.0
        %v4511 = vmax.f32 %v3597, 0.0
        %v4512 = vmax.f32 %v3600, 0.0
        %v4513 = vmax.f32 %v3605, 0.0
        %v4514 = vmax.f32 %v3608, 0.0
        %v4515 = vmax.f32 %v3613, 0.0
        %v4516 = vmax.f32 %v3616, 0.0
        %v4517 = vmax.f32 %v3621, 0.0
        %v4518 = vmax.f32 %v3624, 0.0
        %v4519 = vmax.f32 %v3629, 0.0
        %v4520 = vmax.f32 %v3632, 0.0
        %v4521 = vmax.f32 %v3637, 0.0
        %v4522 = vmax.f32 %v3640, 0.0
        %v4523 = vmax.f32 %v3645, 0.0
        %v4524 = vmax.f32 %v3648, 0.0
        %v4525 = vmax.f32 %v3653, 0.0
        %v4526 = vmax.f32 %v3656, 0.0
        %v4527 = vmax.f32 %v3661, 0.0
        %v4528 = vmax.f32 %v3664, 0.0
        %v4529 = vmax.f32 %v3669, 0.0
        %v4530 = vmax.f32 %v3672, 0.0
        %v4531 = vmax.f32 %v3677, 0.0
        %v4532 = vmax.f32 %v3680, 0.0
        %v4533 = vmax.f32 %v3685, 0.0
        %v4534 = vmax.f32 %v3688, 0.0
        %v4535 = vmax.f32 %v3693, 0.0
        %v4536 = vmax.f32 %v3696, 0.0
        %v4537 = vmax.f32 %v3701, 0.0
        %v4538 = vmax.f32 %v3704, 0.0
        %v4539 = vmax.f32 %v3709, 0.0
        %v4540 = vmax.f32 %v3712, 0.0
        %v4541 = vmax.f32 %v3717, 0.0
        %v4542 = vmax.f32 %v3720, 0.0
        %v4543 = vmax.f32 %v3725, 0.0
        %v4544 = vmax.f32 %v3728, 0.0
        %v4545 = vmax.f32 %v3733, 0.0
        %v4546 = vmax.f32 %v3736, 0.0
        %v4547 = vmax.f32 %v3741, 0.0
        %v4548 = vmax.f32 %v3744, 0.0
        %v4549 = vmax.f32 %v3749, 0.0
        %v4550 = vmax.f32 %v3752, 0.0
        %v4551 = vmax.f32 %v3757, 0.0
        %v4552 = vmax.f32 %v3760, 0.0
        %v4553 = vmax.f32 %v3765, 0.0
        %v4554 = vmax.f32 %v3768, 0.0
        %v4555 = vmax.f32 %v3773, 0.0
        %v4556 = vmax.f32 %v3776, 0.0
        %v4557 = vmax.f32 %v3781, 0.0
        %v4558 = vmax.f32 %v3784, 0.0
        %v4559 = vmax.f32 %v3789, 0.0
        %v4560 = vmax.f32 %v3792, 0.0
        %v4561 = vmax.f32 %v3797, 0.0
        %v4562 = vmax.f32 %v3800, 0.0
        %v4563 = vmax.f32 %v3805, 0.0
        %v4564 = vmax.f32 %v3808, 0.0
        %v4565 = vmax.f32 %v3813, 0.0
        %v4566 = vmax.f32 %v3816, 0.0
        %v4567 = vmax.f32 %v3821, 0.0
        %v4568 = vmax.f32 %v3824, 0.0
        %v4569 = vmax.f32 %v3829, 0.0
        %v4570 = vmax.f32 %v3832, 0.0
        %v4571 = vmax.f32 %v3837, 0.0
        %v4572 = vmax.f32 %v3840, 0.0
        %v4573 = vmax.f32 %v3845, 0.0
        %v4574 = vmax.f32 %v3848, 0.0
        %v4575 = vmax.f32 %v3853, 0.0
        %v4576 = vmax.f32 %v3856, 0.0
        %v4577 = vmax.f32 %v3861, 0.0
        %v4578 = vmax.f32 %v3864, 0.0
        %v4579 = vmax.f32 %v3869, 0.0
        %v4580 = vmax.f32 %v3872, 0.0
        %v4581 = vmax.f32 %v3877, 0.0
        %v4582 = vmax.f32 %v3880, 0.0
        %v4583 = vmax.f32 %v3885, 0.0
        %v4584 = vmax.f32 %v3888, 0.0
        %v4585 = vmax.f32 %v3893, 0.0
        %v4586 = vmax.f32 %v3896, 0.0
        %v4587 = vmax.f32 %v3901, 0.0
        %v4588 = vmax.f32 %v3904, 0.0
        %v4589 = vmax.f32 %v3909, 0.0
        %v4590 = vmax.f32 %v3912, 0.0
        %v4591 = vmax.f32 %v3917, 0.0
        %v4592 = vmax.f32 %v3920, 0.0
        %v4593 = vmax.f32 %v3925, 0.0
        %v4594 = vmax.f32 %v3928, 0.0
        %v4595 = vmax.f32 %v3933, 0.0
        %v4596 = vmax.f32 %v3936, 0.0
        %v4597 = vmax.f32 %v3941, 0.0
        %v4598 = vmax.f32 %v3944, 0.0
        %v4599 = vmax.f32 %v3949, 0.0
        %v4600 = vmax.f32 %v3952, 0.0
        %v4601 = vmax.f32 %v3957, 0.0
        %v4602 = vmax.f32 %v3960, 0.0
        %v4603 = vmax.f32 %v3965, 0.0
        %v4604 = vmax.f32 %v3968, 0.0
        %v4605 = vmax.f32 %v3973, 0.0
        %v4606 = vmax.f32 %v3976, 0.0
        %v4607 = vmax.f32 %v3981, 0.0
        %v4608 = vmax.f32 %v3984, 0.0
        %v4609 = vmax.f32 %v3989, 0.0
        %v4610 = vmax.f32 %v3992, 0.0
        %v4611 = vmax.f32 %v3997, 0.0
        %v4612 = vmax.f32 %v4000, 0.0
        %v4613 = vmax.f32 %v4005, 0.0
        %v4614 = vmax.f32 %v4008, 0.0
        %v4615 = vmax.f32 %v4013, 0.0
        %v4616 = vmax.f32 %v4016, 0.0
        %v4617 = vmax.f32 %v4021, 0.0
        %v4618 = vmax.f32 %v4024, 0.0
        %v4619 = vmax.f32 %v4029, 0.0
        %v4620 = vmax.f32 %v4032, 0.0
        %v4621 = vmax.f32 %v4037, 0.0
        %v4622 = vmax.f32 %v4040, 0.0
        %v4623 = vmax.f32 %v4045, 0.0
        %v4624 = vmax.f32 %v4048, 0.0
        %v4625 = vmax.f32 %v4053, 0.0
        %v4626 = vmax.f32 %v4056, 0.0
        %v4627 = vmax.f32 %v4061, 0.0
        %v4628 = vmax.f32 %v4064, 0.0
        %v4629 = vmax.f32 %v4069, 0.0
        %v4630 = vmax.f32 %v4072, 0.0
        %v4631 = vmax.f32 %v4077, 0.0
        %v4632 = vmax.f32 %v4080, 0.0
        %v4633 = vmax.f32 %v4085, 0.0
        %v4634 = vmax.f32 %v4088, 0.0
        %v4635 = vmax.f32 %v4093, 0.0
        %v4636 = vmax.f32 %v4096, 0.0
        %v4637 = vmax.f32 %v4101, 0.0
        %v4638 = vmax.f32 %v4104, 0.0
        %v4639 = vmax.f32 %v4109, 0.0
        %v4640 = vmax.f32 %v4112, 0.0
        %v4641 = vmax.f32 %v4117, 0.0
        %v4642 = vmax.f32 %v4120, 0.0
        %v4643 = vmax.f32 %v4125, 0.0
        %v4644 = vmax.f32 %v4128, 0.0
        %v4645 = vmax.f32 %v4133, 0.0
        %v4646 = vmax.f32 %v4136, 0.0
        %v4647 = vmax.f32 %v4141, 0.0
        %v4648 = vmax.f32 %v4144, 0.0
        %v4649 = vmax.f32 %v4149, 0.0
        %v4650 = vmax.f32 %v4152, 0.0
        %v4651 = vmax.f32 %v4157, 0.0
        %v4652 = vmax.f32 %v4160, 0.0
        %v4653 = vmax.f32 %v4165, 0.0
        %v4654 = vmax.f32 %v4168, 0.0
        %v4655 = vmax.f32 %v4173, 0.0
        %v4656 = vmax.f32 %v4176, 0.0
        %v4657 = vmax.f32 %v4181, 0.0
        %v4658 = vmax.f32 %v4184, 0.0
        %v4659 = vmax.f32 %v4189, 0.0
        %v4660 = vmax.f32 %v4192, 0.0
        %v4661 = vmax.f32 %v4197, 0.0
        %v4662 = vmax.f32 %v4200, 0.0
        %v4663 = vmax.f32 %v4205, 0.0
        %v4664 = vmax.f32 %v4208, 0.0
        %v4665 = vmax.f32 %v4213, 0.0
        %v4666 = vmax.f32 %v4216, 0.0
        %v4667 = vmax.f32 %v4221, 0.0
        %v4668 = vmax.f32 %v4224, 0.0
        %v4669 = vmax.f32 %v4229, 0.0
        %v4670 = vmax.f32 %v4232, 0.0
        %v4671 = vmax.f32 %v4237, 0.0
        %v4672 = vmax.f32 %v4240, 0.0
        %v4673 = vmax.f32 %v4245, 0.0
        %v4674 = vmax.f32 %v4248, 0.0
        %v4675 = vmax.f32 %v4253, 0.0
        %v4676 = vmax.f32 %v4256, 0.0
        %v4677 = vmax.f32 %v4261, 0.0
        %v4678 = vmax.f32 %v4264, 0.0
        %v4679 = vmax.f32 %v4269, 0.0
        %v4680 = vmax.f32 %v4272, 0.0
        %v4681 = vmax.f32 %v4277, 0.0
        %v4682 = vmax.f32 %v4280, 0.0
        %v4683 = vmax.f32 %v4285, 0.0
        %v4684 = vmax.f32 %v4288, 0.0
        %v4685 = vmax.f32 %v4293, 0.0
        %v4686 = vmax.f32 %v4296, 0.0
        %v4687 = vmax.f32 %v4301, 0.0
        %v4688 = vmax.f32 %v4304, 0.0
        %v4689 = vmax.f32 %v4309, 0.0
        %v4690 = vmax.f32 %v4312, 0.0
        %v4691 = vmax.f32 %v4317, 0.0
        %v4692 = vmax.f32 %v4320, 0.0
        %v4693 = vmax.f32 %v4325, 0.0
        %v4694 = vmax.f32 %v4328, 0.0
        %v4695 = vmax.f32 %v4333, 0.0
        %v4696 = vmax.f32 %v4336, 0.0
        %v4697 = vmax.f32 %v4341, 0.0
        %v4698 = vmax.f32 %v4344, 0.0
        %v4699 = vmax.f32 %v4349, 0.0
        %v4700 = vmax.f32 %v4352, 0.0
        %v4701 = vmax.f32 %v4357, 0.0
        %v4702 = vmax.f32 %v4360, 0.0
        %v4703 = vmax.f32 %v4365, 0.0
        %v4704 = vmax.f32 %v4368, 0.0
        %v4705 = vmax.f32 %v4373, 0.0
        %v4706 = vmax.f32 %v4376, 0.0
        %v4707 = vmax.f32 %v4381, 0.0
        %v4708 = vmax.f32 %v4384, 0.0
        %v4709 = vmax.f32 %v4389, 0.0
        %v4710 = vmax.f32 %v4392, 0.0
        %v4711 = vmax.f32 %v4397, 0.0
        %v4712 = vmax.f32 %v4400, 0.0
        %v4713 = vmax.f32 %v4405, 0.0
        %v4714 = vmax.f32 %v4408, 0.0
        %v4715 = vmax.f32 %v4413, 0.0
        %v4716 = vmax.f32 %v4416, 0.0
        %v4717 = vmax.f32 %v4421, 0.0
        %v4718 = vmax.f32 %v4424, 0.0
        %v4719 = vmax.f32 %v4429, 0.0
        %v4720 = vmax.f32 %v4432, 0.0
        %v4721 = vmax.f32 %v4437, 0.0
        %v4722 = vmax.f32 %v4440, 0.0
        %v4723 = vmax.f32 %v4445, 0.0
        %v4724 = vmax.f32 %v4448, 0.0
        %v4725 = vmax.f32 %v4453, 0.0
        %v4726 = vmax.f32 %v4456, 0.0
        %v4727 = vmax.f32 %v4461, 0.0
        %v4728 = vmax.f32 %v4464, 0.0
        %v4729 = vmax.f32 %v4469, 0.0
        %v4730 = vmax.f32 %v4472, 0.0
        %v4731 = vld [vmem:[%s272] sm:$0xff]
        %v4732 = vld [vmem:[%s272 + $0x8] sm:$0xff]
        %v4733 = vld [vmem:[%s272 + $0x10] sm:$0xff]
        %v4734 = vld [vmem:[%s272 + $0x18] sm:$0xff]
        %v4735 = vlaneseq
        %v4736 = vshrl.u32 %v4735, 7
        %v4737 = vsub.s32 0, %v4736
        %v4738 = vrot.slane %v4731, %v4737
        %4740 = vbcast.lane.b32.xlu0 %v4738, 256
        %v4741 = vpop.permute.xlu0 %4740
        %s4743 = sor.u32 256, 8
        %4744 = vbcast.lane.b32.xlu0 %v4738, %s4743
        %v4745 = vpop.permute.xlu0 %4744
        %s4747 = sor.u32 256, 16
        %4748 = vbcast.lane.b32.xlu0 %v4738, %s4747
        %v4749 = vpop.permute.xlu0 %4748
        %s4751 = sor.u32 256, 24
        %4752 = vbcast.lane.b32.xlu0 %v4738, %s4751
        %v4753 = vpop.permute.xlu0 %4752
        %s4755 = sor.u32 256, 32
        %4756 = vbcast.lane.b32.xlu0 %v4738, %s4755
        %v4757 = vpop.permute.xlu0 %4756
        %s4759 = sor.u32 256, 40
        %4760 = vbcast.lane.b32.xlu0 %v4738, %s4759
        %v4761 = vpop.permute.xlu0 %4760
        %s4763 = sor.u32 256, 48
        %4764 = vbcast.lane.b32.xlu0 %v4738, %s4763
        %v4765 = vpop.permute.xlu0 %4764
        %s4767 = sor.u32 256, 56
        %4768 = vbcast.lane.b32.xlu0 %v4738, %s4767
        %v4769 = vpop.permute.xlu0 %4768
        %v4770 = vlaneseq
        %v4771 = vshrl.u32 %v4770, 7
        %v4772 = vsub.s32 1, %v4771
        %v4773 = vrot.slane %v4731, %v4772
        %4775 = vbcast.lane.b32.xlu0 %v4773, 256
        %v4776 = vpop.permute.xlu0 %4775
        %s4778 = sor.u32 256, 8
        %4779 = vbcast.lane.b32.xlu0 %v4773, %s4778
        %v4780 = vpop.permute.xlu0 %4779
        %s4782 = sor.u32 256, 16
        %4783 = vbcast.lane.b32.xlu0 %v4773, %s4782
        %v4784 = vpop.permute.xlu0 %4783
        %s4786 = sor.u32 256, 24
        %4787 = vbcast.lane.b32.xlu0 %v4773, %s4786
        %v4788 = vpop.permute.xlu0 %4787
        %s4790 = sor.u32 256, 32
        %4791 = vbcast.lane.b32.xlu0 %v4773, %s4790
        %v4792 = vpop.permute.xlu0 %4791
        %s4794 = sor.u32 256, 40
        %4795 = vbcast.lane.b32.xlu0 %v4773, %s4794
        %v4796 = vpop.permute.xlu0 %4795
        %s4798 = sor.u32 256, 48
        %4799 = vbcast.lane.b32.xlu0 %v4773, %s4798
        %v4800 = vpop.permute.xlu0 %4799
        %s4802 = sor.u32 256, 56
        %4803 = vbcast.lane.b32.xlu0 %v4773, %s4802
        %v4804 = vpop.permute.xlu0 %4803
        %v4805 = vlaneseq
        %v4806 = vshrl.u32 %v4805, 7
        %v4807 = vsub.s32 2, %v4806
        %v4808 = vrot.slane %v4731, %v4807
        %4810 = vbcast.lane.b32.xlu0 %v4808, 256
        %v4811 = vpop.permute.xlu0 %4810
        %s4813 = sor.u32 256, 8
        %4814 = vbcast.lane.b32.xlu0 %v4808, %s4813
        %v4815 = vpop.permute.xlu0 %4814
        %s4817 = sor.u32 256, 16
        %4818 = vbcast.lane.b32.xlu0 %v4808, %s4817
        %v4819 = vpop.permute.xlu0 %4818
        %s4821 = sor.u32 256, 24
        %4822 = vbcast.lane.b32.xlu0 %v4808, %s4821
        %v4823 = vpop.permute.xlu0 %4822
        %s4825 = sor.u32 256, 32
        %4826 = vbcast.lane.b32.xlu0 %v4808, %s4825
        %v4827 = vpop.permute.xlu0 %4826
        %s4829 = sor.u32 256, 40
        %4830 = vbcast.lane.b32.xlu0 %v4808, %s4829
        %v4831 = vpop.permute.xlu0 %4830
        %s4833 = sor.u32 256, 48
        %4834 = vbcast.lane.b32.xlu0 %v4808, %s4833
        %v4835 = vpop.permute.xlu0 %4834
        %s4837 = sor.u32 256, 56
        %4838 = vbcast.lane.b32.xlu0 %v4808, %s4837
        %v4839 = vpop.permute.xlu0 %4838
        %v4840 = vlaneseq
        %v4841 = vshrl.u32 %v4840, 7
        %v4842 = vsub.s32 3, %v4841
        %v4843 = vrot.slane %v4731, %v4842
        %4845 = vbcast.lane.b32.xlu0 %v4843, 256
        %v4846 = vpop.permute.xlu0 %4845
        %s4848 = sor.u32 256, 8
        %4849 = vbcast.lane.b32.xlu0 %v4843, %s4848
        %v4850 = vpop.permute.xlu0 %4849
        %s4852 = sor.u32 256, 16
        %4853 = vbcast.lane.b32.xlu0 %v4843, %s4852
        %v4854 = vpop.permute.xlu0 %4853
        %s4856 = sor.u32 256, 24
        %4857 = vbcast.lane.b32.xlu0 %v4843, %s4856
        %v4858 = vpop.permute.xlu0 %4857
        %s4860 = sor.u32 256, 32
        %4861 = vbcast.lane.b32.xlu0 %v4843, %s4860
        %v4862 = vpop.permute.xlu0 %4861
        %s4864 = sor.u32 256, 40
        %4865 = vbcast.lane.b32.xlu0 %v4843, %s4864
        %v4866 = vpop.permute.xlu0 %4865
        %s4868 = sor.u32 256, 48
        %4869 = vbcast.lane.b32.xlu0 %v4843, %s4868
        %v4870 = vpop.permute.xlu0 %4869
        %s4872 = sor.u32 256, 56
        %4873 = vbcast.lane.b32.xlu0 %v4843, %s4872
        %v4874 = vpop.permute.xlu0 %4873
        %v4875 = vlaneseq
        %v4876 = vshrl.u32 %v4875, 7
        %v4877 = vsub.s32 4, %v4876
        %v4878 = vrot.slane %v4731, %v4877
        %4880 = vbcast.lane.b32.xlu0 %v4878, 256
        %v4881 = vpop.permute.xlu0 %4880
        %s4883 = sor.u32 256, 8
        %4884 = vbcast.lane.b32.xlu0 %v4878, %s4883
        %v4885 = vpop.permute.xlu0 %4884
        %s4887 = sor.u32 256, 16
        %4888 = vbcast.lane.b32.xlu0 %v4878, %s4887
        %v4889 = vpop.permute.xlu0 %4888
        %s4891 = sor.u32 256, 24
        %4892 = vbcast.lane.b32.xlu0 %v4878, %s4891
        %v4893 = vpop.permute.xlu0 %4892
        %s4895 = sor.u32 256, 32
        %4896 = vbcast.lane.b32.xlu0 %v4878, %s4895
        %v4897 = vpop.permute.xlu0 %4896
        %s4899 = sor.u32 256, 40
        %4900 = vbcast.lane.b32.xlu0 %v4878, %s4899
        %v4901 = vpop.permute.xlu0 %4900
        %s4903 = sor.u32 256, 48
        %4904 = vbcast.lane.b32.xlu0 %v4878, %s4903
        %v4905 = vpop.permute.xlu0 %4904
        %s4907 = sor.u32 256, 56
        %4908 = vbcast.lane.b32.xlu0 %v4878, %s4907
        %v4909 = vpop.permute.xlu0 %4908
        %v4910 = vlaneseq
        %v4911 = vshrl.u32 %v4910, 7
        %v4912 = vsub.s32 5, %v4911
        %v4913 = vrot.slane %v4731, %v4912
        %4915 = vbcast.lane.b32.xlu0 %v4913, 256
        %v4916 = vpop.permute.xlu0 %4915
        %s4918 = sor.u32 256, 8
        %4919 = vbcast.lane.b32.xlu0 %v4913, %s4918
        %v4920 = vpop.permute.xlu0 %4919
        %s4922 = sor.u32 256, 16
        %4923 = vbcast.lane.b32.xlu0 %v4913, %s4922
        %v4924 = vpop.permute.xlu0 %4923
        %s4926 = sor.u32 256, 24
        %4927 = vbcast.lane.b32.xlu0 %v4913, %s4926
        %v4928 = vpop.permute.xlu0 %4927
        %s4930 = sor.u32 256, 32
        %4931 = vbcast.lane.b32.xlu0 %v4913, %s4930
        %v4932 = vpop.permute.xlu0 %4931
        %s4934 = sor.u32 256, 40
        %4935 = vbcast.lane.b32.xlu0 %v4913, %s4934
        %v4936 = vpop.permute.xlu0 %4935
        %s4938 = sor.u32 256, 48
        %4939 = vbcast.lane.b32.xlu0 %v4913, %s4938
        %v4940 = vpop.permute.xlu0 %4939
        %s4942 = sor.u32 256, 56
        %4943 = vbcast.lane.b32.xlu0 %v4913, %s4942
        %v4944 = vpop.permute.xlu0 %4943
        %v4945 = vlaneseq
        %v4946 = vshrl.u32 %v4945, 7
        %v4947 = vsub.s32 6, %v4946
        %v4948 = vrot.slane %v4731, %v4947
        %4950 = vbcast.lane.b32.xlu0 %v4948, 256
        %v4951 = vpop.permute.xlu0 %4950
        %s4953 = sor.u32 256, 8
        %4954 = vbcast.lane.b32.xlu0 %v4948, %s4953
        %v4955 = vpop.permute.xlu0 %4954
        %s4957 = sor.u32 256, 16
        %4958 = vbcast.lane.b32.xlu0 %v4948, %s4957
        %v4959 = vpop.permute.xlu0 %4958
        %s4961 = sor.u32 256, 24
        %4962 = vbcast.lane.b32.xlu0 %v4948, %s4961
        %v4963 = vpop.permute.xlu0 %4962
        %s4965 = sor.u32 256, 32
        %4966 = vbcast.lane.b32.xlu0 %v4948, %s4965
        %v4967 = vpop.permute.xlu0 %4966
        %s4969 = sor.u32 256, 40
        %4970 = vbcast.lane.b32.xlu0 %v4948, %s4969
        %v4971 = vpop.permute.xlu0 %4970
        %s4973 = sor.u32 256, 48
        %4974 = vbcast.lane.b32.xlu0 %v4948, %s4973
        %v4975 = vpop.permute.xlu0 %4974
        %s4977 = sor.u32 256, 56
        %4978 = vbcast.lane.b32.xlu0 %v4948, %s4977
        %v4979 = vpop.permute.xlu0 %4978
        %v4980 = vlaneseq
        %v4981 = vshrl.u32 %v4980, 7
        %v4982 = vsub.s32 7, %v4981
        %v4983 = vrot.slane %v4731, %v4982
        %4985 = vbcast.lane.b32.xlu0 %v4983, 256
        %v4986 = vpop.permute.xlu0 %4985
        %s4988 = sor.u32 256, 8
        %4989 = vbcast.lane.b32.xlu0 %v4983, %s4988
        %v4990 = vpop.permute.xlu0 %4989
        %s4992 = sor.u32 256, 16
        %4993 = vbcast.lane.b32.xlu0 %v4983, %s4992
        %v4994 = vpop.permute.xlu0 %4993
        %s4996 = sor.u32 256, 24
        %4997 = vbcast.lane.b32.xlu0 %v4983, %s4996
        %v4998 = vpop.permute.xlu0 %4997
        %s5000 = sor.u32 256, 32
        %5001 = vbcast.lane.b32.xlu0 %v4983, %s5000
        %v5002 = vpop.permute.xlu0 %5001
        %s5004 = sor.u32 256, 40
        %5005 = vbcast.lane.b32.xlu0 %v4983, %s5004
        %v5006 = vpop.permute.xlu0 %5005
        %s5008 = sor.u32 256, 48
        %5009 = vbcast.lane.b32.xlu0 %v4983, %s5008
        %v5010 = vpop.permute.xlu0 %5009
        %s5012 = sor.u32 256, 56
        %5013 = vbcast.lane.b32.xlu0 %v4983, %s5012
        %v5014 = vpop.permute.xlu0 %5013
        %v5015 = vlaneseq
        %v5016 = vshrl.u32 %v5015, 7
        %v5017 = vsub.s32 0, %v5016
        %v5018 = vrot.slane %v4732, %v5017
        %5020 = vbcast.lane.b32.xlu0 %v5018, 256
        %v5021 = vpop.permute.xlu0 %5020
        %s5023 = sor.u32 256, 8
        %5024 = vbcast.lane.b32.xlu0 %v5018, %s5023
        %v5025 = vpop.permute.xlu0 %5024
        %s5027 = sor.u32 256, 16
        %5028 = vbcast.lane.b32.xlu0 %v5018, %s5027
        %v5029 = vpop.permute.xlu0 %5028
        %s5031 = sor.u32 256, 24
        %5032 = vbcast.lane.b32.xlu0 %v5018, %s5031
        %v5033 = vpop.permute.xlu0 %5032
        %s5035 = sor.u32 256, 32
        %5036 = vbcast.lane.b32.xlu0 %v5018, %s5035
        %v5037 = vpop.permute.xlu0 %5036
        %s5039 = sor.u32 256, 40
        %5040 = vbcast.lane.b32.xlu0 %v5018, %s5039
        %v5041 = vpop.permute.xlu0 %5040
        %s5043 = sor.u32 256, 48
        %5044 = vbcast.lane.b32.xlu0 %v5018, %s5043
        %v5045 = vpop.permute.xlu0 %5044
        %s5047 = sor.u32 256, 56
        %5048 = vbcast.lane.b32.xlu0 %v5018, %s5047
        %v5049 = vpop.permute.xlu0 %5048
        %v5050 = vlaneseq
        %v5051 = vshrl.u32 %v5050, 7
        %v5052 = vsub.s32 1, %v5051
        %v5053 = vrot.slane %v4732, %v5052
        %5055 = vbcast.lane.b32.xlu0 %v5053, 256
        %v5056 = vpop.permute.xlu0 %5055
        %s5058 = sor.u32 256, 8
        %5059 = vbcast.lane.b32.xlu0 %v5053, %s5058
        %v5060 = vpop.permute.xlu0 %5059
        %s5062 = sor.u32 256, 16
        %5063 = vbcast.lane.b32.xlu0 %v5053, %s5062
        %v5064 = vpop.permute.xlu0 %5063
        %s5066 = sor.u32 256, 24
        %5067 = vbcast.lane.b32.xlu0 %v5053, %s5066
        %v5068 = vpop.permute.xlu0 %5067
        %s5070 = sor.u32 256, 32
        %5071 = vbcast.lane.b32.xlu0 %v5053, %s5070
        %v5072 = vpop.permute.xlu0 %5071
        %s5074 = sor.u32 256, 40
        %5075 = vbcast.lane.b32.xlu0 %v5053, %s5074
        %v5076 = vpop.permute.xlu0 %5075
        %s5078 = sor.u32 256, 48
        %5079 = vbcast.lane.b32.xlu0 %v5053, %s5078
        %v5080 = vpop.permute.xlu0 %5079
        %s5082 = sor.u32 256, 56
        %5083 = vbcast.lane.b32.xlu0 %v5053, %s5082
        %v5084 = vpop.permute.xlu0 %5083
        %v5085 = vlaneseq
        %v5086 = vshrl.u32 %v5085, 7
        %v5087 = vsub.s32 2, %v5086
        %v5088 = vrot.slane %v4732, %v5087
        %5090 = vbcast.lane.b32.xlu0 %v5088, 256
        %v5091 = vpop.permute.xlu0 %5090
        %s5093 = sor.u32 256, 8
        %5094 = vbcast.lane.b32.xlu0 %v5088, %s5093
        %v5095 = vpop.permute.xlu0 %5094
        %s5097 = sor.u32 256, 16
        %5098 = vbcast.lane.b32.xlu0 %v5088, %s5097
        %v5099 = vpop.permute.xlu0 %5098
        %s5101 = sor.u32 256, 24
        %5102 = vbcast.lane.b32.xlu0 %v5088, %s5101
        %v5103 = vpop.permute.xlu0 %5102
        %s5105 = sor.u32 256, 32
        %5106 = vbcast.lane.b32.xlu0 %v5088, %s5105
        %v5107 = vpop.permute.xlu0 %5106
        %s5109 = sor.u32 256, 40
        %5110 = vbcast.lane.b32.xlu0 %v5088, %s5109
        %v5111 = vpop.permute.xlu0 %5110
        %s5113 = sor.u32 256, 48
        %5114 = vbcast.lane.b32.xlu0 %v5088, %s5113
        %v5115 = vpop.permute.xlu0 %5114
        %s5117 = sor.u32 256, 56
        %5118 = vbcast.lane.b32.xlu0 %v5088, %s5117
        %v5119 = vpop.permute.xlu0 %5118
        %v5120 = vlaneseq
        %v5121 = vshrl.u32 %v5120, 7
        %v5122 = vsub.s32 3, %v5121
        %v5123 = vrot.slane %v4732, %v5122
        %5125 = vbcast.lane.b32.xlu0 %v5123, 256
        %v5126 = vpop.permute.xlu0 %5125
        %s5128 = sor.u32 256, 8
        %5129 = vbcast.lane.b32.xlu0 %v5123, %s5128
        %v5130 = vpop.permute.xlu0 %5129
        %s5132 = sor.u32 256, 16
        %5133 = vbcast.lane.b32.xlu0 %v5123, %s5132
        %v5134 = vpop.permute.xlu0 %5133
        %s5136 = sor.u32 256, 24
        %5137 = vbcast.lane.b32.xlu0 %v5123, %s5136
        %v5138 = vpop.permute.xlu0 %5137
        %s5140 = sor.u32 256, 32
        %5141 = vbcast.lane.b32.xlu0 %v5123, %s5140
        %v5142 = vpop.permute.xlu0 %5141
        %s5144 = sor.u32 256, 40
        %5145 = vbcast.lane.b32.xlu0 %v5123, %s5144
        %v5146 = vpop.permute.xlu0 %5145
        %s5148 = sor.u32 256, 48
        %5149 = vbcast.lane.b32.xlu0 %v5123, %s5148
        %v5150 = vpop.permute.xlu0 %5149
        %s5152 = sor.u32 256, 56
        %5153 = vbcast.lane.b32.xlu0 %v5123, %s5152
        %v5154 = vpop.permute.xlu0 %5153
        %v5155 = vlaneseq
        %v5156 = vshrl.u32 %v5155, 7
        %v5157 = vsub.s32 4, %v5156
        %v5158 = vrot.slane %v4732, %v5157
        %5160 = vbcast.lane.b32.xlu0 %v5158, 256
        %v5161 = vpop.permute.xlu0 %5160
        %s5163 = sor.u32 256, 8
        %5164 = vbcast.lane.b32.xlu0 %v5158, %s5163
        %v5165 = vpop.permute.xlu0 %5164
        %s5167 = sor.u32 256, 16
        %5168 = vbcast.lane.b32.xlu0 %v5158, %s5167
        %v5169 = vpop.permute.xlu0 %5168
        %s5171 = sor.u32 256, 24
        %5172 = vbcast.lane.b32.xlu0 %v5158, %s5171
        %v5173 = vpop.permute.xlu0 %5172
        %s5175 = sor.u32 256, 32
        %5176 = vbcast.lane.b32.xlu0 %v5158, %s5175
        %v5177 = vpop.permute.xlu0 %5176
        %s5179 = sor.u32 256, 40
        %5180 = vbcast.lane.b32.xlu0 %v5158, %s5179
        %v5181 = vpop.permute.xlu0 %5180
        %s5183 = sor.u32 256, 48
        %5184 = vbcast.lane.b32.xlu0 %v5158, %s5183
        %v5185 = vpop.permute.xlu0 %5184
        %s5187 = sor.u32 256, 56
        %5188 = vbcast.lane.b32.xlu0 %v5158, %s5187
        %v5189 = vpop.permute.xlu0 %5188
        %v5190 = vlaneseq
        %v5191 = vshrl.u32 %v5190, 7
        %v5192 = vsub.s32 5, %v5191
        %v5193 = vrot.slane %v4732, %v5192
        %5195 = vbcast.lane.b32.xlu0 %v5193, 256
        %v5196 = vpop.permute.xlu0 %5195
        %s5198 = sor.u32 256, 8
        %5199 = vbcast.lane.b32.xlu0 %v5193, %s5198
        %v5200 = vpop.permute.xlu0 %5199
        %s5202 = sor.u32 256, 16
        %5203 = vbcast.lane.b32.xlu0 %v5193, %s5202
        %v5204 = vpop.permute.xlu0 %5203
        %s5206 = sor.u32 256, 24
        %5207 = vbcast.lane.b32.xlu0 %v5193, %s5206
        %v5208 = vpop.permute.xlu0 %5207
        %s5210 = sor.u32 256, 32
        %5211 = vbcast.lane.b32.xlu0 %v5193, %s5210
        %v5212 = vpop.permute.xlu0 %5211
        %s5214 = sor.u32 256, 40
        %5215 = vbcast.lane.b32.xlu0 %v5193, %s5214
        %v5216 = vpop.permute.xlu0 %5215
        %s5218 = sor.u32 256, 48
        %5219 = vbcast.lane.b32.xlu0 %v5193, %s5218
        %v5220 = vpop.permute.xlu0 %5219
        %s5222 = sor.u32 256, 56
        %5223 = vbcast.lane.b32.xlu0 %v5193, %s5222
        %v5224 = vpop.permute.xlu0 %5223
        %v5225 = vlaneseq
        %v5226 = vshrl.u32 %v5225, 7
        %v5227 = vsub.s32 6, %v5226
        %v5228 = vrot.slane %v4732, %v5227
        %5230 = vbcast.lane.b32.xlu0 %v5228, 256
        %v5231 = vpop.permute.xlu0 %5230
        %s5233 = sor.u32 256, 8
        %5234 = vbcast.lane.b32.xlu0 %v5228, %s5233
        %v5235 = vpop.permute.xlu0 %5234
        %s5237 = sor.u32 256, 16
        %5238 = vbcast.lane.b32.xlu0 %v5228, %s5237
        %v5239 = vpop.permute.xlu0 %5238
        %s5241 = sor.u32 256, 24
        %5242 = vbcast.lane.b32.xlu0 %v5228, %s5241
        %v5243 = vpop.permute.xlu0 %5242
        %s5245 = sor.u32 256, 32
        %5246 = vbcast.lane.b32.xlu0 %v5228, %s5245
        %v5247 = vpop.permute.xlu0 %5246
        %s5249 = sor.u32 256, 40
        %5250 = vbcast.lane.b32.xlu0 %v5228, %s5249
        %v5251 = vpop.permute.xlu0 %5250
        %s5253 = sor.u32 256, 48
        %5254 = vbcast.lane.b32.xlu0 %v5228, %s5253
        %v5255 = vpop.permute.xlu0 %5254
        %s5257 = sor.u32 256, 56
        %5258 = vbcast.lane.b32.xlu0 %v5228, %s5257
        %v5259 = vpop.permute.xlu0 %5258
        %v5260 = vlaneseq
        %v5261 = vshrl.u32 %v5260, 7
        %v5262 = vsub.s32 7, %v5261
        %v5263 = vrot.slane %v4732, %v5262
        %5265 = vbcast.lane.b32.xlu0 %v5263, 256
        %v5266 = vpop.permute.xlu0 %5265
        %s5268 = sor.u32 256, 8
        %5269 = vbcast.lane.b32.xlu0 %v5263, %s5268
        %v5270 = vpop.permute.xlu0 %5269
        %s5272 = sor.u32 256, 16
        %5273 = vbcast.lane.b32.xlu0 %v5263, %s5272
        %v5274 = vpop.permute.xlu0 %5273
        %s5276 = sor.u32 256, 24
        %5277 = vbcast.lane.b32.xlu0 %v5263, %s5276
        %v5278 = vpop.permute.xlu0 %5277
        %s5280 = sor.u32 256, 32
        %5281 = vbcast.lane.b32.xlu0 %v5263, %s5280
        %v5282 = vpop.permute.xlu0 %5281
        %s5284 = sor.u32 256, 40
        %5285 = vbcast.lane.b32.xlu0 %v5263, %s5284
        %v5286 = vpop.permute.xlu0 %5285
        %s5288 = sor.u32 256, 48
        %5289 = vbcast.lane.b32.xlu0 %v5263, %s5288
        %v5290 = vpop.permute.xlu0 %5289
        %s5292 = sor.u32 256, 56
        %5293 = vbcast.lane.b32.xlu0 %v5263, %s5292
        %v5294 = vpop.permute.xlu0 %5293
        %v5295 = vlaneseq
        %v5296 = vshrl.u32 %v5295, 7
        %v5297 = vsub.s32 0, %v5296
        %v5298 = vrot.slane %v4733, %v5297
        %5300 = vbcast.lane.b32.xlu0 %v5298, 256
        %v5301 = vpop.permute.xlu0 %5300
        %s5303 = sor.u32 256, 8
        %5304 = vbcast.lane.b32.xlu0 %v5298, %s5303
        %v5305 = vpop.permute.xlu0 %5304
        %s5307 = sor.u32 256, 16
        %5308 = vbcast.lane.b32.xlu0 %v5298, %s5307
        %v5309 = vpop.permute.xlu0 %5308
        %s5311 = sor.u32 256, 24
        %5312 = vbcast.lane.b32.xlu0 %v5298, %s5311
        %v5313 = vpop.permute.xlu0 %5312
        %s5315 = sor.u32 256, 32
        %5316 = vbcast.lane.b32.xlu0 %v5298, %s5315
        %v5317 = vpop.permute.xlu0 %5316
        %s5319 = sor.u32 256, 40
        %5320 = vbcast.lane.b32.xlu0 %v5298, %s5319
        %v5321 = vpop.permute.xlu0 %5320
        %s5323 = sor.u32 256, 48
        %5324 = vbcast.lane.b32.xlu0 %v5298, %s5323
        %v5325 = vpop.permute.xlu0 %5324
        %s5327 = sor.u32 256, 56
        %5328 = vbcast.lane.b32.xlu0 %v5298, %s5327
        %v5329 = vpop.permute.xlu0 %5328
        %v5330 = vlaneseq
        %v5331 = vshrl.u32 %v5330, 7
        %v5332 = vsub.s32 1, %v5331
        %v5333 = vrot.slane %v4733, %v5332
        %5335 = vbcast.lane.b32.xlu0 %v5333, 256
        %v5336 = vpop.permute.xlu0 %5335
        %s5338 = sor.u32 256, 8
        %5339 = vbcast.lane.b32.xlu0 %v5333, %s5338
        %v5340 = vpop.permute.xlu0 %5339
        %s5342 = sor.u32 256, 16
        %5343 = vbcast.lane.b32.xlu0 %v5333, %s5342
        %v5344 = vpop.permute.xlu0 %5343
        %s5346 = sor.u32 256, 24
        %5347 = vbcast.lane.b32.xlu0 %v5333, %s5346
        %v5348 = vpop.permute.xlu0 %5347
        %s5350 = sor.u32 256, 32
        %5351 = vbcast.lane.b32.xlu0 %v5333, %s5350
        %v5352 = vpop.permute.xlu0 %5351
        %s5354 = sor.u32 256, 40
        %5355 = vbcast.lane.b32.xlu0 %v5333, %s5354
        %v5356 = vpop.permute.xlu0 %5355
        %s5358 = sor.u32 256, 48
        %5359 = vbcast.lane.b32.xlu0 %v5333, %s5358
        %v5360 = vpop.permute.xlu0 %5359
        %s5362 = sor.u32 256, 56
        %5363 = vbcast.lane.b32.xlu0 %v5333, %s5362
        %v5364 = vpop.permute.xlu0 %5363
        %v5365 = vlaneseq
        %v5366 = vshrl.u32 %v5365, 7
        %v5367 = vsub.s32 2, %v5366
        %v5368 = vrot.slane %v4733, %v5367
        %5370 = vbcast.lane.b32.xlu0 %v5368, 256
        %v5371 = vpop.permute.xlu0 %5370
        %s5373 = sor.u32 256, 8
        %5374 = vbcast.lane.b32.xlu0 %v5368, %s5373
        %v5375 = vpop.permute.xlu0 %5374
        %s5377 = sor.u32 256, 16
        %5378 = vbcast.lane.b32.xlu0 %v5368, %s5377
        %v5379 = vpop.permute.xlu0 %5378
        %s5381 = sor.u32 256, 24
        %5382 = vbcast.lane.b32.xlu0 %v5368, %s5381
        %v5383 = vpop.permute.xlu0 %5382
        %s5385 = sor.u32 256, 32
        %5386 = vbcast.lane.b32.xlu0 %v5368, %s5385
        %v5387 = vpop.permute.xlu0 %5386
        %s5389 = sor.u32 256, 40
        %5390 = vbcast.lane.b32.xlu0 %v5368, %s5389
        %v5391 = vpop.permute.xlu0 %5390
        %s5393 = sor.u32 256, 48
        %5394 = vbcast.lane.b32.xlu0 %v5368, %s5393
        %v5395 = vpop.permute.xlu0 %5394
        %s5397 = sor.u32 256, 56
        %5398 = vbcast.lane.b32.xlu0 %v5368, %s5397
        %v5399 = vpop.permute.xlu0 %5398
        %v5400 = vlaneseq
        %v5401 = vshrl.u32 %v5400, 7
        %v5402 = vsub.s32 3, %v5401
        %v5403 = vrot.slane %v4733, %v5402
        %5405 = vbcast.lane.b32.xlu0 %v5403, 256
        %v5406 = vpop.permute.xlu0 %5405
        %s5408 = sor.u32 256, 8
        %5409 = vbcast.lane.b32.xlu0 %v5403, %s5408
        %v5410 = vpop.permute.xlu0 %5409
        %s5412 = sor.u32 256, 16
        %5413 = vbcast.lane.b32.xlu0 %v5403, %s5412
        %v5414 = vpop.permute.xlu0 %5413
        %s5416 = sor.u32 256, 24
        %5417 = vbcast.lane.b32.xlu0 %v5403, %s5416
        %v5418 = vpop.permute.xlu0 %5417
        %s5420 = sor.u32 256, 32
        %5421 = vbcast.lane.b32.xlu0 %v5403, %s5420
        %v5422 = vpop.permute.xlu0 %5421
        %s5424 = sor.u32 256, 40
        %5425 = vbcast.lane.b32.xlu0 %v5403, %s5424
        %v5426 = vpop.permute.xlu0 %5425
        %s5428 = sor.u32 256, 48
        %5429 = vbcast.lane.b32.xlu0 %v5403, %s5428
        %v5430 = vpop.permute.xlu0 %5429
        %s5432 = sor.u32 256, 56
        %5433 = vbcast.lane.b32.xlu0 %v5403, %s5432
        %v5434 = vpop.permute.xlu0 %5433
        %v5435 = vlaneseq
        %v5436 = vshrl.u32 %v5435, 7
        %v5437 = vsub.s32 4, %v5436
        %v5438 = vrot.slane %v4733, %v5437
        %5440 = vbcast.lane.b32.xlu0 %v5438, 256
        %v5441 = vpop.permute.xlu0 %5440
        %s5443 = sor.u32 256, 8
        %5444 = vbcast.lane.b32.xlu0 %v5438, %s5443
        %v5445 = vpop.permute.xlu0 %5444
        %s5447 = sor.u32 256, 16
        %5448 = vbcast.lane.b32.xlu0 %v5438, %s5447
        %v5449 = vpop.permute.xlu0 %5448
        %s5451 = sor.u32 256, 24
        %5452 = vbcast.lane.b32.xlu0 %v5438, %s5451
        %v5453 = vpop.permute.xlu0 %5452
        %s5455 = sor.u32 256, 32
        %5456 = vbcast.lane.b32.xlu0 %v5438, %s5455
        %v5457 = vpop.permute.xlu0 %5456
        %s5459 = sor.u32 256, 40
        %5460 = vbcast.lane.b32.xlu0 %v5438, %s5459
        %v5461 = vpop.permute.xlu0 %5460
        %s5463 = sor.u32 256, 48
        %5464 = vbcast.lane.b32.xlu0 %v5438, %s5463
        %v5465 = vpop.permute.xlu0 %5464
        %s5467 = sor.u32 256, 56
        %5468 = vbcast.lane.b32.xlu0 %v5438, %s5467
        %v5469 = vpop.permute.xlu0 %5468
        %v5470 = vlaneseq
        %v5471 = vshrl.u32 %v5470, 7
        %v5472 = vsub.s32 5, %v5471
        %v5473 = vrot.slane %v4733, %v5472
        %5475 = vbcast.lane.b32.xlu0 %v5473, 256
        %v5476 = vpop.permute.xlu0 %5475
        %s5478 = sor.u32 256, 8
        %5479 = vbcast.lane.b32.xlu0 %v5473, %s5478
        %v5480 = vpop.permute.xlu0 %5479
        %s5482 = sor.u32 256, 16
        %5483 = vbcast.lane.b32.xlu0 %v5473, %s5482
        %v5484 = vpop.permute.xlu0 %5483
        %s5486 = sor.u32 256, 24
        %5487 = vbcast.lane.b32.xlu0 %v5473, %s5486
        %v5488 = vpop.permute.xlu0 %5487
        %s5490 = sor.u32 256, 32
        %5491 = vbcast.lane.b32.xlu0 %v5473, %s5490
        %v5492 = vpop.permute.xlu0 %5491
        %s5494 = sor.u32 256, 40
        %5495 = vbcast.lane.b32.xlu0 %v5473, %s5494
        %v5496 = vpop.permute.xlu0 %5495
        %s5498 = sor.u32 256, 48
        %5499 = vbcast.lane.b32.xlu0 %v5473, %s5498
        %v5500 = vpop.permute.xlu0 %5499
        %s5502 = sor.u32 256, 56
        %5503 = vbcast.lane.b32.xlu0 %v5473, %s5502
        %v5504 = vpop.permute.xlu0 %5503
        %v5505 = vlaneseq
        %v5506 = vshrl.u32 %v5505, 7
        %v5507 = vsub.s32 6, %v5506
        %v5508 = vrot.slane %v4733, %v5507
        %5510 = vbcast.lane.b32.xlu0 %v5508, 256
        %v5511 = vpop.permute.xlu0 %5510
        %s5513 = sor.u32 256, 8
        %5514 = vbcast.lane.b32.xlu0 %v5508, %s5513
        %v5515 = vpop.permute.xlu0 %5514
        %s5517 = sor.u32 256, 16
        %5518 = vbcast.lane.b32.xlu0 %v5508, %s5517
        %v5519 = vpop.permute.xlu0 %5518
        %s5521 = sor.u32 256, 24
        %5522 = vbcast.lane.b32.xlu0 %v5508, %s5521
        %v5523 = vpop.permute.xlu0 %5522
        %s5525 = sor.u32 256, 32
        %5526 = vbcast.lane.b32.xlu0 %v5508, %s5525
        %v5527 = vpop.permute.xlu0 %5526
        %s5529 = sor.u32 256, 40
        %5530 = vbcast.lane.b32.xlu0 %v5508, %s5529
        %v5531 = vpop.permute.xlu0 %5530
        %s5533 = sor.u32 256, 48
        %5534 = vbcast.lane.b32.xlu0 %v5508, %s5533
        %v5535 = vpop.permute.xlu0 %5534
        %s5537 = sor.u32 256, 56
        %5538 = vbcast.lane.b32.xlu0 %v5508, %s5537
        %v5539 = vpop.permute.xlu0 %5538
        %v5540 = vlaneseq
        %v5541 = vshrl.u32 %v5540, 7
        %v5542 = vsub.s32 7, %v5541
        %v5543 = vrot.slane %v4733, %v5542
        %5545 = vbcast.lane.b32.xlu0 %v5543, 256
        %v5546 = vpop.permute.xlu0 %5545
        %s5548 = sor.u32 256, 8
        %5549 = vbcast.lane.b32.xlu0 %v5543, %s5548
        %v5550 = vpop.permute.xlu0 %5549
        %s5552 = sor.u32 256, 16
        %5553 = vbcast.lane.b32.xlu0 %v5543, %s5552
        %v5554 = vpop.permute.xlu0 %5553
        %s5556 = sor.u32 256, 24
        %5557 = vbcast.lane.b32.xlu0 %v5543, %s5556
        %v5558 = vpop.permute.xlu0 %5557
        %s5560 = sor.u32 256, 32
        %5561 = vbcast.lane.b32.xlu0 %v5543, %s5560
        %v5562 = vpop.permute.xlu0 %5561
        %s5564 = sor.u32 256, 40
        %5565 = vbcast.lane.b32.xlu0 %v5543, %s5564
        %v5566 = vpop.permute.xlu0 %5565
        %s5568 = sor.u32 256, 48
        %5569 = vbcast.lane.b32.xlu0 %v5543, %s5568
        %v5570 = vpop.permute.xlu0 %5569
        %s5572 = sor.u32 256, 56
        %5573 = vbcast.lane.b32.xlu0 %v5543, %s5572
        %v5574 = vpop.permute.xlu0 %5573
        %v5575 = vlaneseq
        %v5576 = vshrl.u32 %v5575, 7
        %v5577 = vsub.s32 0, %v5576
        %v5578 = vrot.slane %v4734, %v5577
        %5580 = vbcast.lane.b32.xlu0 %v5578, 256
        %v5581 = vpop.permute.xlu0 %5580
        %s5583 = sor.u32 256, 8
        %5584 = vbcast.lane.b32.xlu0 %v5578, %s5583
        %v5585 = vpop.permute.xlu0 %5584
        %s5587 = sor.u32 256, 16
        %5588 = vbcast.lane.b32.xlu0 %v5578, %s5587
        %v5589 = vpop.permute.xlu0 %5588
        %s5591 = sor.u32 256, 24
        %5592 = vbcast.lane.b32.xlu0 %v5578, %s5591
        %v5593 = vpop.permute.xlu0 %5592
        %s5595 = sor.u32 256, 32
        %5596 = vbcast.lane.b32.xlu0 %v5578, %s5595
        %v5597 = vpop.permute.xlu0 %5596
        %s5599 = sor.u32 256, 40
        %5600 = vbcast.lane.b32.xlu0 %v5578, %s5599
        %v5601 = vpop.permute.xlu0 %5600
        %s5603 = sor.u32 256, 48
        %5604 = vbcast.lane.b32.xlu0 %v5578, %s5603
        %v5605 = vpop.permute.xlu0 %5604
        %s5607 = sor.u32 256, 56
        %5608 = vbcast.lane.b32.xlu0 %v5578, %s5607
        %v5609 = vpop.permute.xlu0 %5608
        %v5610 = vlaneseq
        %v5611 = vshrl.u32 %v5610, 7
        %v5612 = vsub.s32 1, %v5611
        %v5613 = vrot.slane %v4734, %v5612
        %5615 = vbcast.lane.b32.xlu0 %v5613, 256
        %v5616 = vpop.permute.xlu0 %5615
        %s5618 = sor.u32 256, 8
        %5619 = vbcast.lane.b32.xlu0 %v5613, %s5618
        %v5620 = vpop.permute.xlu0 %5619
        %s5622 = sor.u32 256, 16
        %5623 = vbcast.lane.b32.xlu0 %v5613, %s5622
        %v5624 = vpop.permute.xlu0 %5623
        %s5626 = sor.u32 256, 24
        %5627 = vbcast.lane.b32.xlu0 %v5613, %s5626
        %v5628 = vpop.permute.xlu0 %5627
        %s5630 = sor.u32 256, 32
        %5631 = vbcast.lane.b32.xlu0 %v5613, %s5630
        %v5632 = vpop.permute.xlu0 %5631
        %s5634 = sor.u32 256, 40
        %5635 = vbcast.lane.b32.xlu0 %v5613, %s5634
        %v5636 = vpop.permute.xlu0 %5635
        %s5638 = sor.u32 256, 48
        %5639 = vbcast.lane.b32.xlu0 %v5613, %s5638
        %v5640 = vpop.permute.xlu0 %5639
        %s5642 = sor.u32 256, 56
        %5643 = vbcast.lane.b32.xlu0 %v5613, %s5642
        %v5644 = vpop.permute.xlu0 %5643
        %v5645 = vlaneseq
        %v5646 = vshrl.u32 %v5645, 7
        %v5647 = vsub.s32 2, %v5646
        %v5648 = vrot.slane %v4734, %v5647
        %5650 = vbcast.lane.b32.xlu0 %v5648, 256
        %v5651 = vpop.permute.xlu0 %5650
        %s5653 = sor.u32 256, 8
        %5654 = vbcast.lane.b32.xlu0 %v5648, %s5653
        %v5655 = vpop.permute.xlu0 %5654
        %s5657 = sor.u32 256, 16
        %5658 = vbcast.lane.b32.xlu0 %v5648, %s5657
        %v5659 = vpop.permute.xlu0 %5658
        %s5661 = sor.u32 256, 24
        %5662 = vbcast.lane.b32.xlu0 %v5648, %s5661
        %v5663 = vpop.permute.xlu0 %5662
        %s5665 = sor.u32 256, 32
        %5666 = vbcast.lane.b32.xlu0 %v5648, %s5665
        %v5667 = vpop.permute.xlu0 %5666
        %s5669 = sor.u32 256, 40
        %5670 = vbcast.lane.b32.xlu0 %v5648, %s5669
        %v5671 = vpop.permute.xlu0 %5670
        %s5673 = sor.u32 256, 48
        %5674 = vbcast.lane.b32.xlu0 %v5648, %s5673
        %v5675 = vpop.permute.xlu0 %5674
        %s5677 = sor.u32 256, 56
        %5678 = vbcast.lane.b32.xlu0 %v5648, %s5677
        %v5679 = vpop.permute.xlu0 %5678
        %v5680 = vlaneseq
        %v5681 = vshrl.u32 %v5680, 7
        %v5682 = vsub.s32 3, %v5681
        %v5683 = vrot.slane %v4734, %v5682
        %5685 = vbcast.lane.b32.xlu0 %v5683, 256
        %v5686 = vpop.permute.xlu0 %5685
        %s5688 = sor.u32 256, 8
        %5689 = vbcast.lane.b32.xlu0 %v5683, %s5688
        %v5690 = vpop.permute.xlu0 %5689
        %s5692 = sor.u32 256, 16
        %5693 = vbcast.lane.b32.xlu0 %v5683, %s5692
        %v5694 = vpop.permute.xlu0 %5693
        %s5696 = sor.u32 256, 24
        %5697 = vbcast.lane.b32.xlu0 %v5683, %s5696
        %v5698 = vpop.permute.xlu0 %5697
        %s5700 = sor.u32 256, 32
        %5701 = vbcast.lane.b32.xlu0 %v5683, %s5700
        %v5702 = vpop.permute.xlu0 %5701
        %s5704 = sor.u32 256, 40
        %5705 = vbcast.lane.b32.xlu0 %v5683, %s5704
        %v5706 = vpop.permute.xlu0 %5705
        %s5708 = sor.u32 256, 48
        %5709 = vbcast.lane.b32.xlu0 %v5683, %s5708
        %v5710 = vpop.permute.xlu0 %5709
        %s5712 = sor.u32 256, 56
        %5713 = vbcast.lane.b32.xlu0 %v5683, %s5712
        %v5714 = vpop.permute.xlu0 %5713
        %v5715 = vlaneseq
        %v5716 = vshrl.u32 %v5715, 7
        %v5717 = vsub.s32 4, %v5716
        %v5718 = vrot.slane %v4734, %v5717
        %5720 = vbcast.lane.b32.xlu0 %v5718, 256
        %v5721 = vpop.permute.xlu0 %5720
        %s5723 = sor.u32 256, 8
        %5724 = vbcast.lane.b32.xlu0 %v5718, %s5723
        %v5725 = vpop.permute.xlu0 %5724
        %s5727 = sor.u32 256, 16
        %5728 = vbcast.lane.b32.xlu0 %v5718, %s5727
        %v5729 = vpop.permute.xlu0 %5728
        %s5731 = sor.u32 256, 24
        %5732 = vbcast.lane.b32.xlu0 %v5718, %s5731
        %v5733 = vpop.permute.xlu0 %5732
        %s5735 = sor.u32 256, 32
        %5736 = vbcast.lane.b32.xlu0 %v5718, %s5735
        %v5737 = vpop.permute.xlu0 %5736
        %s5739 = sor.u32 256, 40
        %5740 = vbcast.lane.b32.xlu0 %v5718, %s5739
        %v5741 = vpop.permute.xlu0 %5740
        %s5743 = sor.u32 256, 48
        %5744 = vbcast.lane.b32.xlu0 %v5718, %s5743
        %v5745 = vpop.permute.xlu0 %5744
        %s5747 = sor.u32 256, 56
        %5748 = vbcast.lane.b32.xlu0 %v5718, %s5747
        %v5749 = vpop.permute.xlu0 %5748
        %v5750 = vlaneseq
        %v5751 = vshrl.u32 %v5750, 7
        %v5752 = vsub.s32 5, %v5751
        %v5753 = vrot.slane %v4734, %v5752
        %5755 = vbcast.lane.b32.xlu0 %v5753, 256
        %v5756 = vpop.permute.xlu0 %5755
        %s5758 = sor.u32 256, 8
        %5759 = vbcast.lane.b32.xlu0 %v5753, %s5758
        %v5760 = vpop.permute.xlu0 %5759
        %s5762 = sor.u32 256, 16
        %5763 = vbcast.lane.b32.xlu0 %v5753, %s5762
        %v5764 = vpop.permute.xlu0 %5763
        %s5766 = sor.u32 256, 24
        %5767 = vbcast.lane.b32.xlu0 %v5753, %s5766
        %v5768 = vpop.permute.xlu0 %5767
        %s5770 = sor.u32 256, 32
        %5771 = vbcast.lane.b32.xlu0 %v5753, %s5770
        %v5772 = vpop.permute.xlu0 %5771
        %s5774 = sor.u32 256, 40
        %5775 = vbcast.lane.b32.xlu0 %v5753, %s5774
        %v5776 = vpop.permute.xlu0 %5775
        %s5778 = sor.u32 256, 48
        %5779 = vbcast.lane.b32.xlu0 %v5753, %s5778
        %v5780 = vpop.permute.xlu0 %5779
        %s5782 = sor.u32 256, 56
        %5783 = vbcast.lane.b32.xlu0 %v5753, %s5782
        %v5784 = vpop.permute.xlu0 %5783
        %v5785 = vlaneseq
        %v5786 = vshrl.u32 %v5785, 7
        %v5787 = vsub.s32 6, %v5786
        %v5788 = vrot.slane %v4734, %v5787
        %5790 = vbcast.lane.b32.xlu0 %v5788, 256
        %v5791 = vpop.permute.xlu0 %5790
        %s5793 = sor.u32 256, 8
        %5794 = vbcast.lane.b32.xlu0 %v5788, %s5793
        %v5795 = vpop.permute.xlu0 %5794
        %s5797 = sor.u32 256, 16
        %5798 = vbcast.lane.b32.xlu0 %v5788, %s5797
        %v5799 = vpop.permute.xlu0 %5798
        %s5801 = sor.u32 256, 24
        %5802 = vbcast.lane.b32.xlu0 %v5788, %s5801
        %v5803 = vpop.permute.xlu0 %5802
        %s5805 = sor.u32 256, 32
        %5806 = vbcast.lane.b32.xlu0 %v5788, %s5805
        %v5807 = vpop.permute.xlu0 %5806
        %s5809 = sor.u32 256, 40
        %5810 = vbcast.lane.b32.xlu0 %v5788, %s5809
        %v5811 = vpop.permute.xlu0 %5810
        %s5813 = sor.u32 256, 48
        %5814 = vbcast.lane.b32.xlu0 %v5788, %s5813
        %v5815 = vpop.permute.xlu0 %5814
        %s5817 = sor.u32 256, 56
        %5818 = vbcast.lane.b32.xlu0 %v5788, %s5817
        %v5819 = vpop.permute.xlu0 %5818
        %v5820 = vlaneseq
        %v5821 = vshrl.u32 %v5820, 7
        %v5822 = vsub.s32 7, %v5821
        %v5823 = vrot.slane %v4734, %v5822
        %5825 = vbcast.lane.b32.xlu0 %v5823, 256
        %v5826 = vpop.permute.xlu0 %5825
        %s5828 = sor.u32 256, 8
        %5829 = vbcast.lane.b32.xlu0 %v5823, %s5828
        %v5830 = vpop.permute.xlu0 %5829
        %s5832 = sor.u32 256, 16
        %5833 = vbcast.lane.b32.xlu0 %v5823, %s5832
        %v5834 = vpop.permute.xlu0 %5833
        %s5836 = sor.u32 256, 24
        %5837 = vbcast.lane.b32.xlu0 %v5823, %s5836
        %v5838 = vpop.permute.xlu0 %5837
        %s5840 = sor.u32 256, 32
        %5841 = vbcast.lane.b32.xlu0 %v5823, %s5840
        %v5842 = vpop.permute.xlu0 %5841
        %s5844 = sor.u32 256, 40
        %5845 = vbcast.lane.b32.xlu0 %v5823, %s5844
        %v5846 = vpop.permute.xlu0 %5845
        %s5848 = sor.u32 256, 48
        %5849 = vbcast.lane.b32.xlu0 %v5823, %s5848
        %v5850 = vpop.permute.xlu0 %5849
        %s5852 = sor.u32 256, 56
        %5853 = vbcast.lane.b32.xlu0 %v5823, %s5852
        %v5854 = vpop.permute.xlu0 %5853
        %v5855 = vmul.f32 %v4475, %v4741
        %v5856 = vmul.f32 %v4476, %v4745
        %v5857 = vmul.f32 %v4477, %v4749
        %v5858 = vmul.f32 %v4478, %v4753
        %v5859 = vmul.f32 %v4479, %v4757
        %v5860 = vmul.f32 %v4480, %v4761
        %v5861 = vmul.f32 %v4481, %v4765
        %v5862 = vmul.f32 %v4482, %v4769
        %v5863 = vmul.f32 %v4483, %v4776
        %v5864 = vmul.f32 %v4484, %v4780
        %v5865 = vmul.f32 %v4485, %v4784
        %v5866 = vmul.f32 %v4486, %v4788
        %v5867 = vmul.f32 %v4487, %v4792
        %v5868 = vmul.f32 %v4488, %v4796
        %v5869 = vmul.f32 %v4489, %v4800
        %v5870 = vmul.f32 %v4490, %v4804
        %v5871 = vmul.f32 %v4491, %v4811
        %v5872 = vmul.f32 %v4492, %v4815
        %v5873 = vmul.f32 %v4493, %v4819
        %v5874 = vmul.f32 %v4494, %v4823
        %v5875 = vmul.f32 %v4495, %v4827
        %v5876 = vmul.f32 %v4496, %v4831
        %v5877 = vmul.f32 %v4497, %v4835
        %v5878 = vmul.f32 %v4498, %v4839
        %v5879 = vmul.f32 %v4499, %v4846
        %v5880 = vmul.f32 %v4500, %v4850
        %v5881 = vmul.f32 %v4501, %v4854
        %v5882 = vmul.f32 %v4502, %v4858
        %v5883 = vmul.f32 %v4503, %v4862
        %v5884 = vmul.f32 %v4504, %v4866
        %v5885 = vmul.f32 %v4505, %v4870
        %v5886 = vmul.f32 %v4506, %v4874
        %v5887 = vmul.f32 %v4507, %v4881
        %v5888 = vmul.f32 %v4508, %v4885
        %v5889 = vmul.f32 %v4509, %v4889
        %v5890 = vmul.f32 %v4510, %v4893
        %v5891 = vmul.f32 %v4511, %v4897
        %v5892 = vmul.f32 %v4512, %v4901
        %v5893 = vmul.f32 %v4513, %v4905
        %v5894 = vmul.f32 %v4514, %v4909
        %v5895 = vmul.f32 %v4515, %v4916
        %v5896 = vmul.f32 %v4516, %v4920
        %v5897 = vmul.f32 %v4517, %v4924
        %v5898 = vmul.f32 %v4518, %v4928
        %v5899 = vmul.f32 %v4519, %v4932
        %v5900 = vmul.f32 %v4520, %v4936
        %v5901 = vmul.f32 %v4521, %v4940
        %v5902 = vmul.f32 %v4522, %v4944
        %v5903 = vmul.f32 %v4523, %v4951
        %v5904 = vmul.f32 %v4524, %v4955
        %v5905 = vmul.f32 %v4525, %v4959
        %v5906 = vmul.f32 %v4526, %v4963
        %v5907 = vmul.f32 %v4527, %v4967
        %v5908 = vmul.f32 %v4528, %v4971
        %v5909 = vmul.f32 %v4529, %v4975
        %v5910 = vmul.f32 %v4530, %v4979
        %v5911 = vmul.f32 %v4531, %v4986
        %v5912 = vmul.f32 %v4532, %v4990
        %v5913 = vmul.f32 %v4533, %v4994
        %v5914 = vmul.f32 %v4534, %v4998
        %v5915 = vmul.f32 %v4535, %v5002
        %v5916 = vmul.f32 %v4536, %v5006
        %v5917 = vmul.f32 %v4537, %v5010
        %v5918 = vmul.f32 %v4538, %v5014
        %v5919 = vmul.f32 %v4539, %v5021
        %v5920 = vmul.f32 %v4540, %v5025
        %v5921 = vmul.f32 %v4541, %v5029
        %v5922 = vmul.f32 %v4542, %v5033
        %v5923 = vmul.f32 %v4543, %v5037
        %v5924 = vmul.f32 %v4544, %v5041
        %v5925 = vmul.f32 %v4545, %v5045
        %v5926 = vmul.f32 %v4546, %v5049
        %v5927 = vmul.f32 %v4547, %v5056
        %v5928 = vmul.f32 %v4548, %v5060
        %v5929 = vmul.f32 %v4549, %v5064
        %v5930 = vmul.f32 %v4550, %v5068
        %v5931 = vmul.f32 %v4551, %v5072
        %v5932 = vmul.f32 %v4552, %v5076
        %v5933 = vmul.f32 %v4553, %v5080
        %v5934 = vmul.f32 %v4554, %v5084
        %v5935 = vmul.f32 %v4555, %v5091
        %v5936 = vmul.f32 %v4556, %v5095
        %v5937 = vmul.f32 %v4557, %v5099
        %v5938 = vmul.f32 %v4558, %v5103
        %v5939 = vmul.f32 %v4559, %v5107
        %v5940 = vmul.f32 %v4560, %v5111
        %v5941 = vmul.f32 %v4561, %v5115
        %v5942 = vmul.f32 %v4562, %v5119
        %v5943 = vmul.f32 %v4563, %v5126
        %v5944 = vmul.f32 %v4564, %v5130
        %v5945 = vmul.f32 %v4565, %v5134
        %v5946 = vmul.f32 %v4566, %v5138
        %v5947 = vmul.f32 %v4567, %v5142
        %v5948 = vmul.f32 %v4568, %v5146
        %v5949 = vmul.f32 %v4569, %v5150
        %v5950 = vmul.f32 %v4570, %v5154
        %v5951 = vmul.f32 %v4571, %v5161
        %v5952 = vmul.f32 %v4572, %v5165
        %v5953 = vmul.f32 %v4573, %v5169
        %v5954 = vmul.f32 %v4574, %v5173
        %v5955 = vmul.f32 %v4575, %v5177
        %v5956 = vmul.f32 %v4576, %v5181
        %v5957 = vmul.f32 %v4577, %v5185
        %v5958 = vmul.f32 %v4578, %v5189
        %v5959 = vmul.f32 %v4579, %v5196
        %v5960 = vmul.f32 %v4580, %v5200
        %v5961 = vmul.f32 %v4581, %v5204
        %v5962 = vmul.f32 %v4582, %v5208
        %v5963 = vmul.f32 %v4583, %v5212
        %v5964 = vmul.f32 %v4584, %v5216
        %v5965 = vmul.f32 %v4585, %v5220
        %v5966 = vmul.f32 %v4586, %v5224
        %v5967 = vmul.f32 %v4587, %v5231
        %v5968 = vmul.f32 %v4588, %v5235
        %v5969 = vmul.f32 %v4589, %v5239
        %v5970 = vmul.f32 %v4590, %v5243
        %v5971 = vmul.f32 %v4591, %v5247
        %v5972 = vmul.f32 %v4592, %v5251
        %v5973 = vmul.f32 %v4593, %v5255
        %v5974 = vmul.f32 %v4594, %v5259
        %v5975 = vmul.f32 %v4595, %v5266
        %v5976 = vmul.f32 %v4596, %v5270
        %v5977 = vmul.f32 %v4597, %v5274
        %v5978 = vmul.f32 %v4598, %v5278
        %v5979 = vmul.f32 %v4599, %v5282
        %v5980 = vmul.f32 %v4600, %v5286
        %v5981 = vmul.f32 %v4601, %v5290
        %v5982 = vmul.f32 %v4602, %v5294
        %v5983 = vmul.f32 %v4603, %v5301
        %v5984 = vmul.f32 %v4604, %v5305
        %v5985 = vmul.f32 %v4605, %v5309
        %v5986 = vmul.f32 %v4606, %v5313
        %v5987 = vmul.f32 %v4607, %v5317
        %v5988 = vmul.f32 %v4608, %v5321
        %v5989 = vmul.f32 %v4609, %v5325
        %v5990 = vmul.f32 %v4610, %v5329
        %v5991 = vmul.f32 %v4611, %v5336
        %v5992 = vmul.f32 %v4612, %v5340
        %v5993 = vmul.f32 %v4613, %v5344
        %v5994 = vmul.f32 %v4614, %v5348
        %v5995 = vmul.f32 %v4615, %v5352
        %v5996 = vmul.f32 %v4616, %v5356
        %v5997 = vmul.f32 %v4617, %v5360
        %v5998 = vmul.f32 %v4618, %v5364
        %v5999 = vmul.f32 %v4619, %v5371
        %v6000 = vmul.f32 %v4620, %v5375
        %v6001 = vmul.f32 %v4621, %v5379
        %v6002 = vmul.f32 %v4622, %v5383
        %v6003 = vmul.f32 %v4623, %v5387
        %v6004 = vmul.f32 %v4624, %v5391
        %v6005 = vmul.f32 %v4625, %v5395
        %v6006 = vmul.f32 %v4626, %v5399
        %v6007 = vmul.f32 %v4627, %v5406
        %v6008 = vmul.f32 %v4628, %v5410
        %v6009 = vmul.f32 %v4629, %v5414
        %v6010 = vmul.f32 %v4630, %v5418
        %v6011 = vmul.f32 %v4631, %v5422
        %v6012 = vmul.f32 %v4632, %v5426
        %v6013 = vmul.f32 %v4633, %v5430
        %v6014 = vmul.f32 %v4634, %v5434
        %v6015 = vmul.f32 %v4635, %v5441
        %v6016 = vmul.f32 %v4636, %v5445
        %v6017 = vmul.f32 %v4637, %v5449
        %v6018 = vmul.f32 %v4638, %v5453
        %v6019 = vmul.f32 %v4639, %v5457
        %v6020 = vmul.f32 %v4640, %v5461
        %v6021 = vmul.f32 %v4641, %v5465
        %v6022 = vmul.f32 %v4642, %v5469
        %v6023 = vmul.f32 %v4643, %v5476
        %v6024 = vmul.f32 %v4644, %v5480
        %v6025 = vmul.f32 %v4645, %v5484
        %v6026 = vmul.f32 %v4646, %v5488
        %v6027 = vmul.f32 %v4647, %v5492
        %v6028 = vmul.f32 %v4648, %v5496
        %v6029 = vmul.f32 %v4649, %v5500
        %v6030 = vmul.f32 %v4650, %v5504
        %v6031 = vmul.f32 %v4651, %v5511
        %v6032 = vmul.f32 %v4652, %v5515
        %v6033 = vmul.f32 %v4653, %v5519
        %v6034 = vmul.f32 %v4654, %v5523
        %v6035 = vmul.f32 %v4655, %v5527
        %v6036 = vmul.f32 %v4656, %v5531
        %v6037 = vmul.f32 %v4657, %v5535
        %v6038 = vmul.f32 %v4658, %v5539
        %v6039 = vmul.f32 %v4659, %v5546
        %v6040 = vmul.f32 %v4660, %v5550
        %v6041 = vmul.f32 %v4661, %v5554
        %v6042 = vmul.f32 %v4662, %v5558
        %v6043 = vmul.f32 %v4663, %v5562
        %v6044 = vmul.f32 %v4664, %v5566
        %v6045 = vmul.f32 %v4665, %v5570
        %v6046 = vmul.f32 %v4666, %v5574
        %v6047 = vmul.f32 %v4667, %v5581
        %v6048 = vmul.f32 %v4668, %v5585
        %v6049 = vmul.f32 %v4669, %v5589
        %v6050 = vmul.f32 %v4670, %v5593
        %v6051 = vmul.f32 %v4671, %v5597
        %v6052 = vmul.f32 %v4672, %v5601
        %v6053 = vmul.f32 %v4673, %v5605
        %v6054 = vmul.f32 %v4674, %v5609
        %v6055 = vmul.f32 %v4675, %v5616
        %v6056 = vmul.f32 %v4676, %v5620
        %v6057 = vmul.f32 %v4677, %v5624
        %v6058 = vmul.f32 %v4678, %v5628
        %v6059 = vmul.f32 %v4679, %v5632
        %v6060 = vmul.f32 %v4680, %v5636
        %v6061 = vmul.f32 %v4681, %v5640
        %v6062 = vmul.f32 %v4682, %v5644
        %v6063 = vmul.f32 %v4683, %v5651
        %v6064 = vmul.f32 %v4684, %v5655
        %v6065 = vmul.f32 %v4685, %v5659
        %v6066 = vmul.f32 %v4686, %v5663
        %v6067 = vmul.f32 %v4687, %v5667
        %v6068 = vmul.f32 %v4688, %v5671
        %v6069 = vmul.f32 %v4689, %v5675
        %v6070 = vmul.f32 %v4690, %v5679
        %v6071 = vmul.f32 %v4691, %v5686
        %v6072 = vmul.f32 %v4692, %v5690
        %v6073 = vmul.f32 %v4693, %v5694
        %v6074 = vmul.f32 %v4694, %v5698
        %v6075 = vmul.f32 %v4695, %v5702
        %v6076 = vmul.f32 %v4696, %v5706
        %v6077 = vmul.f32 %v4697, %v5710
        %v6078 = vmul.f32 %v4698, %v5714
        %v6079 = vmul.f32 %v4699, %v5721
        %v6080 = vmul.f32 %v4700, %v5725
        %v6081 = vmul.f32 %v4701, %v5729
        %v6082 = vmul.f32 %v4702, %v5733
        %v6083 = vmul.f32 %v4703, %v5737
        %v6084 = vmul.f32 %v4704, %v5741
        %v6085 = vmul.f32 %v4705, %v5745
        %v6086 = vmul.f32 %v4706, %v5749
        %v6087 = vmul.f32 %v4707, %v5756
        %v6088 = vmul.f32 %v4708, %v5760
        %v6089 = vmul.f32 %v4709, %v5764
        %v6090 = vmul.f32 %v4710, %v5768
        %v6091 = vmul.f32 %v4711, %v5772
        %v6092 = vmul.f32 %v4712, %v5776
        %v6093 = vmul.f32 %v4713, %v5780
        %v6094 = vmul.f32 %v4714, %v5784
        %v6095 = vmul.f32 %v4715, %v5791
        %v6096 = vmul.f32 %v4716, %v5795
        %v6097 = vmul.f32 %v4717, %v5799
        %v6098 = vmul.f32 %v4718, %v5803
        %v6099 = vmul.f32 %v4719, %v5807
        %v6100 = vmul.f32 %v4720, %v5811
        %v6101 = vmul.f32 %v4721, %v5815
        %v6102 = vmul.f32 %v4722, %v5819
        %v6103 = vmul.f32 %v4723, %v5826
        %v6104 = vmul.f32 %v4724, %v5830
        %v6105 = vmul.f32 %v4725, %v5834
        %v6106 = vmul.f32 %v4726, %v5838
        %v6107 = vmul.f32 %v4727, %v5842
        %v6108 = vmul.f32 %v4728, %v5846
        %v6109 = vmul.f32 %v4729, %v5850
        %v6110 = vmul.f32 %v4730, %v5854
        %v6111 = vmax.f32 %v5855, %v5856
        %v6112 = vmax.f32 %v6111, %v5857
        %v6113 = vmax.f32 %v6112, %v5858
        %v6114 = vmax.f32 %v6113, %v5859
        %v6115 = vmax.f32 %v6114, %v5860
        %v6116 = vmax.f32 %v6115, %v5861
        %v6117 = vmax.f32 %v6116, %v5862
        %v6118 = vrot.slane %v6117, 4
        %v6119 = vmax.f32 %v6117, %v6118
        %v6120 = vrot.slane %v6119, 2
        %v6121 = vmax.f32 %v6119, %v6120
        %v6122 = vrot.slane %v6121, 1
        %v6123 = vmax.f32 %v6121, %v6122
        %v6124 = vmax.f32 %v5863, %v5864
        %v6125 = vmax.f32 %v6124, %v5865
        %v6126 = vmax.f32 %v6125, %v5866
        %v6127 = vmax.f32 %v6126, %v5867
        %v6128 = vmax.f32 %v6127, %v5868
        %v6129 = vmax.f32 %v6128, %v5869
        %v6130 = vmax.f32 %v6129, %v5870
        %v6131 = vrot.slane %v6130, 4
        %v6132 = vmax.f32 %v6130, %v6131
        %v6133 = vrot.slane %v6132, 2
        %v6134 = vmax.f32 %v6132, %v6133
        %v6135 = vrot.slane %v6134, 1
        %v6136 = vmax.f32 %v6134, %v6135
        %v6137 = vmax.f32 %v5871, %v5872
        %v6138 = vmax.f32 %v6137, %v5873
        %v6139 = vmax.f32 %v6138, %v5874
        %v6140 = vmax.f32 %v6139, %v5875
        %v6141 = vmax.f32 %v6140, %v5876
        %v6142 = vmax.f32 %v6141, %v5877
        %v6143 = vmax.f32 %v6142, %v5878
        %v6144 = vrot.slane %v6143, 4
        %v6145 = vmax.f32 %v6143, %v6144
        %v6146 = vrot.slane %v6145, 2
        %v6147 = vmax.f32 %v6145, %v6146
        %v6148 = vrot.slane %v6147, 1
        %v6149 = vmax.f32 %v6147, %v6148
        %v6150 = vmax.f32 %v5879, %v5880
        %v6151 = vmax.f32 %v6150, %v5881
        %v6152 = vmax.f32 %v6151, %v5882
        %v6153 = vmax.f32 %v6152, %v5883
        %v6154 = vmax.f32 %v6153, %v5884
        %v6155 = vmax.f32 %v6154, %v5885
        %v6156 = vmax.f32 %v6155, %v5886
        %v6157 = vrot.slane %v6156, 4
        %v6158 = vmax.f32 %v6156, %v6157
        %v6159 = vrot.slane %v6158, 2
        %v6160 = vmax.f32 %v6158, %v6159
        %v6161 = vrot.slane %v6160, 1
        %v6162 = vmax.f32 %v6160, %v6161
        %v6163 = vmax.f32 %v5887, %v5888
        %v6164 = vmax.f32 %v6163, %v5889
        %v6165 = vmax.f32 %v6164, %v5890
        %v6166 = vmax.f32 %v6165, %v5891
        %v6167 = vmax.f32 %v6166, %v5892
        %v6168 = vmax.f32 %v6167, %v5893
        %v6169 = vmax.f32 %v6168, %v5894
        %v6170 = vrot.slane %v6169, 4
        %v6171 = vmax.f32 %v6169, %v6170
        %v6172 = vrot.slane %v6171, 2
        %v6173 = vmax.f32 %v6171, %v6172
        %v6174 = vrot.slane %v6173, 1
        %v6175 = vmax.f32 %v6173, %v6174
        %v6176 = vmax.f32 %v5895, %v5896
        %v6177 = vmax.f32 %v6176, %v5897
        %v6178 = vmax.f32 %v6177, %v5898
        %v6179 = vmax.f32 %v6178, %v5899
        %v6180 = vmax.f32 %v6179, %v5900
        %v6181 = vmax.f32 %v6180, %v5901
        %v6182 = vmax.f32 %v6181, %v5902
        %v6183 = vrot.slane %v6182, 4
        %v6184 = vmax.f32 %v6182, %v6183
        %v6185 = vrot.slane %v6184, 2
        %v6186 = vmax.f32 %v6184, %v6185
        %v6187 = vrot.slane %v6186, 1
        %v6188 = vmax.f32 %v6186, %v6187
        %v6189 = vmax.f32 %v5903, %v5904
        %v6190 = vmax.f32 %v6189, %v5905
        %v6191 = vmax.f32 %v6190, %v5906
        %v6192 = vmax.f32 %v6191, %v5907
        %v6193 = vmax.f32 %v6192, %v5908
        %v6194 = vmax.f32 %v6193, %v5909
        %v6195 = vmax.f32 %v6194, %v5910
        %v6196 = vrot.slane %v6195, 4
        %v6197 = vmax.f32 %v6195, %v6196
        %v6198 = vrot.slane %v6197, 2
        %v6199 = vmax.f32 %v6197, %v6198
        %v6200 = vrot.slane %v6199, 1
        %v6201 = vmax.f32 %v6199, %v6200
        %v6202 = vmax.f32 %v5911, %v5912
        %v6203 = vmax.f32 %v6202, %v5913
        %v6204 = vmax.f32 %v6203, %v5914
        %v6205 = vmax.f32 %v6204, %v5915
        %v6206 = vmax.f32 %v6205, %v5916
        %v6207 = vmax.f32 %v6206, %v5917
        %v6208 = vmax.f32 %v6207, %v5918
        %v6209 = vrot.slane %v6208, 4
        %v6210 = vmax.f32 %v6208, %v6209
        %v6211 = vrot.slane %v6210, 2
        %v6212 = vmax.f32 %v6210, %v6211
        %v6213 = vrot.slane %v6212, 1
        %v6214 = vmax.f32 %v6212, %v6213
        %v6215 = vmax.f32 %v5919, %v5920
        %v6216 = vmax.f32 %v6215, %v5921
        %v6217 = vmax.f32 %v6216, %v5922
        %v6218 = vmax.f32 %v6217, %v5923
        %v6219 = vmax.f32 %v6218, %v5924
        %v6220 = vmax.f32 %v6219, %v5925
        %v6221 = vmax.f32 %v6220, %v5926
        %v6222 = vrot.slane %v6221, 4
        %v6223 = vmax.f32 %v6221, %v6222
        %v6224 = vrot.slane %v6223, 2
        %v6225 = vmax.f32 %v6223, %v6224
        %v6226 = vrot.slane %v6225, 1
        %v6227 = vmax.f32 %v6225, %v6226
        %v6228 = vmax.f32 %v5927, %v5928
        %v6229 = vmax.f32 %v6228, %v5929
        %v6230 = vmax.f32 %v6229, %v5930
        %v6231 = vmax.f32 %v6230, %v5931
        %v6232 = vmax.f32 %v6231, %v5932
        %v6233 = vmax.f32 %v6232, %v5933
        %v6234 = vmax.f32 %v6233, %v5934
        %v6235 = vrot.slane %v6234, 4
        %v6236 = vmax.f32 %v6234, %v6235
        %v6237 = vrot.slane %v6236, 2
        %v6238 = vmax.f32 %v6236, %v6237
        %v6239 = vrot.slane %v6238, 1
        %v6240 = vmax.f32 %v6238, %v6239
        %v6241 = vmax.f32 %v5935, %v5936
        %v6242 = vmax.f32 %v6241, %v5937
        %v6243 = vmax.f32 %v6242, %v5938
        %v6244 = vmax.f32 %v6243, %v5939
        %v6245 = vmax.f32 %v6244, %v5940
        %v6246 = vmax.f32 %v6245, %v5941
        %v6247 = vmax.f32 %v6246, %v5942
        %v6248 = vrot.slane %v6247, 4
        %v6249 = vmax.f32 %v6247, %v6248
        %v6250 = vrot.slane %v6249, 2
        %v6251 = vmax.f32 %v6249, %v6250
        %v6252 = vrot.slane %v6251, 1
        %v6253 = vmax.f32 %v6251, %v6252
        %v6254 = vmax.f32 %v5943, %v5944
        %v6255 = vmax.f32 %v6254, %v5945
        %v6256 = vmax.f32 %v6255, %v5946
        %v6257 = vmax.f32 %v6256, %v5947
        %v6258 = vmax.f32 %v6257, %v5948
        %v6259 = vmax.f32 %v6258, %v5949
        %v6260 = vmax.f32 %v6259, %v5950
        %v6261 = vrot.slane %v6260, 4
        %v6262 = vmax.f32 %v6260, %v6261
        %v6263 = vrot.slane %v6262, 2
        %v6264 = vmax.f32 %v6262, %v6263
        %v6265 = vrot.slane %v6264, 1
        %v6266 = vmax.f32 %v6264, %v6265
        %v6267 = vmax.f32 %v5951, %v5952
        %v6268 = vmax.f32 %v6267, %v5953
        %v6269 = vmax.f32 %v6268, %v5954
        %v6270 = vmax.f32 %v6269, %v5955
        %v6271 = vmax.f32 %v6270, %v5956
        %v6272 = vmax.f32 %v6271, %v5957
        %v6273 = vmax.f32 %v6272, %v5958
        %v6274 = vrot.slane %v6273, 4
        %v6275 = vmax.f32 %v6273, %v6274
        %v6276 = vrot.slane %v6275, 2
        %v6277 = vmax.f32 %v6275, %v6276
        %v6278 = vrot.slane %v6277, 1
        %v6279 = vmax.f32 %v6277, %v6278
        %v6280 = vmax.f32 %v5959, %v5960
        %v6281 = vmax.f32 %v6280, %v5961
        %v6282 = vmax.f32 %v6281, %v5962
        %v6283 = vmax.f32 %v6282, %v5963
        %v6284 = vmax.f32 %v6283, %v5964
        %v6285 = vmax.f32 %v6284, %v5965
        %v6286 = vmax.f32 %v6285, %v5966
        %v6287 = vrot.slane %v6286, 4
        %v6288 = vmax.f32 %v6286, %v6287
        %v6289 = vrot.slane %v6288, 2
        %v6290 = vmax.f32 %v6288, %v6289
        %v6291 = vrot.slane %v6290, 1
        %v6292 = vmax.f32 %v6290, %v6291
        %v6293 = vmax.f32 %v5967, %v5968
        %v6294 = vmax.f32 %v6293, %v5969
        %v6295 = vmax.f32 %v6294, %v5970
        %v6296 = vmax.f32 %v6295, %v5971
        %v6297 = vmax.f32 %v6296, %v5972
        %v6298 = vmax.f32 %v6297, %v5973
        %v6299 = vmax.f32 %v6298, %v5974
        %v6300 = vrot.slane %v6299, 4
        %v6301 = vmax.f32 %v6299, %v6300
        %v6302 = vrot.slane %v6301, 2
        %v6303 = vmax.f32 %v6301, %v6302
        %v6304 = vrot.slane %v6303, 1
        %v6305 = vmax.f32 %v6303, %v6304
        %v6306 = vmax.f32 %v5975, %v5976
        %v6307 = vmax.f32 %v6306, %v5977
        %v6308 = vmax.f32 %v6307, %v5978
        %v6309 = vmax.f32 %v6308, %v5979
        %v6310 = vmax.f32 %v6309, %v5980
        %v6311 = vmax.f32 %v6310, %v5981
        %v6312 = vmax.f32 %v6311, %v5982
        %v6313 = vrot.slane %v6312, 4
        %v6314 = vmax.f32 %v6312, %v6313
        %v6315 = vrot.slane %v6314, 2
        %v6316 = vmax.f32 %v6314, %v6315
        %v6317 = vrot.slane %v6316, 1
        %v6318 = vmax.f32 %v6316, %v6317
        %v6319 = vmax.f32 %v5983, %v5984
        %v6320 = vmax.f32 %v6319, %v5985
        %v6321 = vmax.f32 %v6320, %v5986
        %v6322 = vmax.f32 %v6321, %v5987
        %v6323 = vmax.f32 %v6322, %v5988
        %v6324 = vmax.f32 %v6323, %v5989
        %v6325 = vmax.f32 %v6324, %v5990
        %v6326 = vrot.slane %v6325, 4
        %v6327 = vmax.f32 %v6325, %v6326
        %v6328 = vrot.slane %v6327, 2
        %v6329 = vmax.f32 %v6327, %v6328
        %v6330 = vrot.slane %v6329, 1
        %v6331 = vmax.f32 %v6329, %v6330
        %v6332 = vmax.f32 %v5991, %v5992
        %v6333 = vmax.f32 %v6332, %v5993
        %v6334 = vmax.f32 %v6333, %v5994
        %v6335 = vmax.f32 %v6334, %v5995
        %v6336 = vmax.f32 %v6335, %v5996
        %v6337 = vmax.f32 %v6336, %v5997
        %v6338 = vmax.f32 %v6337, %v5998
        %v6339 = vrot.slane %v6338, 4
        %v6340 = vmax.f32 %v6338, %v6339
        %v6341 = vrot.slane %v6340, 2
        %v6342 = vmax.f32 %v6340, %v6341
        %v6343 = vrot.slane %v6342, 1
        %v6344 = vmax.f32 %v6342, %v6343
        %v6345 = vmax.f32 %v5999, %v6000
        %v6346 = vmax.f32 %v6345, %v6001
        %v6347 = vmax.f32 %v6346, %v6002
        %v6348 = vmax.f32 %v6347, %v6003
        %v6349 = vmax.f32 %v6348, %v6004
        %v6350 = vmax.f32 %v6349, %v6005
        %v6351 = vmax.f32 %v6350, %v6006
        %v6352 = vrot.slane %v6351, 4
        %v6353 = vmax.f32 %v6351, %v6352
        %v6354 = vrot.slane %v6353, 2
        %v6355 = vmax.f32 %v6353, %v6354
        %v6356 = vrot.slane %v6355, 1
        %v6357 = vmax.f32 %v6355, %v6356
        %v6358 = vmax.f32 %v6007, %v6008
        %v6359 = vmax.f32 %v6358, %v6009
        %v6360 = vmax.f32 %v6359, %v6010
        %v6361 = vmax.f32 %v6360, %v6011
        %v6362 = vmax.f32 %v6361, %v6012
        %v6363 = vmax.f32 %v6362, %v6013
        %v6364 = vmax.f32 %v6363, %v6014
        %v6365 = vrot.slane %v6364, 4
        %v6366 = vmax.f32 %v6364, %v6365
        %v6367 = vrot.slane %v6366, 2
        %v6368 = vmax.f32 %v6366, %v6367
        %v6369 = vrot.slane %v6368, 1
        %v6370 = vmax.f32 %v6368, %v6369
        %v6371 = vmax.f32 %v6015, %v6016
        %v6372 = vmax.f32 %v6371, %v6017
        %v6373 = vmax.f32 %v6372, %v6018
        %v6374 = vmax.f32 %v6373, %v6019
        %v6375 = vmax.f32 %v6374, %v6020
        %v6376 = vmax.f32 %v6375, %v6021
        %v6377 = vmax.f32 %v6376, %v6022
        %v6378 = vrot.slane %v6377, 4
        %v6379 = vmax.f32 %v6377, %v6378
        %v6380 = vrot.slane %v6379, 2
        %v6381 = vmax.f32 %v6379, %v6380
        %v6382 = vrot.slane %v6381, 1
        %v6383 = vmax.f32 %v6381, %v6382
        %v6384 = vmax.f32 %v6023, %v6024
        %v6385 = vmax.f32 %v6384, %v6025
        %v6386 = vmax.f32 %v6385, %v6026
        %v6387 = vmax.f32 %v6386, %v6027
        %v6388 = vmax.f32 %v6387, %v6028
        %v6389 = vmax.f32 %v6388, %v6029
        %v6390 = vmax.f32 %v6389, %v6030
        %v6391 = vrot.slane %v6390, 4
        %v6392 = vmax.f32 %v6390, %v6391
        %v6393 = vrot.slane %v6392, 2
        %v6394 = vmax.f32 %v6392, %v6393
        %v6395 = vrot.slane %v6394, 1
        %v6396 = vmax.f32 %v6394, %v6395
        %v6397 = vmax.f32 %v6031, %v6032
        %v6398 = vmax.f32 %v6397, %v6033
        %v6399 = vmax.f32 %v6398, %v6034
        %v6400 = vmax.f32 %v6399, %v6035
        %v6401 = vmax.f32 %v6400, %v6036
        %v6402 = vmax.f32 %v6401, %v6037
        %v6403 = vmax.f32 %v6402, %v6038
        %v6404 = vrot.slane %v6403, 4
        %v6405 = vmax.f32 %v6403, %v6404
        %v6406 = vrot.slane %v6405, 2
        %v6407 = vmax.f32 %v6405, %v6406
        %v6408 = vrot.slane %v6407, 1
        %v6409 = vmax.f32 %v6407, %v6408
        %v6410 = vmax.f32 %v6039, %v6040
        %v6411 = vmax.f32 %v6410, %v6041
        %v6412 = vmax.f32 %v6411, %v6042
        %v6413 = vmax.f32 %v6412, %v6043
        %v6414 = vmax.f32 %v6413, %v6044
        %v6415 = vmax.f32 %v6414, %v6045
        %v6416 = vmax.f32 %v6415, %v6046
        %v6417 = vrot.slane %v6416, 4
        %v6418 = vmax.f32 %v6416, %v6417
        %v6419 = vrot.slane %v6418, 2
        %v6420 = vmax.f32 %v6418, %v6419
        %v6421 = vrot.slane %v6420, 1
        %v6422 = vmax.f32 %v6420, %v6421
        %v6423 = vmax.f32 %v6047, %v6048
        %v6424 = vmax.f32 %v6423, %v6049
        %v6425 = vmax.f32 %v6424, %v6050
        %v6426 = vmax.f32 %v6425, %v6051
        %v6427 = vmax.f32 %v6426, %v6052
        %v6428 = vmax.f32 %v6427, %v6053
        %v6429 = vmax.f32 %v6428, %v6054
        %v6430 = vrot.slane %v6429, 4
        %v6431 = vmax.f32 %v6429, %v6430
        %v6432 = vrot.slane %v6431, 2
        %v6433 = vmax.f32 %v6431, %v6432
        %v6434 = vrot.slane %v6433, 1
        %v6435 = vmax.f32 %v6433, %v6434
        %v6436 = vmax.f32 %v6055, %v6056
        %v6437 = vmax.f32 %v6436, %v6057
        %v6438 = vmax.f32 %v6437, %v6058
        %v6439 = vmax.f32 %v6438, %v6059
        %v6440 = vmax.f32 %v6439, %v6060
        %v6441 = vmax.f32 %v6440, %v6061
        %v6442 = vmax.f32 %v6441, %v6062
        %v6443 = vrot.slane %v6442, 4
        %v6444 = vmax.f32 %v6442, %v6443
        %v6445 = vrot.slane %v6444, 2
        %v6446 = vmax.f32 %v6444, %v6445
        %v6447 = vrot.slane %v6446, 1
        %v6448 = vmax.f32 %v6446, %v6447
        %v6449 = vmax.f32 %v6063, %v6064
        %v6450 = vmax.f32 %v6449, %v6065
        %v6451 = vmax.f32 %v6450, %v6066
        %v6452 = vmax.f32 %v6451, %v6067
        %v6453 = vmax.f32 %v6452, %v6068
        %v6454 = vmax.f32 %v6453, %v6069
        %v6455 = vmax.f32 %v6454, %v6070
        %v6456 = vrot.slane %v6455, 4
        %v6457 = vmax.f32 %v6455, %v6456
        %v6458 = vrot.slane %v6457, 2
        %v6459 = vmax.f32 %v6457, %v6458
        %v6460 = vrot.slane %v6459, 1
        %v6461 = vmax.f32 %v6459, %v6460
        %v6462 = vmax.f32 %v6071, %v6072
        %v6463 = vmax.f32 %v6462, %v6073
        %v6464 = vmax.f32 %v6463, %v6074
        %v6465 = vmax.f32 %v6464, %v6075
        %v6466 = vmax.f32 %v6465, %v6076
        %v6467 = vmax.f32 %v6466, %v6077
        %v6468 = vmax.f32 %v6467, %v6078
        %v6469 = vrot.slane %v6468, 4
        %v6470 = vmax.f32 %v6468, %v6469
        %v6471 = vrot.slane %v6470, 2
        %v6472 = vmax.f32 %v6470, %v6471
        %v6473 = vrot.slane %v6472, 1
        %v6474 = vmax.f32 %v6472, %v6473
        %v6475 = vmax.f32 %v6079, %v6080
        %v6476 = vmax.f32 %v6475, %v6081
        %v6477 = vmax.f32 %v6476, %v6082
        %v6478 = vmax.f32 %v6477, %v6083
        %v6479 = vmax.f32 %v6478, %v6084
        %v6480 = vmax.f32 %v6479, %v6085
        %v6481 = vmax.f32 %v6480, %v6086
        %v6482 = vrot.slane %v6481, 4
        %v6483 = vmax.f32 %v6481, %v6482
        %v6484 = vrot.slane %v6483, 2
        %v6485 = vmax.f32 %v6483, %v6484
        %v6486 = vrot.slane %v6485, 1
        %v6487 = vmax.f32 %v6485, %v6486
        %v6488 = vmax.f32 %v6087, %v6088
        %v6489 = vmax.f32 %v6488, %v6089
        %v6490 = vmax.f32 %v6489, %v6090
        %v6491 = vmax.f32 %v6490, %v6091
        %v6492 = vmax.f32 %v6491, %v6092
        %v6493 = vmax.f32 %v6492, %v6093
        %v6494 = vmax.f32 %v6493, %v6094
        %v6495 = vrot.slane %v6494, 4
        %v6496 = vmax.f32 %v6494, %v6495
        %v6497 = vrot.slane %v6496, 2
        %v6498 = vmax.f32 %v6496, %v6497
        %v6499 = vrot.slane %v6498, 1
        %v6500 = vmax.f32 %v6498, %v6499
        %v6501 = vmax.f32 %v6095, %v6096
        %v6502 = vmax.f32 %v6501, %v6097
        %v6503 = vmax.f32 %v6502, %v6098
        %v6504 = vmax.f32 %v6503, %v6099
        %v6505 = vmax.f32 %v6504, %v6100
        %v6506 = vmax.f32 %v6505, %v6101
        %v6507 = vmax.f32 %v6506, %v6102
        %v6508 = vrot.slane %v6507, 4
        %v6509 = vmax.f32 %v6507, %v6508
        %v6510 = vrot.slane %v6509, 2
        %v6511 = vmax.f32 %v6509, %v6510
        %v6512 = vrot.slane %v6511, 1
        %v6513 = vmax.f32 %v6511, %v6512
        %v6514 = vmax.f32 %v6103, %v6104
        %v6515 = vmax.f32 %v6514, %v6105
        %v6516 = vmax.f32 %v6515, %v6106
        %v6517 = vmax.f32 %v6516, %v6107
        %v6518 = vmax.f32 %v6517, %v6108
        %v6519 = vmax.f32 %v6518, %v6109
        %v6520 = vmax.f32 %v6519, %v6110
        %v6521 = vrot.slane %v6520, 4
        %v6522 = vmax.f32 %v6520, %v6521
        %v6523 = vrot.slane %v6522, 2
        %v6524 = vmax.f32 %v6522, %v6523
        %v6525 = vrot.slane %v6524, 1
        %v6526 = vmax.f32 %v6524, %v6525
        %vm6559 = vcmask 1041409
        %v6560 = vsel %vm6559, %v6136, %v6123
        %vm6561 = vcmask 1042434
        %v6562 = vsel %vm6561, %v6149, %v6560
        %vm6563 = vcmask 1043459
        %v6564 = vsel %vm6563, %v6162, %v6562
        %vm6565 = vcmask 1044484
        %v6566 = vsel %vm6565, %v6175, %v6564
        %vm6567 = vcmask 1045509
        %v6568 = vsel %vm6567, %v6188, %v6566
        %vm6569 = vcmask 1046534
        %v6570 = vsel %vm6569, %v6201, %v6568
        %vm6571 = vcmask 1047559
        %v6572 = vsel %vm6571, %v6214, %v6570
        %v6573 = vsel %vm6559, %v6240, %v6227
        %v6574 = vsel %vm6561, %v6253, %v6573
        %v6575 = vsel %vm6563, %v6266, %v6574
        %v6576 = vsel %vm6565, %v6279, %v6575
        %v6577 = vsel %vm6567, %v6292, %v6576
        %v6578 = vsel %vm6569, %v6305, %v6577
        %v6579 = vsel %vm6571, %v6318, %v6578
        %v6580 = vsel %vm6559, %v6344, %v6331
        %v6581 = vsel %vm6561, %v6357, %v6580
        %v6582 = vsel %vm6563, %v6370, %v6581
        %v6583 = vsel %vm6565, %v6383, %v6582
        %v6584 = vsel %vm6567, %v6396, %v6583
        %v6585 = vsel %vm6569, %v6409, %v6584
        %v6586 = vsel %vm6571, %v6422, %v6585
        %v6587 = vsel %vm6559, %v6448, %v6435
        %v6588 = vsel %vm6561, %v6461, %v6587
        %v6589 = vsel %vm6563, %v6474, %v6588
        %v6590 = vsel %vm6565, %v6487, %v6589
        %v6591 = vsel %vm6567, %v6500, %v6590
        %v6592 = vsel %vm6569, %v6513, %v6591
        %v6593 = vsel %vm6571, %v6526, %v6592
        %6598 = vst [vmem:[%s261] sm:$0xff] %v6572
        %6599 = vst [vmem:[%s261 + $0x8] sm:$0xff] %v6579
        %6600 = vst [vmem:[%s261 + $0x10] sm:$0xff] %v6586
        %6601 = vst [vmem:[%s261 + $0x18] sm:$0xff] %v6593
        %s6602 = sand.u32 %s164, 1
        %s6603 = scalar_lea.sflag [#allocation3], %s6602
        %s6604 = sand.u32 %s164, 1
        %s6605 = smul.addr %s6604, 32
        %s6606 = scalar_lea.vmem [#allocation2], %s6605
        // Predicated region
        $region45: #{tpu_custom_call.1} parent=43 // pred_check
          %p6607 = pneg %p174
        $region46: #{tpu_custom_call.1} parent=43 // pred_check_branch
          %6609 = sbr.rel (%p6607) target = $region48
        $region47: #{tpu_custom_call.1} parent=43 // pred_region
          %s6610 = smul.u32 4, %s20
          %s6612 = ssub.s32 512, 512
          %6613 = vsyncadd %s6603, %s6612
          %s6614 = smul.addr %s6610, 128
          %s6615 = scalar_lea.hbm %s6, %s6614
          %s6616 = sshll.u32 %s6606, 4
          %s6617 = int_to_ptr.vmem [resolvable:$true] %s6616
          %6622 = dma.vmem_to_hbm [thread:$0]  %s6617, 512, %s6615, %s6603, 128, 128, 8
        $region48: #{tpu_custom_call.1} parent=43 // pred_fallthru
          _
      $region44: #{tpu_custom_call.1} parent=5 // pred_fallthru
        _
      %p6623 = scmp.le.s32.totalorder 2, %s15
      // Predicated region
      $region49: #{tpu_custom_call.1} parent=5 // pred_check
        %p6624 = pneg %p6623
      $region50: #{tpu_custom_call.1} parent=5 // pred_check_branch
        %6626 = sbr.rel (%p6624) target = $region52
      $region51: #{tpu_custom_call.1} parent=5 // pred_region
        %s6627 = ssub.s32 %s15, 2
        // Predicated region
        $region53: #{tpu_custom_call.1} parent=51 // pred_check
          %p6628 = pneg %p180
        $region54: #{tpu_custom_call.1} parent=51 // pred_check_branch
          %6630 = sbr.rel (%p6628) target = $region56
        $region55: #{tpu_custom_call.1} parent=51 // pred_region
          %s6631 = sand.u32 %s165, 1
          %s6632 = scalar_lea.sflag [#allocation3], %s6631
          %s6633 = sand.u32 %s165, 1
          %s6634 = smul.addr %s6633, 32
          %s6635 = scalar_lea.vmem [#allocation2], %s6634
          %6636 = dma.done %s6632, 512
        $region56: #{tpu_custom_call.1} parent=51 // pred_fallthru
          _
      $region52: #{tpu_custom_call.1} parent=5 // pred_fallthru
        _
    $region6: #{tpu_custom_call.1} parent=1 // loop_footer
      %s19 = sadd.s32 1, %s15
    $region7: #{tpu_custom_call.1} parent=1 // loop_footer_branch
      %14 = sbr.rel target = $region3
    $region8: #{tpu_custom_call.1} parent=1 // loop_exit
      _
    %6637 = vsyncpa [#allocation3], 1
    %s6638 = scalar_lea.sflag [#allocation3], 1
    %6639 = vsyncpa %s6638, 1

</llo_original>
